<compile_context>
chip_gen: v7x
topology: tpu7x:2x2x1
jax: 0.10.0
libtpu: 0.0.40
codegen_flags: <defaults>
</compile_context>

<pallas_src>
import math
import functools

import numpy as np
import jax
import jax.numpy as jnp
from jax.experimental import pallas as pl
from jax.experimental.pallas import tpu as pltpu


_HIGHEST = jax.lax.Precision.HIGHEST


# ----------------------------------------------------------------------------
# glue: small constant-matrix builders (exact torch adaptive_avg_pool semantics)
# ----------------------------------------------------------------------------
def _adaptive_pool_matrix(in_size, out_size):
    """P[i, r] so that P @ v == torch adaptive_avg_pool1d(v, out_size)."""
    P = np.zeros((out_size, in_size), dtype=np.float64)
    for i in range(out_size):
        s = (i * in_size) // out_size
        e = -((-(i + 1) * in_size) // out_size)  # ceil
        P[i, s:e] = 1.0 / (e - s)
    return P


def _channel_mix_matrices(w_local, w_global, C, pad):
    """Decompose the 1-D conv over the channel-interleaved sequence
    seq[s*C + c] = pooled[c, s] into
        Y = M0 @ P + Mp @ (P shifted to next spatial pos) + Mm @ (prev pos),
    and the global conv over channels into Wg (all (C, C), banded/corner)."""
    k = len(w_local)
    M0 = np.zeros((C, C))
    Mp = np.zeros((C, C))   # channel offset wraps into the NEXT spatial position
    Mm = np.zeros((C, C))   # channel offset wraps into the PREVIOUS position
    Wg = np.zeros((C, C))
    for t in range(k):
        o = t - pad
        wl = float(w_local[t])
        wg = float(w_global[t])
        for c in range(C):
            d = c + o
            if 0 <= d < C:
                M0[c, d] += wl
                Wg[c, d] += wg
            elif d >= C:
                Mp[c, d - C] += wl
            else:
                Mm[c, d + C] += wl
    return M0, Mp, Mm, Wg


def _shift_matrices(S):
    """ShN: out col s <- in col s+1 (zero at s=S-1); ShP: out col s <- col s-1."""
    ShN = np.zeros((S, S))
    ShP = np.zeros((S, S))
    for s in range(S - 1):
        ShN[s + 1, s] = 1.0
        ShP[s, s + 1] = 1.0
    return ShN, ShP


def _pick_batch_block(B, C, HW, target_bytes=2 << 20, max_bt=8):
    """Largest divisor of B (<= max_bt) whose x-block stays under target_bytes."""
    if C % 8 != 0:
        return 1  # keep in-kernel leading-dim reshapes trivially layout-free
    per_batch = C * HW * 4
    bt = 1
    for cand in range(1, min(B, max_bt) + 1):
        if B % cand == 0 and cand * per_batch <= target_bytes:
            bt = cand
    return bt


# ----------------------------------------------------------------------------
# Pallas kernel (one block = bt batch elements, lane-dense (C, H*W) slabs)
# ----------------------------------------------------------------------------
def _sigmoid(v):
    return 1.0 / (1.0 + jnp.exp(-v))


def _dot(a, b):
    return jnp.dot(a, b, precision=_HIGHEST, preferred_element_type=jnp.float32)


def _mlca_kernel(x_ref, poolT_ref, mix_ref, shn_ref, shp_ref, upT_ref, o_ref,
                 *, bt, C, local_weight):
    xv = x_ref[...]                                   # (bt, C, HW) f32
    HW = xv.shape[-1]
    x2 = xv.reshape(bt * C, HW)                       # lane-dense slab

    # adaptive avg-pool (H,W)->(ls,ls) for every batch & channel: ONE matmul
    pooled = _dot(x2, poolT_ref[...])                 # (bt*C, S), S = ls*ls

    att5_parts = []
    for b in range(bt):                               # static unroll, bt is small
        Pb = pooled[b * C:(b + 1) * C]                # (C, S)
        # one (4C, C) @ (C, S) matmul covers M0/Mp/Mm (local) and Wg (global)
        Z = _dot(mix_ref[...], Pb)                    # (4C, S)
        y_loc = (Z[0:C]
                 + _dot(Z[C:2 * C], shn_ref[...])     # wrap to next spatial pos
                 + _dot(Z[2 * C:3 * C], shp_ref[...]))  # wrap to prev spatial pos
        y_glb = jnp.mean(Z[3 * C:4 * C], axis=-1, keepdims=True)   # (C, 1)
        att5_parts.append(local_weight * _sigmoid(y_loc)
                          + (1.0 - local_weight) * _sigmoid(y_glb))  # bcast (C,S)
    att5 = att5_parts[0] if bt == 1 else jnp.concatenate(att5_parts, axis=0)

    # adaptive upsample (ls,ls)->(H,W) for the whole block, then apply attention
    att_all = _dot(att5, upT_ref[...])                # (bt*C, HW), lane-dense
    o_ref[...] = (x2 * att_all).reshape(bt, C, HW)


# ----------------------------------------------------------------------------
# wrapper
# ----------------------------------------------------------------------------
def mlca_pallas(x, w_local, w_global, local_size=5, local_weight=0.5,
                batch_block=None):
    B, C, H, W = x.shape
    ls = int(local_size)
    S = ls * ls
    HW = H * W
    k = int(w_local.shape[0])
    pad = (k - 1) // 2
    assert pad < C, "conv kernel half-width must be smaller than channel count"

    wl = np.asarray(w_local, dtype=np.float64)
    wg = np.asarray(w_global, dtype=np.float64)

    Am = _adaptive_pool_matrix(H, ls)                 # (ls, H)
    Bn = _adaptive_pool_matrix(W, ls)                 # (ls, W)
    Um = _adaptive_pool_matrix(ls, H)                 # (H, ls)
    Un = _adaptive_pool_matrix(ls, W)                 # (W, ls)

    PoolT = np.kron(Am, Bn).T.astype(np.float32)      # (HW, S)   ~HW*S*4 bytes
    UpT = np.kron(Um, Un).T.astype(np.float32)        # (S, HW)
    M0, Mp, Mm, Wg = _channel_mix_matrices(wl, wg, C, pad)
    Mix = np.concatenate([M0, Mp, Mm, Wg], axis=0).astype(np.float32)  # (4C, C)
    ShN, ShP = _shift_matrices(S)
    ShN = ShN.astype(np.float32)
    ShP = ShP.astype(np.float32)

    bt = _pick_batch_block(B, C, HW) if batch_block is None else int(batch_block)
    assert B % bt == 0, "batch_block must divide the batch size"

    x3 = x.reshape(B, C, HW).astype(jnp.float32)

    kernel = functools.partial(_mlca_kernel, bt=bt, C=C,
                               local_weight=float(local_weight))

    # Constants are a few KB (no block-diagonals), so default double-buffering
    # and default scoped-VMEM limits are comfortable on v5e/v6e/v7x.
    out3 = pl.pallas_call(
        kernel,
        out_shape=jax.ShapeDtypeStruct((B, C, HW), jnp.float32),
        grid=(B // bt,),
        in_specs=[
            pl.BlockSpec((bt, C, HW), lambda i: (i, 0, 0)),
            pl.BlockSpec((HW, S), lambda i: (0, 0)),
            pl.BlockSpec((4 * C, C), lambda i: (0, 0)),
            pl.BlockSpec((S, S), lambda i: (0, 0)),
            pl.BlockSpec((S, S), lambda i: (0, 0)),
            pl.BlockSpec((S, HW), lambda i: (0, 0)),
        ],
        out_specs=pl.BlockSpec((bt, C, HW), lambda i: (i, 0, 0)),
        compiler_params=pltpu.CompilerParams(
            dimension_semantics=("parallel",)),
    )(x3, jnp.asarray(PoolT), jnp.asarray(Mix), jnp.asarray(ShN),
      jnp.asarray(ShP), jnp.asarray(UpT))
    return out3.reshape(B, C, H, W)


# ----------------------------------------------------------------------------
# pure numpy reference (mirrors the PyTorch forward exactly, float64)
# ----------------------------------------------------------------------------
def _adaptive_avg_pool2d_np(x, out_hw):
    oh, ow = out_hw
    B, C, H, W = x.shape
    out = np.zeros((B, C, oh, ow), dtype=x.dtype)
    for i in range(oh):
        h0 = (i * H) // oh
        h1 = -((-(i + 1) * H) // oh)
        for j in range(ow):
            w0 = (j * W) // ow
            w1 = -((-(j + 1) * W) // ow)
            out[:, :, i, j] = x[:, :, h0:h1, w0:w1].mean(axis=(2, 3))
    return out


def _conv1d_np(x, w, pad):
    B, _, L = x.shape
    k = w.shape[0]
    xp = np.pad(x, ((0, 0), (0, 0), (pad, pad)))
    out = np.zeros((B, 1, L), dtype=x.dtype)
    for t in range(k):
        out[:, 0, :] += w[t] * xp[:, 0, t:t + L]
    return out


def _sigmoid_np(v):
    return 1.0 / (1.0 + np.exp(-v))


def mlca_reference(x, w_local, w_global, local_size, local_weight):
    x = np.asarray(x, dtype=np.float64)
    wl = np.asarray(w_local, dtype=np.float64)
    wg = np.asarray(w_global, dtype=np.float64)
    ls = local_size
    k = wl.shape[0]
    pad = (k - 1) // 2
    B, C, H, W = x.shape
    local_arv = _adaptive_avg_pool2d_np(x, (ls, ls))
    global_arv = _adaptive_avg_pool2d_np(local_arv, (1, 1))
    temp_local = local_arv.reshape(B, C, ls * ls).transpose(0, 2, 1).reshape(B, 1, -1)
    temp_global = global_arv.reshape(B, C, 1).transpose(0, 2, 1)
    y_local = _conv1d_np(temp_local, wl, pad)
    y_global = _conv1d_np(temp_global, wg, pad)
    y_local_t = y_local.reshape(B, ls * ls, C).transpose(0, 2, 1).reshape(B, C, ls, ls)
    y_global_t = y_global.reshape(B, C, 1, 1)
    att_local = _sigmoid_np(y_local_t)
    att_global = _adaptive_avg_pool2d_np(_sigmoid_np(y_global_t), (ls, ls))
    att_all = _adaptive_avg_pool2d_np(
        att_global * (1 - local_weight) + att_local * local_weight, (H, W))
    return x * att_all


# ----------------------------------------------------------------------------
if __name__ == "__main__":
    def run_case(B, C, H, W, local_size, local_weight, batch_block=None):
        # kernel size exactly as in MLCA.__init__ (gamma=2, b=1)
        t = int(abs(math.log(C, 2) + 1) / 2)
        k = t if t % 2 else t + 1

        key = jax.random.PRNGKey(0)
        kx, k1, k2 = jax.random.split(key, 3)
        x = jax.random.normal(kx, (B, C, H, W), dtype=jnp.float32)
        bound = 1.0 / math.sqrt(k)
        w_local = jax.random.uniform(k1, (k,), minval=-bound, maxval=bound,
                                     dtype=jnp.float32)
        w_global = jax.random.uniform(k2, (k,), minval=-bound, maxval=bound,
                                      dtype=jnp.float32)

        out = mlca_pallas(x, w_local, w_global, local_size=local_size,
                          local_weight=local_weight, batch_block=batch_block)
        out = jax.block_until_ready(out)

        ref = mlca_reference(np.asarray(x), np.asarray(w_local),
                             np.asarray(w_global), local_size, local_weight)
        np.testing.assert_allclose(np.asarray(out), ref, rtol=1e-4, atol=1e-4)

    # small config (in_size=8 -> k=3, wrap width 1); whole batch in one block
    run_case(B=2, C=8, H=16, W=16, local_size=5, local_weight=0.5)
    # larger config (in_size=128 -> k=5, wrap width 2), C not divisible by ls,
    # multi-step grid (2 batches per step) exercising the pipelined path
    run_case(B=4, C=128, H=12, W=20, local_size=5, local_weight=0.25,
             batch_block=2)

    print("KERNEL_OK")
</pallas_src>

<mosaic_0001>
module attributes {stable_mosaic.version = 11 : i64} {
  func.func @_mlca_kernel(%arg0: i32, %arg1: memref<2x8x256xf32, #tpu.memory_space<vmem>>, %arg2: memref<256x25xf32, #tpu.memory_space<vmem>>, %arg3: memref<32x8xf32, #tpu.memory_space<vmem>>, %arg4: memref<25x25xf32, #tpu.memory_space<vmem>>, %arg5: memref<25x25xf32, #tpu.memory_space<vmem>>, %arg6: memref<25x256xf32, #tpu.memory_space<vmem>>, %arg7: memref<2x8x256xf32, #tpu.memory_space<vmem>>) attributes {dimension_semantics = [#tpu.dimension_semantics<parallel>], iteration_bounds = array<i64: 1>, scalar_prefetch = 0 : i64, scratch_operands = 0 : i64, tpu.core_type = #tpu.core_type<tc>, window_params = [{transform_indices = @transform_0, window_bounds = array<i64: 2, 8, 256>}, {pipeline_mode = #tpu.pipeline_mode<synchronous>, transform_indices = @transform_1, window_bounds = array<i64: 256, 25>}, {pipeline_mode = #tpu.pipeline_mode<synchronous>, transform_indices = @transform_2, window_bounds = array<i64: 32, 8>}, {pipeline_mode = #tpu.pipeline_mode<synchronous>, transform_indices = @transform_3, window_bounds = array<i64: 25, 25>}, {pipeline_mode = #tpu.pipeline_mode<synchronous>, transform_indices = @transform_4, window_bounds = array<i64: 25, 25>}, {pipeline_mode = #tpu.pipeline_mode<synchronous>, transform_indices = @transform_5, window_bounds = array<i64: 25, 256>}, {transform_indices = @transform_6, window_bounds = array<i64: 2, 8, 256>}]} {
    %c0 = arith.constant 0 : index
    %c0_0 = arith.constant 0 : index
    %c0_1 = arith.constant 0 : index
    %0 = vector.load %arg1[%c0, %c0_0, %c0_1] : memref<2x8x256xf32, #tpu.memory_space<vmem>>, vector<2x8x256xf32>
    %1 = vector.shape_cast %0 : vector<2x8x256xf32> to vector<16x256xf32>
    %c0_2 = arith.constant 0 : index
    %c0_3 = arith.constant 0 : index
    %2 = vector.load %arg2[%c0_2, %c0_3] : memref<256x25xf32, #tpu.memory_space<vmem>>, vector<256x25xf32>
    %cst = arith.constant dense<0.000000e+00> : vector<16x25xf32>
    %3 = tpu.matmul %1, %2, %cst {dimension_numbers = #tpu.dot_dimension_numbers<[1], [0], [0], [1], [0, 0, 1, 1], [], []>, precision = #tpu.contract_precision<fp32>} : vector<16x256xf32>, vector<256x25xf32>, vector<16x25xf32> -> vector<16x25xf32>
    %4 = vector.extract_strided_slice %3 {offsets = [0, 0], sizes = [8, 25], strides = [1, 1]} : vector<16x25xf32> to vector<8x25xf32>
    %c0_4 = arith.constant 0 : index
    %c0_5 = arith.constant 0 : index
    %5 = vector.load %arg3[%c0_4, %c0_5] : memref<32x8xf32, #tpu.memory_space<vmem>>, vector<32x8xf32>
    %cst_6 = arith.constant dense<0.000000e+00> : vector<32x25xf32>
    %6 = tpu.matmul %5, %4, %cst_6 {dimension_numbers = #tpu.dot_dimension_numbers<[1], [0], [0], [1], [0, 0, 1, 1], [], []>, precision = #tpu.contract_precision<fp32>} : vector<32x8xf32>, vector<8x25xf32>, vector<32x25xf32> -> vector<32x25xf32>
    %7 = vector.extract_strided_slice %6 {offsets = [0, 0], sizes = [8, 25], strides = [1, 1]} : vector<32x25xf32> to vector<8x25xf32>
    %8 = vector.extract_strided_slice %6 {offsets = [8, 0], sizes = [8, 25], strides = [1, 1]} : vector<32x25xf32> to vector<8x25xf32>
    %c0_7 = arith.constant 0 : index
    %c0_8 = arith.constant 0 : index
    %9 = vector.load %arg4[%c0_7, %c0_8] : memref<25x25xf32, #tpu.memory_space<vmem>>, vector<25x25xf32>
    %cst_9 = arith.constant dense<0.000000e+00> : vector<8x25xf32>
    %10 = tpu.matmul %8, %9, %cst_9 {dimension_numbers = #tpu.dot_dimension_numbers<[1], [0], [0], [1], [0, 0, 1, 1], [], []>, precision = #tpu.contract_precision<fp32>} : vector<8x25xf32>, vector<25x25xf32>, vector<8x25xf32> -> vector<8x25xf32>
    %11 = arith.addf %7, %10 : vector<8x25xf32>
    %12 = vector.extract_strided_slice %6 {offsets = [16, 0], sizes = [8, 25], strides = [1, 1]} : vector<32x25xf32> to vector<8x25xf32>
    %c0_10 = arith.constant 0 : index
    %c0_11 = arith.constant 0 : index
    %13 = vector.load %arg5[%c0_10, %c0_11] : memref<25x25xf32, #tpu.memory_space<vmem>>, vector<25x25xf32>
    %cst_12 = arith.constant dense<0.000000e+00> : vector<8x25xf32>
    %14 = tpu.matmul %12, %13, %cst_12 {dimension_numbers = #tpu.dot_dimension_numbers<[1], [0], [0], [1], [0, 0, 1, 1], [], []>, precision = #tpu.contract_precision<fp32>} : vector<8x25xf32>, vector<25x25xf32>, vector<8x25xf32> -> vector<8x25xf32>
    %15 = arith.addf %11, %14 : vector<8x25xf32>
    %16 = vector.extract_strided_slice %6 {offsets = [24, 0], sizes = [8, 25], strides = [1, 1]} : vector<32x25xf32> to vector<8x25xf32>
    %cst_13 = arith.constant dense<0.000000e+00> : vector<8xf32>
    %17 = vector.multi_reduction <add>, %16, %cst_13 [1] : vector<8x25xf32> to vector<8xf32>
    %18 = vector.shape_cast %17 : vector<8xf32> to vector<8x1xf32>
    %cst_14 = arith.constant 2.500000e+01 : f32
    %19 = vector.broadcast %cst_14 : f32 to vector<8x1xf32>
    %20 = arith.divf %18, %19 : vector<8x1xf32>
    %cst_15 = arith.constant 0.000000e+00 : f32
    %21 = vector.broadcast %cst_15 : f32 to vector<8x25xf32>
    %22 = arith.subf %21, %15 : vector<8x25xf32>
    %23 = math.exp %22 : vector<8x25xf32>
    %cst_16 = arith.constant 1.000000e+00 : f32
    %24 = vector.broadcast %cst_16 : f32 to vector<8x25xf32>
    %25 = arith.addf %24, %23 : vector<8x25xf32>
    %cst_17 = arith.constant 1.000000e+00 : f32
    %26 = vector.broadcast %cst_17 : f32 to vector<8x25xf32>
    %27 = arith.divf %26, %25 : vector<8x25xf32>
    %cst_18 = arith.constant 5.000000e-01 : f32
    %28 = vector.broadcast %cst_18 : f32 to vector<8x25xf32>
    %29 = arith.mulf %28, %27 : vector<8x25xf32>
    %cst_19 = arith.constant 0.000000e+00 : f32
    %30 = vector.broadcast %cst_19 : f32 to vector<8x1xf32>
    %31 = arith.subf %30, %20 : vector<8x1xf32>
    %32 = math.exp %31 : vector<8x1xf32>
    %cst_20 = arith.constant 1.000000e+00 : f32
    %33 = vector.broadcast %cst_20 : f32 to vector<8x1xf32>
    %34 = arith.addf %33, %32 : vector<8x1xf32>
    %cst_21 = arith.constant 1.000000e+00 : f32
    %35 = vector.broadcast %cst_21 : f32 to vector<8x1xf32>
    %36 = arith.divf %35, %34 : vector<8x1xf32>
    %cst_22 = arith.constant 5.000000e-01 : f32
    %37 = vector.broadcast %cst_22 : f32 to vector<8x1xf32>
    %38 = arith.mulf %37, %36 : vector<8x1xf32>
    %39 = vector.broadcast %38 : vector<8x1xf32> to vector<8x25xf32>
    %40 = arith.addf %29, %39 : vector<8x25xf32>
    %41 = vector.extract_strided_slice %3 {offsets = [8, 0], sizes = [8, 25], strides = [1, 1]} : vector<16x25xf32> to vector<8x25xf32>
    %c0_23 = arith.constant 0 : index
    %c0_24 = arith.constant 0 : index
    %42 = vector.load %arg3[%c0_23, %c0_24] : memref<32x8xf32, #tpu.memory_space<vmem>>, vector<32x8xf32>
    %cst_25 = arith.constant dense<0.000000e+00> : vector<32x25xf32>
    %43 = tpu.matmul %42, %41, %cst_25 {dimension_numbers = #tpu.dot_dimension_numbers<[1], [0], [0], [1], [0, 0, 1, 1], [], []>, precision = #tpu.contract_precision<fp32>} : vector<32x8xf32>, vector<8x25xf32>, vector<32x25xf32> -> vector<32x25xf32>
    %44 = vector.extract_strided_slice %43 {offsets = [0, 0], sizes = [8, 25], strides = [1, 1]} : vector<32x25xf32> to vector<8x25xf32>
    %45 = vector.extract_strided_slice %43 {offsets = [8, 0], sizes = [8, 25], strides = [1, 1]} : vector<32x25xf32> to vector<8x25xf32>
    %c0_26 = arith.constant 0 : index
    %c0_27 = arith.constant 0 : index
    %46 = vector.load %arg4[%c0_26, %c0_27] : memref<25x25xf32, #tpu.memory_space<vmem>>, vector<25x25xf32>
    %cst_28 = arith.constant dense<0.000000e+00> : vector<8x25xf32>
    %47 = tpu.matmul %45, %46, %cst_28 {dimension_numbers = #tpu.dot_dimension_numbers<[1], [0], [0], [1], [0, 0, 1, 1], [], []>, precision = #tpu.contract_precision<fp32>} : vector<8x25xf32>, vector<25x25xf32>, vector<8x25xf32> -> vector<8x25xf32>
    %48 = arith.addf %44, %47 : vector<8x25xf32>
    %49 = vector.extract_strided_slice %43 {offsets = [16, 0], sizes = [8, 25], strides = [1, 1]} : vector<32x25xf32> to vector<8x25xf32>
    %c0_29 = arith.constant 0 : index
    %c0_30 = arith.constant 0 : index
    %50 = vector.load %arg5[%c0_29, %c0_30] : memref<25x25xf32, #tpu.memory_space<vmem>>, vector<25x25xf32>
    %cst_31 = arith.constant dense<0.000000e+00> : vector<8x25xf32>
    %51 = tpu.matmul %49, %50, %cst_31 {dimension_numbers = #tpu.dot_dimension_numbers<[1], [0], [0], [1], [0, 0, 1, 1], [], []>, precision = #tpu.contract_precision<fp32>} : vector<8x25xf32>, vector<25x25xf32>, vector<8x25xf32> -> vector<8x25xf32>
    %52 = arith.addf %48, %51 : vector<8x25xf32>
    %53 = vector.extract_strided_slice %43 {offsets = [24, 0], sizes = [8, 25], strides = [1, 1]} : vector<32x25xf32> to vector<8x25xf32>
    %cst_32 = arith.constant dense<0.000000e+00> : vector<8xf32>
    %54 = vector.multi_reduction <add>, %53, %cst_32 [1] : vector<8x25xf32> to vector<8xf32>
    %55 = vector.shape_cast %54 : vector<8xf32> to vector<8x1xf32>
    %cst_33 = arith.constant 2.500000e+01 : f32
    %56 = vector.broadcast %cst_33 : f32 to vector<8x1xf32>
    %57 = arith.divf %55, %56 : vector<8x1xf32>
    %cst_34 = arith.constant 0.000000e+00 : f32
    %58 = vector.broadcast %cst_34 : f32 to vector<8x25xf32>
    %59 = arith.subf %58, %52 : vector<8x25xf32>
    %60 = math.exp %59 : vector<8x25xf32>
    %cst_35 = arith.constant 1.000000e+00 : f32
    %61 = vector.broadcast %cst_35 : f32 to vector<8x25xf32>
    %62 = arith.addf %61, %60 : vector<8x25xf32>
    %cst_36 = arith.constant 1.000000e+00 : f32
    %63 = vector.broadcast %cst_36 : f32 to vector<8x25xf32>
    %64 = arith.divf %63, %62 : vector<8x25xf32>
    %cst_37 = arith.constant 5.000000e-01 : f32
    %65 = vector.broadcast %cst_37 : f32 to vector<8x25xf32>
    %66 = arith.mulf %65, %64 : vector<8x25xf32>
    %cst_38 = arith.constant 0.000000e+00 : f32
    %67 = vector.broadcast %cst_38 : f32 to vector<8x1xf32>
    %68 = arith.subf %67, %57 : vector<8x1xf32>
    %69 = math.exp %68 : vector<8x1xf32>
    %cst_39 = arith.constant 1.000000e+00 : f32
    %70 = vector.broadcast %cst_39 : f32 to vector<8x1xf32>
    %71 = arith.addf %70, %69 : vector<8x1xf32>
    %cst_40 = arith.constant 1.000000e+00 : f32
    %72 = vector.broadcast %cst_40 : f32 to vector<8x1xf32>
    %73 = arith.divf %72, %71 : vector<8x1xf32>
    %cst_41 = arith.constant 5.000000e-01 : f32
    %74 = vector.broadcast %cst_41 : f32 to vector<8x1xf32>
    %75 = arith.mulf %74, %73 : vector<8x1xf32>
    %76 = vector.broadcast %75 : vector<8x1xf32> to vector<8x25xf32>
    %77 = arith.addf %66, %76 : vector<8x25xf32>
    %78 = tpu.concatenate %40, %77 in 0 : vector<8x25xf32>, vector<8x25xf32> -> vector<16x25xf32>
    %c0_42 = arith.constant 0 : index
    %c0_43 = arith.constant 0 : index
    %79 = vector.load %arg6[%c0_42, %c0_43] : memref<25x256xf32, #tpu.memory_space<vmem>>, vector<25x256xf32>
    %cst_44 = arith.constant dense<0.000000e+00> : vector<16x256xf32>
    %80 = tpu.matmul %78, %79, %cst_44 {dimension_numbers = #tpu.dot_dimension_numbers<[1], [0], [0], [1], [0, 0, 1, 1], [], []>, precision = #tpu.contract_precision<fp32>} : vector<16x25xf32>, vector<25x256xf32>, vector<16x256xf32> -> vector<16x256xf32>
    %81 = arith.mulf %1, %80 : vector<16x256xf32>
    %82 = vector.shape_cast %81 : vector<16x256xf32> to vector<2x8x256xf32>
    %c0_45 = arith.constant 0 : index
    %c0_46 = arith.constant 0 : index
    %c0_47 = arith.constant 0 : index
    %83 = vector.load %arg7[%c0_45, %c0_46, %c0_47] : memref<2x8x256xf32, #tpu.memory_space<vmem>>, vector<2x8x256xf32>
    tpu.vector_store %arg7[%c0_45, %c0_46, %c0_47], %82 {strides = array<i32>} : memref<2x8x256xf32, #tpu.memory_space<vmem>>, vector<2x8x256xf32>,
    return
  }
  func.func @transform_0(%arg0: i32) -> (i32, i32, i32) {
    %c0_i32 = arith.constant 0 : i32
    %c0_i32_0 = arith.constant 0 : i32
    %c0_i32_1 = arith.constant 0 : i32
    return %arg0, %c0_i32, %c0_i32_0 : i32, i32, i32
  }
  func.func @transform_1(%arg0: i32) -> (i32, i32) {
    %c0_i32 = arith.constant 0 : i32
    %c0_i32_0 = arith.constant 0 : i32
    %c0_i32_1 = arith.constant 0 : i32
    return %c0_i32, %c0_i32_0 : i32, i32
  }
  func.func @transform_2(%arg0: i32) -> (i32, i32) {
    %c0_i32 = arith.constant 0 : i32
    %c0_i32_0 = arith.constant 0 : i32
    %c0_i32_1 = arith.constant 0 : i32
    return %c0_i32, %c0_i32_0 : i32, i32
  }
  func.func @transform_3(%arg0: i32) -> (i32, i32) {
    %c0_i32 = arith.constant 0 : i32
    %c0_i32_0 = arith.constant 0 : i32
    %c0_i32_1 = arith.constant 0 : i32
    return %c0_i32, %c0_i32_0 : i32, i32
  }
  func.func @transform_4(%arg0: i32) -> (i32, i32) {
    %c0_i32 = arith.constant 0 : i32
    %c0_i32_0 = arith.constant 0 : i32
    %c0_i32_1 = arith.constant 0 : i32
    return %c0_i32, %c0_i32_0 : i32, i32
  }
  func.func @transform_5(%arg0: i32) -> (i32, i32) {
    %c0_i32 = arith.constant 0 : i32
    %c0_i32_0 = arith.constant 0 : i32
    %c0_i32_1 = arith.constant 0 : i32
    return %c0_i32, %c0_i32_0 : i32, i32
  }
  func.func @transform_6(%arg0: i32) -> (i32, i32, i32) {
    %c0_i32 = arith.constant 0 : i32
    %c0_i32_0 = arith.constant 0 : i32
    %c0_i32_1 = arith.constant 0 : i32
    return %arg0, %c0_i32, %c0_i32_0 : i32, i32, i32
  }
}

</mosaic_0001>

<llo_original>
// kernel: tpu_custom_call.1
$region0: #{tpu_custom_call.1}
  #allocation0 [shape = 'u32[]', space=smem, size = 0x4, offset = 0x4, fixed_abs, tag = 'smem constant byte address 0x4 - core index']
  #allocation1 [shape = 'u32[144,128]{1,0:T(1,128)}', space=vmem, size = 0x12000, scoped, tag = 'internal scratch']
  %s0 = inlined_call_operand.vmem [shape: f32[2,8,256], index: 0, kind: input, shape index: {}]
  %s1 = inlined_call_operand.vmem [shape: f32[256,25], index: 1, kind: input, shape index: {}]
  %s2 = inlined_call_operand.vmem [shape: f32[32,8], index: 2, kind: input, shape index: {}]
  %s3 = inlined_call_operand.vmem [shape: f32[25,25], index: 3, kind: input, shape index: {}]
  %s4 = inlined_call_operand.vmem [shape: f32[25,25], index: 4, kind: input, shape index: {}]
  %s5 = inlined_call_operand.vmem [shape: f32[25,256], index: 5, kind: input, shape index: {}]
  %s6 = inlined_call_operand.hbm [shape: f32[2,8,256], index: 6, kind: output, shape index: {}]
  %s7 = sld [smem:[#allocation0]]
  $region34: #{tpu_custom_call.1} parent=0
    _
  %s9 = ssub.s32 1, %s7
  %s10 = scalar_select 0, %s9, %s7
  $region1: #{tpu_custom_call.1} parent=0
    #allocation2 [shape = 'u8[16384]{0}', space=vmem, size = 0x4000, scoped, tag = 'output window, operand 0, single buffered']
    #allocation3 [shape = 's32[1]{0}', space=sflag, size = 0x4, scoped, tag = 'scoped memory for tpu_custom_call.1']
    %11 = vsyncpa [#allocation3], 0
    // Predicated region
    $region2: #{tpu_custom_call.1} parent=1 // pred_check
      _
    $region3: #{tpu_custom_call.1} parent=1 // pred_check_branch
      %13 = sbr.rel (0) target = $region5
    $region4: #{tpu_custom_call.1} parent=1 // pred_region
      _
    $region5: #{tpu_custom_call.1} parent=1 // pred_fallthru
      _
    // Predicated region
    $region6: #{tpu_custom_call.1} parent=1 // pred_check
      _
    $region7: #{tpu_custom_call.1} parent=1 // pred_check_branch
      %15 = sbr.rel (0) target = $region9
    $region8: #{tpu_custom_call.1} parent=1 // pred_region
      _
    $region9: #{tpu_custom_call.1} parent=1 // pred_fallthru
      _
    // Predicated region
    $region10: #{tpu_custom_call.1} parent=1 // pred_check
      _
    $region11: #{tpu_custom_call.1} parent=1 // pred_check_branch
      %17 = sbr.rel (0) target = $region13
    $region12: #{tpu_custom_call.1} parent=1 // pred_region
      _
    $region13: #{tpu_custom_call.1} parent=1 // pred_fallthru
      _
    // Predicated region
    $region14: #{tpu_custom_call.1} parent=1 // pred_check
      _
    $region15: #{tpu_custom_call.1} parent=1 // pred_check_branch
      %19 = sbr.rel (0) target = $region17
    $region16: #{tpu_custom_call.1} parent=1 // pred_region
      _
    $region17: #{tpu_custom_call.1} parent=1 // pred_fallthru
      _
    // Predicated region
    $region18: #{tpu_custom_call.1} parent=1 // pred_check
      _
    $region19: #{tpu_custom_call.1} parent=1 // pred_check_branch
      %21 = sbr.rel (0) target = $region21
    $region20: #{tpu_custom_call.1} parent=1 // pred_region
      _
    $region21: #{tpu_custom_call.1} parent=1 // pred_fallthru
      _
    // Predicated region
    $region22: #{tpu_custom_call.1} parent=1 // pred_check
      _
    $region23: #{tpu_custom_call.1} parent=1 // pred_check_branch
      %23 = sbr.rel (0) target = $region25
    $region24: #{tpu_custom_call.1} parent=1 // pred_region
      _
    $region25: #{tpu_custom_call.1} parent=1 // pred_fallthru
      _
    %v24 = vld [vmem:[%s0] sm:$0xff]
    %v25 = vld [vmem:[%s0 + $0x8] sm:$0xff]
    %v26 = vld [vmem:[%s0 + $0x10] sm:$0xff]
    %v27 = vld [vmem:[%s0 + $0x18] sm:$0xff]
    %v28 = vld [vmem:[%s1] sm:$0xff]
    %v29 = vld [vmem:[%s1 + $0x8] sm:$0xff]
    %v30 = vld [vmem:[%s1 + $0x10] sm:$0xff]
    %v31 = vld [vmem:[%s1 + $0x18] sm:$0xff]
    %v32 = vld [vmem:[%s1 + $0x20] sm:$0xff]
    %v33 = vld [vmem:[%s1 + $0x28] sm:$0xff]
    %v34 = vld [vmem:[%s1 + $0x30] sm:$0xff]
    %v35 = vld [vmem:[%s1 + $0x38] sm:$0xff]
    %v36 = vld [vmem:[%s1 + $0x40] sm:$0xff]
    %v37 = vld [vmem:[%s1 + $0x48] sm:$0xff]
    %v38 = vld [vmem:[%s1 + $0x50] sm:$0xff]
    %v39 = vld [vmem:[%s1 + $0x58] sm:$0xff]
    %v40 = vld [vmem:[%s1 + $0x60] sm:$0xff]
    %v41 = vld [vmem:[%s1 + $0x68] sm:$0xff]
    %v42 = vld [vmem:[%s1 + $0x70] sm:$0xff]
    %v43 = vld [vmem:[%s1 + $0x78] sm:$0xff]
    %v44 = vld [vmem:[%s1 + $0x80] sm:$0xff]
    %v45 = vld [vmem:[%s1 + $0x88] sm:$0xff]
    %v46 = vld [vmem:[%s1 + $0x90] sm:$0xff]
    %v47 = vld [vmem:[%s1 + $0x98] sm:$0xff]
    %v48 = vld [vmem:[%s1 + $0xa0] sm:$0xff]
    %v49 = vld [vmem:[%s1 + $0xa8] sm:$0xff]
    %v50 = vld [vmem:[%s1 + $0xb0] sm:$0xff]
    %v51 = vld [vmem:[%s1 + $0xb8] sm:$0xff]
    %v52 = vld [vmem:[%s1 + $0xc0] sm:$0xff]
    %v53 = vld [vmem:[%s1 + $0xc8] sm:$0xff]
    %v54 = vld [vmem:[%s1 + $0xd0] sm:$0xff]
    %v55 = vld [vmem:[%s1 + $0xd8] sm:$0xff]
    %v56 = vld [vmem:[%s1 + $0xe0] sm:$0xff]
    %v57 = vld [vmem:[%s1 + $0xe8] sm:$0xff]
    %v58 = vld [vmem:[%s1 + $0xf0] sm:$0xff]
    %v59 = vld [vmem:[%s1 + $0xf8] sm:$0xff]
    %60 = vmatprep.subr.mxu0 0.0
    %v61 = vand.u32 %v28, 4294901760
    %62 = vmatpush1.msra.mxu0 %v61
    %63 = vmatprep.subr.mxu0 0.0
    %v64 = vand.u32 %v29, 4294901760
    %65 = vmatpush1.msra.mxu0 %v64
    %66 = vmatprep.subr.mxu0 0.0
    %v67 = vand.u32 %v30, 4294901760
    %68 = vmatpush1.msra.mxu0 %v67
    %69 = vmatprep.subr.mxu0 0.0
    %v70 = vand.u32 %v31, 4294901760
    %71 = vmatpush1.msra.mxu0 %v70
    %72 = vmatprep.subr.mxu0 0.0
    %v73 = vand.u32 %v32, 4294901760
    %74 = vmatpush1.msra.mxu0 %v73
    %75 = vmatprep.subr.mxu0 0.0
    %v76 = vand.u32 %v33, 4294901760
    %77 = vmatpush1.msra.mxu0 %v76
    %78 = vmatprep.subr.mxu0 0.0
    %v79 = vand.u32 %v34, 4294901760
    %80 = vmatpush1.msra.mxu0 %v79
    %81 = vmatprep.subr.mxu0 0.0
    %v82 = vand.u32 %v35, 4294901760
    %83 = vmatpush1.msra.mxu0 %v82
    %84 = vmatprep.subr.mxu0 0.0
    %v85 = vand.u32 %v36, 4294901760
    %86 = vmatpush1.msra.mxu0 %v85
    %87 = vmatprep.subr.mxu0 0.0
    %v88 = vand.u32 %v37, 4294901760
    %89 = vmatpush1.msra.mxu0 %v88
    %90 = vmatprep.subr.mxu0 0.0
    %v91 = vand.u32 %v38, 4294901760
    %92 = vmatpush1.msra.mxu0 %v91
    %93 = vmatprep.subr.mxu0 0.0
    %v94 = vand.u32 %v39, 4294901760
    %95 = vmatpush1.msra.mxu0 %v94
    %96 = vmatprep.subr.mxu0 0.0
    %v97 = vand.u32 %v40, 4294901760
    %98 = vmatpush1.msra.mxu0 %v97
    %99 = vmatprep.subr.mxu0 0.0
    %v100 = vand.u32 %v41, 4294901760
    %101 = vmatpush1.msra.mxu0 %v100
    %102 = vmatprep.subr.mxu0 0.0
    %v103 = vand.u32 %v42, 4294901760
    %104 = vmatpush1.msra.mxu0 %v103
    %105 = vmatprep.subr.mxu0 0.0
    %v106 = vand.u32 %v43, 4294901760
    %107 = vmatpush1.msra.mxu0 %v106
    %108 = vmatprep.subr.mxu0 0.0
    %v109 = vand.u32 %v44, 4294901760
    %110 = vmatpush1.msra.mxu0 %v109
    %111 = vmatprep.subr.mxu0 0.0
    %v112 = vand.u32 %v45, 4294901760
    %113 = vmatpush1.msra.mxu0 %v112
    %114 = vmatprep.subr.mxu0 0.0
    %v115 = vand.u32 %v46, 4294901760
    %116 = vmatpush1.msra.mxu0 %v115
    %117 = vmatprep.subr.mxu0 0.0
    %v118 = vand.u32 %v47, 4294901760
    %119 = vmatpush1.msra.mxu0 %v118
    %120 = vmatprep.subr.mxu0 0.0
    %v121 = vand.u32 %v48, 4294901760
    %122 = vmatpush1.msra.mxu0 %v121
    %123 = vmatprep.subr.mxu0 0.0
    %v124 = vand.u32 %v49, 4294901760
    %125 = vmatpush1.msra.mxu0 %v124
    %126 = vmatprep.subr.mxu0 0.0
    %v127 = vand.u32 %v50, 4294901760
    %128 = vmatpush1.msra.mxu0 %v127
    %129 = vmatprep.subr.mxu0 0.0
    %v130 = vand.u32 %v51, 4294901760
    %131 = vmatpush1.msra.mxu0 %v130
    %132 = vmatprep.subr.mxu0 0.0
    %v133 = vand.u32 %v52, 4294901760
    %134 = vmatpush1.msra.mxu0 %v133
    %135 = vmatprep.subr.mxu0 0.0
    %v136 = vand.u32 %v53, 4294901760
    %137 = vmatpush1.msra.mxu0 %v136
    %138 = vmatprep.subr.mxu0 0.0
    %v139 = vand.u32 %v54, 4294901760
    %140 = vmatpush1.msra.mxu0 %v139
    %141 = vmatprep.subr.mxu0 0.0
    %v142 = vand.u32 %v55, 4294901760
    %143 = vmatpush1.msra.mxu0 %v142
    %144 = vmatprep.subr.mxu0 0.0
    %v145 = vand.u32 %v56, 4294901760
    %146 = vmatpush1.msra.mxu0 %v145
    %147 = vmatprep.subr.mxu0 0.0
    %v148 = vand.u32 %v57, 4294901760
    %149 = vmatpush1.msra.mxu0 %v148
    %150 = vmatprep.subr.mxu0 0.0
    %v151 = vand.u32 %v58, 4294901760
    %152 = vmatpush1.msra.mxu0 %v151
    %153 = vmatprep.subr.mxu0 0.0
    %v154 = vand.u32 %v59, 4294901760
    %155 = vmatpush1.msra.mxu0 %v154
    %v156 = vand.u32 %v25, 4294901760
    %v157 = vsub.f32 %v25, %v156
    %v158 = vand.u32 %v157, 4294901760
    %v159 = vsub.f32 %v157, %v158
    %v160 = vand.u32 %v159, 4294901760
    %161 = vmatprep.mubr.f32.mxu0 %v160
    %v162 = vand.u32 %v24, 4294901760
    %v163 = vsub.f32 %v24, %v162
    %v164 = vand.u32 %v163, 4294901760
    %v165 = vsub.f32 %v163, %v164
    %v166 = vand.u32 %v165, 4294901760
    %167 = vmatmul.mubr.f32.gmra.mrb[0].mxu0 %v166
    %v168 = vpop.f32.mrb[0].mxu0
    %v169 = vadd.f32 0.0, %v168
    %v170 = vpop.f32.mrb[0].mxu0
    %v171 = vand.u32 %v27, 4294901760
    %v172 = vsub.f32 %v27, %v171
    %v173 = vand.u32 %v172, 4294901760
    %v174 = vsub.f32 %v172, %v173
    %v175 = vand.u32 %v174, 4294901760
    %176 = vmatprep.mubr.f32.mxu0 %v175
    %v177 = vand.u32 %v26, 4294901760
    %v178 = vsub.f32 %v26, %v177
    %v179 = vand.u32 %v178, 4294901760
    %v180 = vsub.f32 %v178, %v179
    %v181 = vand.u32 %v180, 4294901760
    %182 = vmatmul.mubr.f32.gmra.mrb[0].mxu0 %v181
    %v183 = vpop.f32.mrb[0].mxu0
    %v184 = vadd.f32 0.0, %v183
    %v185 = vpop.f32.mrb[0].mxu0
    %186 = vdwg.mxu0
    %187 = vmatprep.subr.mxu0 0.0
    %v188 = vand.u32 %v28, 4294901760
    %v189 = vsub.f32 %v28, %v188
    %v190 = vand.u32 %v189, 4294901760
    %v191 = vsub.f32 %v189, %v190
    %v192 = vand.u32 %v191, 4294901760
    %193 = vmatpush1.msra.mxu0 %v192
    %194 = vmatprep.subr.mxu0 0.0
    %v195 = vand.u32 %v29, 4294901760
    %v196 = vsub.f32 %v29, %v195
    %v197 = vand.u32 %v196, 4294901760
    %v198 = vsub.f32 %v196, %v197
    %v199 = vand.u32 %v198, 4294901760
    %200 = vmatpush1.msra.mxu0 %v199
    %201 = vmatprep.subr.mxu0 0.0
    %v202 = vand.u32 %v30, 4294901760
    %v203 = vsub.f32 %v30, %v202
    %v204 = vand.u32 %v203, 4294901760
    %v205 = vsub.f32 %v203, %v204
    %v206 = vand.u32 %v205, 4294901760
    %207 = vmatpush1.msra.mxu0 %v206
    %208 = vmatprep.subr.mxu0 0.0
    %v209 = vand.u32 %v31, 4294901760
    %v210 = vsub.f32 %v31, %v209
    %v211 = vand.u32 %v210, 4294901760
    %v212 = vsub.f32 %v210, %v211
    %v213 = vand.u32 %v212, 4294901760
    %214 = vmatpush1.msra.mxu0 %v213
    %215 = vmatprep.subr.mxu0 0.0
    %v216 = vand.u32 %v32, 4294901760
    %v217 = vsub.f32 %v32, %v216
    %v218 = vand.u32 %v217, 4294901760
    %v219 = vsub.f32 %v217, %v218
    %v220 = vand.u32 %v219, 4294901760
    %221 = vmatpush1.msra.mxu0 %v220
    %222 = vmatprep.subr.mxu0 0.0
    %v223 = vand.u32 %v33, 4294901760
    %v224 = vsub.f32 %v33, %v223
    %v225 = vand.u32 %v224, 4294901760
    %v226 = vsub.f32 %v224, %v225
    %v227 = vand.u32 %v226, 4294901760
    %228 = vmatpush1.msra.mxu0 %v227
    %229 = vmatprep.subr.mxu0 0.0
    %v230 = vand.u32 %v34, 4294901760
    %v231 = vsub.f32 %v34, %v230
    %v232 = vand.u32 %v231, 4294901760
    %v233 = vsub.f32 %v231, %v232
    %v234 = vand.u32 %v233, 4294901760
    %235 = vmatpush1.msra.mxu0 %v234
    %236 = vmatprep.subr.mxu0 0.0
    %v237 = vand.u32 %v35, 4294901760
    %v238 = vsub.f32 %v35, %v237
    %v239 = vand.u32 %v238, 4294901760
    %v240 = vsub.f32 %v238, %v239
    %v241 = vand.u32 %v240, 4294901760
    %242 = vmatpush1.msra.mxu0 %v241
    %243 = vmatprep.subr.mxu0 0.0
    %v244 = vand.u32 %v36, 4294901760
    %v245 = vsub.f32 %v36, %v244
    %v246 = vand.u32 %v245, 4294901760
    %v247 = vsub.f32 %v245, %v246
    %v248 = vand.u32 %v247, 4294901760
    %249 = vmatpush1.msra.mxu0 %v248
    %250 = vmatprep.subr.mxu0 0.0
    %v251 = vand.u32 %v37, 4294901760
    %v252 = vsub.f32 %v37, %v251
    %v253 = vand.u32 %v252, 4294901760
    %v254 = vsub.f32 %v252, %v253
    %v255 = vand.u32 %v254, 4294901760
    %256 = vmatpush1.msra.mxu0 %v255
    %257 = vmatprep.subr.mxu0 0.0
    %v258 = vand.u32 %v38, 4294901760
    %v259 = vsub.f32 %v38, %v258
    %v260 = vand.u32 %v259, 4294901760
    %v261 = vsub.f32 %v259, %v260
    %v262 = vand.u32 %v261, 4294901760
    %263 = vmatpush1.msra.mxu0 %v262
    %264 = vmatprep.subr.mxu0 0.0
    %v265 = vand.u32 %v39, 4294901760
    %v266 = vsub.f32 %v39, %v265
    %v267 = vand.u32 %v266, 4294901760
    %v268 = vsub.f32 %v266, %v267
    %v269 = vand.u32 %v268, 4294901760
    %270 = vmatpush1.msra.mxu0 %v269
    %271 = vmatprep.subr.mxu0 0.0
    %v272 = vand.u32 %v40, 4294901760
    %v273 = vsub.f32 %v40, %v272
    %v274 = vand.u32 %v273, 4294901760
    %v275 = vsub.f32 %v273, %v274
    %v276 = vand.u32 %v275, 4294901760
    %277 = vmatpush1.msra.mxu0 %v276
    %278 = vmatprep.subr.mxu0 0.0
    %v279 = vand.u32 %v41, 4294901760
    %v280 = vsub.f32 %v41, %v279
    %v281 = vand.u32 %v280, 4294901760
    %v282 = vsub.f32 %v280, %v281
    %v283 = vand.u32 %v282, 4294901760
    %284 = vmatpush1.msra.mxu0 %v283
    %285 = vmatprep.subr.mxu0 0.0
    %v286 = vand.u32 %v42, 4294901760
    %v287 = vsub.f32 %v42, %v286
    %v288 = vand.u32 %v287, 4294901760
    %v289 = vsub.f32 %v287, %v288
    %v290 = vand.u32 %v289, 4294901760
    %291 = vmatpush1.msra.mxu0 %v290
    %292 = vmatprep.subr.mxu0 0.0
    %v293 = vand.u32 %v43, 4294901760
    %v294 = vsub.f32 %v43, %v293
    %v295 = vand.u32 %v294, 4294901760
    %v296 = vsub.f32 %v294, %v295
    %v297 = vand.u32 %v296, 4294901760
    %298 = vmatpush1.msra.mxu0 %v297
    %299 = vmatprep.subr.mxu0 0.0
    %v300 = vand.u32 %v44, 4294901760
    %v301 = vsub.f32 %v44, %v300
    %v302 = vand.u32 %v301, 4294901760
    %v303 = vsub.f32 %v301, %v302
    %v304 = vand.u32 %v303, 4294901760
    %305 = vmatpush1.msra.mxu0 %v304
    %306 = vmatprep.subr.mxu0 0.0
    %v307 = vand.u32 %v45, 4294901760
    %v308 = vsub.f32 %v45, %v307
    %v309 = vand.u32 %v308, 4294901760
    %v310 = vsub.f32 %v308, %v309
    %v311 = vand.u32 %v310, 4294901760
    %312 = vmatpush1.msra.mxu0 %v311
    %313 = vmatprep.subr.mxu0 0.0
    %v314 = vand.u32 %v46, 4294901760
    %v315 = vsub.f32 %v46, %v314
    %v316 = vand.u32 %v315, 4294901760
    %v317 = vsub.f32 %v315, %v316
    %v318 = vand.u32 %v317, 4294901760
    %319 = vmatpush1.msra.mxu0 %v318
    %320 = vmatprep.subr.mxu0 0.0
    %v321 = vand.u32 %v47, 4294901760
    %v322 = vsub.f32 %v47, %v321
    %v323 = vand.u32 %v322, 4294901760
    %v324 = vsub.f32 %v322, %v323
    %v325 = vand.u32 %v324, 4294901760
    %326 = vmatpush1.msra.mxu0 %v325
    %327 = vmatprep.subr.mxu0 0.0
    %v328 = vand.u32 %v48, 4294901760
    %v329 = vsub.f32 %v48, %v328
    %v330 = vand.u32 %v329, 4294901760
    %v331 = vsub.f32 %v329, %v330
    %v332 = vand.u32 %v331, 4294901760
    %333 = vmatpush1.msra.mxu0 %v332
    %334 = vmatprep.subr.mxu0 0.0
    %v335 = vand.u32 %v49, 4294901760
    %v336 = vsub.f32 %v49, %v335
    %v337 = vand.u32 %v336, 4294901760
    %v338 = vsub.f32 %v336, %v337
    %v339 = vand.u32 %v338, 4294901760
    %340 = vmatpush1.msra.mxu0 %v339
    %341 = vmatprep.subr.mxu0 0.0
    %v342 = vand.u32 %v50, 4294901760
    %v343 = vsub.f32 %v50, %v342
    %v344 = vand.u32 %v343, 4294901760
    %v345 = vsub.f32 %v343, %v344
    %v346 = vand.u32 %v345, 4294901760
    %347 = vmatpush1.msra.mxu0 %v346
    %348 = vmatprep.subr.mxu0 0.0
    %v349 = vand.u32 %v51, 4294901760
    %v350 = vsub.f32 %v51, %v349
    %v351 = vand.u32 %v350, 4294901760
    %v352 = vsub.f32 %v350, %v351
    %v353 = vand.u32 %v352, 4294901760
    %354 = vmatpush1.msra.mxu0 %v353
    %355 = vmatprep.subr.mxu0 0.0
    %v356 = vand.u32 %v52, 4294901760
    %v357 = vsub.f32 %v52, %v356
    %v358 = vand.u32 %v357, 4294901760
    %v359 = vsub.f32 %v357, %v358
    %v360 = vand.u32 %v359, 4294901760
    %361 = vmatpush1.msra.mxu0 %v360
    %362 = vmatprep.subr.mxu0 0.0
    %v363 = vand.u32 %v53, 4294901760
    %v364 = vsub.f32 %v53, %v363
    %v365 = vand.u32 %v364, 4294901760
    %v366 = vsub.f32 %v364, %v365
    %v367 = vand.u32 %v366, 4294901760
    %368 = vmatpush1.msra.mxu0 %v367
    %369 = vmatprep.subr.mxu0 0.0
    %v370 = vand.u32 %v54, 4294901760
    %v371 = vsub.f32 %v54, %v370
    %v372 = vand.u32 %v371, 4294901760
    %v373 = vsub.f32 %v371, %v372
    %v374 = vand.u32 %v373, 4294901760
    %375 = vmatpush1.msra.mxu0 %v374
    %376 = vmatprep.subr.mxu0 0.0
    %v377 = vand.u32 %v55, 4294901760
    %v378 = vsub.f32 %v55, %v377
    %v379 = vand.u32 %v378, 4294901760
    %v380 = vsub.f32 %v378, %v379
    %v381 = vand.u32 %v380, 4294901760
    %382 = vmatpush1.msra.mxu0 %v381
    %383 = vmatprep.subr.mxu0 0.0
    %v384 = vand.u32 %v56, 4294901760
    %v385 = vsub.f32 %v56, %v384
    %v386 = vand.u32 %v385, 4294901760
    %v387 = vsub.f32 %v385, %v386
    %v388 = vand.u32 %v387, 4294901760
    %389 = vmatpush1.msra.mxu0 %v388
    %390 = vmatprep.subr.mxu0 0.0
    %v391 = vand.u32 %v57, 4294901760
    %v392 = vsub.f32 %v57, %v391
    %v393 = vand.u32 %v392, 4294901760
    %v394 = vsub.f32 %v392, %v393
    %v395 = vand.u32 %v394, 4294901760
    %396 = vmatpush1.msra.mxu0 %v395
    %397 = vmatprep.subr.mxu0 0.0
    %v398 = vand.u32 %v58, 4294901760
    %v399 = vsub.f32 %v58, %v398
    %v400 = vand.u32 %v399, 4294901760
    %v401 = vsub.f32 %v399, %v400
    %v402 = vand.u32 %v401, 4294901760
    %403 = vmatpush1.msra.mxu0 %v402
    %404 = vmatprep.subr.mxu0 0.0
    %v405 = vand.u32 %v59, 4294901760
    %v406 = vsub.f32 %v59, %v405
    %v407 = vand.u32 %v406, 4294901760
    %v408 = vsub.f32 %v406, %v407
    %v409 = vand.u32 %v408, 4294901760
    %410 = vmatpush1.msra.mxu0 %v409
    %v411 = vand.u32 %v25, 4294901760
    %412 = vmatprep.mubr.f32.mxu0 %v411
    %v413 = vand.u32 %v24, 4294901760
    %414 = vmatmul.mubr.f32.gmra.mrb[0].mxu0 %v413
    %v415 = vpop.f32.mrb[0].mxu0
    %v416 = vadd.f32 %v169, %v415
    %v417 = vpop.f32.mrb[0].mxu0
    %v418 = vand.u32 %v27, 4294901760
    %419 = vmatprep.mubr.f32.mxu0 %v418
    %v420 = vand.u32 %v26, 4294901760
    %421 = vmatmul.mubr.f32.gmra.mrb[0].mxu0 %v420
    %v422 = vpop.f32.mrb[0].mxu0
    %v423 = vadd.f32 %v184, %v422
    %v424 = vpop.f32.mrb[0].mxu0
    %425 = vdwg.mxu0
    %426 = vmatprep.subr.mxu0 0.0
    %v427 = vand.u32 %v28, 4294901760
    %v428 = vsub.f32 %v28, %v427
    %429 = vmatpush1.msra.mxu0 %v428
    %430 = vmatprep.subr.mxu0 0.0
    %v431 = vand.u32 %v29, 4294901760
    %v432 = vsub.f32 %v29, %v431
    %433 = vmatpush1.msra.mxu0 %v432
    %434 = vmatprep.subr.mxu0 0.0
    %v435 = vand.u32 %v30, 4294901760
    %v436 = vsub.f32 %v30, %v435
    %437 = vmatpush1.msra.mxu0 %v436
    %438 = vmatprep.subr.mxu0 0.0
    %v439 = vand.u32 %v31, 4294901760
    %v440 = vsub.f32 %v31, %v439
    %441 = vmatpush1.msra.mxu0 %v440
    %442 = vmatprep.subr.mxu0 0.0
    %v443 = vand.u32 %v32, 4294901760
    %v444 = vsub.f32 %v32, %v443
    %445 = vmatpush1.msra.mxu0 %v444
    %446 = vmatprep.subr.mxu0 0.0
    %v447 = vand.u32 %v33, 4294901760
    %v448 = vsub.f32 %v33, %v447
    %449 = vmatpush1.msra.mxu0 %v448
    %450 = vmatprep.subr.mxu0 0.0
    %v451 = vand.u32 %v34, 4294901760
    %v452 = vsub.f32 %v34, %v451
    %453 = vmatpush1.msra.mxu0 %v452
    %454 = vmatprep.subr.mxu0 0.0
    %v455 = vand.u32 %v35, 4294901760
    %v456 = vsub.f32 %v35, %v455
    %457 = vmatpush1.msra.mxu0 %v456
    %458 = vmatprep.subr.mxu0 0.0
    %v459 = vand.u32 %v36, 4294901760
    %v460 = vsub.f32 %v36, %v459
    %461 = vmatpush1.msra.mxu0 %v460
    %462 = vmatprep.subr.mxu0 0.0
    %v463 = vand.u32 %v37, 4294901760
    %v464 = vsub.f32 %v37, %v463
    %465 = vmatpush1.msra.mxu0 %v464
    %466 = vmatprep.subr.mxu0 0.0
    %v467 = vand.u32 %v38, 4294901760
    %v468 = vsub.f32 %v38, %v467
    %469 = vmatpush1.msra.mxu0 %v468
    %470 = vmatprep.subr.mxu0 0.0
    %v471 = vand.u32 %v39, 4294901760
    %v472 = vsub.f32 %v39, %v471
    %473 = vmatpush1.msra.mxu0 %v472
    %474 = vmatprep.subr.mxu0 0.0
    %v475 = vand.u32 %v40, 4294901760
    %v476 = vsub.f32 %v40, %v475
    %477 = vmatpush1.msra.mxu0 %v476
    %478 = vmatprep.subr.mxu0 0.0
    %v479 = vand.u32 %v41, 4294901760
    %v480 = vsub.f32 %v41, %v479
    %481 = vmatpush1.msra.mxu0 %v480
    %482 = vmatprep.subr.mxu0 0.0
    %v483 = vand.u32 %v42, 4294901760
    %v484 = vsub.f32 %v42, %v483
    %485 = vmatpush1.msra.mxu0 %v484
    %486 = vmatprep.subr.mxu0 0.0
    %v487 = vand.u32 %v43, 4294901760
    %v488 = vsub.f32 %v43, %v487
    %489 = vmatpush1.msra.mxu0 %v488
    %490 = vmatprep.subr.mxu0 0.0
    %v491 = vand.u32 %v44, 4294901760
    %v492 = vsub.f32 %v44, %v491
    %493 = vmatpush1.msra.mxu0 %v492
    %494 = vmatprep.subr.mxu0 0.0
    %v495 = vand.u32 %v45, 4294901760
    %v496 = vsub.f32 %v45, %v495
    %497 = vmatpush1.msra.mxu0 %v496
    %498 = vmatprep.subr.mxu0 0.0
    %v499 = vand.u32 %v46, 4294901760
    %v500 = vsub.f32 %v46, %v499
    %501 = vmatpush1.msra.mxu0 %v500
    %502 = vmatprep.subr.mxu0 0.0
    %v503 = vand.u32 %v47, 4294901760
    %v504 = vsub.f32 %v47, %v503
    %505 = vmatpush1.msra.mxu0 %v504
    %506 = vmatprep.subr.mxu0 0.0
    %v507 = vand.u32 %v48, 4294901760
    %v508 = vsub.f32 %v48, %v507
    %509 = vmatpush1.msra.mxu0 %v508
    %510 = vmatprep.subr.mxu0 0.0
    %v511 = vand.u32 %v49, 4294901760
    %v512 = vsub.f32 %v49, %v511
    %513 = vmatpush1.msra.mxu0 %v512
    %514 = vmatprep.subr.mxu0 0.0
    %v515 = vand.u32 %v50, 4294901760
    %v516 = vsub.f32 %v50, %v515
    %517 = vmatpush1.msra.mxu0 %v516
    %518 = vmatprep.subr.mxu0 0.0
    %v519 = vand.u32 %v51, 4294901760
    %v520 = vsub.f32 %v51, %v519
    %521 = vmatpush1.msra.mxu0 %v520
    %522 = vmatprep.subr.mxu0 0.0
    %v523 = vand.u32 %v52, 4294901760
    %v524 = vsub.f32 %v52, %v523
    %525 = vmatpush1.msra.mxu0 %v524
    %526 = vmatprep.subr.mxu0 0.0
    %v527 = vand.u32 %v53, 4294901760
    %v528 = vsub.f32 %v53, %v527
    %529 = vmatpush1.msra.mxu0 %v528
    %530 = vmatprep.subr.mxu0 0.0
    %v531 = vand.u32 %v54, 4294901760
    %v532 = vsub.f32 %v54, %v531
    %533 = vmatpush1.msra.mxu0 %v532
    %534 = vmatprep.subr.mxu0 0.0
    %v535 = vand.u32 %v55, 4294901760
    %v536 = vsub.f32 %v55, %v535
    %537 = vmatpush1.msra.mxu0 %v536
    %538 = vmatprep.subr.mxu0 0.0
    %v539 = vand.u32 %v56, 4294901760
    %v540 = vsub.f32 %v56, %v539
    %541 = vmatpush1.msra.mxu0 %v540
    %542 = vmatprep.subr.mxu0 0.0
    %v543 = vand.u32 %v57, 4294901760
    %v544 = vsub.f32 %v57, %v543
    %545 = vmatpush1.msra.mxu0 %v544
    %546 = vmatprep.subr.mxu0 0.0
    %v547 = vand.u32 %v58, 4294901760
    %v548 = vsub.f32 %v58, %v547
    %549 = vmatpush1.msra.mxu0 %v548
    %550 = vmatprep.subr.mxu0 0.0
    %v551 = vand.u32 %v59, 4294901760
    %v552 = vsub.f32 %v59, %v551
    %553 = vmatpush1.msra.mxu0 %v552
    %v554 = vand.u32 %v25, 4294901760
    %v555 = vsub.f32 %v25, %v554
    %556 = vmatprep.mubr.f32.mxu0 %v555
    %v557 = vand.u32 %v24, 4294901760
    %v558 = vsub.f32 %v24, %v557
    %559 = vmatmul.mubr.f32.gmra.mrb[0].mxu0 %v558
    %v560 = vpop.f32.mrb[0].mxu0
    %v561 = vadd.f32 %v416, %v560
    %v562 = vpop.f32.mrb[0].mxu0
    %v563 = vand.u32 %v27, 4294901760
    %v564 = vsub.f32 %v27, %v563
    %565 = vmatprep.mubr.f32.mxu0 %v564
    %v566 = vand.u32 %v26, 4294901760
    %v567 = vsub.f32 %v26, %v566
    %568 = vmatmul.mubr.f32.gmra.mrb[0].mxu0 %v567
    %v569 = vpop.f32.mrb[0].mxu0
    %v570 = vadd.f32 %v423, %v569
    %v571 = vpop.f32.mrb[0].mxu0
    %572 = vdwg.mxu0
    %573 = vmatprep.subr.mxu0 0.0
    %v574 = vand.u32 %v28, 4294901760
    %575 = vmatpush1.msra.mxu0 %v574
    %576 = vmatprep.subr.mxu0 0.0
    %v577 = vand.u32 %v29, 4294901760
    %578 = vmatpush1.msra.mxu0 %v577
    %579 = vmatprep.subr.mxu0 0.0
    %v580 = vand.u32 %v30, 4294901760
    %581 = vmatpush1.msra.mxu0 %v580
    %582 = vmatprep.subr.mxu0 0.0
    %v583 = vand.u32 %v31, 4294901760
    %584 = vmatpush1.msra.mxu0 %v583
    %585 = vmatprep.subr.mxu0 0.0
    %v586 = vand.u32 %v32, 4294901760
    %587 = vmatpush1.msra.mxu0 %v586
    %588 = vmatprep.subr.mxu0 0.0
    %v589 = vand.u32 %v33, 4294901760
    %590 = vmatpush1.msra.mxu0 %v589
    %591 = vmatprep.subr.mxu0 0.0
    %v592 = vand.u32 %v34, 4294901760
    %593 = vmatpush1.msra.mxu0 %v592
    %594 = vmatprep.subr.mxu0 0.0
    %v595 = vand.u32 %v35, 4294901760
    %596 = vmatpush1.msra.mxu0 %v595
    %597 = vmatprep.subr.mxu0 0.0
    %v598 = vand.u32 %v36, 4294901760
    %599 = vmatpush1.msra.mxu0 %v598
    %600 = vmatprep.subr.mxu0 0.0
    %v601 = vand.u32 %v37, 4294901760
    %602 = vmatpush1.msra.mxu0 %v601
    %603 = vmatprep.subr.mxu0 0.0
    %v604 = vand.u32 %v38, 4294901760
    %605 = vmatpush1.msra.mxu0 %v604
    %606 = vmatprep.subr.mxu0 0.0
    %v607 = vand.u32 %v39, 4294901760
    %608 = vmatpush1.msra.mxu0 %v607
    %609 = vmatprep.subr.mxu0 0.0
    %v610 = vand.u32 %v40, 4294901760
    %611 = vmatpush1.msra.mxu0 %v610
    %612 = vmatprep.subr.mxu0 0.0
    %v613 = vand.u32 %v41, 4294901760
    %614 = vmatpush1.msra.mxu0 %v613
    %615 = vmatprep.subr.mxu0 0.0
    %v616 = vand.u32 %v42, 4294901760
    %617 = vmatpush1.msra.mxu0 %v616
    %618 = vmatprep.subr.mxu0 0.0
    %v619 = vand.u32 %v43, 4294901760
    %620 = vmatpush1.msra.mxu0 %v619
    %621 = vmatprep.subr.mxu0 0.0
    %v622 = vand.u32 %v44, 4294901760
    %623 = vmatpush1.msra.mxu0 %v622
    %624 = vmatprep.subr.mxu0 0.0
    %v625 = vand.u32 %v45, 4294901760
    %626 = vmatpush1.msra.mxu0 %v625
    %627 = vmatprep.subr.mxu0 0.0
    %v628 = vand.u32 %v46, 4294901760
    %629 = vmatpush1.msra.mxu0 %v628
    %630 = vmatprep.subr.mxu0 0.0
    %v631 = vand.u32 %v47, 4294901760
    %632 = vmatpush1.msra.mxu0 %v631
    %633 = vmatprep.subr.mxu0 0.0
    %v634 = vand.u32 %v48, 4294901760
    %635 = vmatpush1.msra.mxu0 %v634
    %636 = vmatprep.subr.mxu0 0.0
    %v637 = vand.u32 %v49, 4294901760
    %638 = vmatpush1.msra.mxu0 %v637
    %639 = vmatprep.subr.mxu0 0.0
    %v640 = vand.u32 %v50, 4294901760
    %641 = vmatpush1.msra.mxu0 %v640
    %642 = vmatprep.subr.mxu0 0.0
    %v643 = vand.u32 %v51, 4294901760
    %644 = vmatpush1.msra.mxu0 %v643
    %645 = vmatprep.subr.mxu0 0.0
    %v646 = vand.u32 %v52, 4294901760
    %647 = vmatpush1.msra.mxu0 %v646
    %648 = vmatprep.subr.mxu0 0.0
    %v649 = vand.u32 %v53, 4294901760
    %650 = vmatpush1.msra.mxu0 %v649
    %651 = vmatprep.subr.mxu0 0.0
    %v652 = vand.u32 %v54, 4294901760
    %653 = vmatpush1.msra.mxu0 %v652
    %654 = vmatprep.subr.mxu0 0.0
    %v655 = vand.u32 %v55, 4294901760
    %656 = vmatpush1.msra.mxu0 %v655
    %657 = vmatprep.subr.mxu0 0.0
    %v658 = vand.u32 %v56, 4294901760
    %659 = vmatpush1.msra.mxu0 %v658
    %660 = vmatprep.subr.mxu0 0.0
    %v661 = vand.u32 %v57, 4294901760
    %662 = vmatpush1.msra.mxu0 %v661
    %663 = vmatprep.subr.mxu0 0.0
    %v664 = vand.u32 %v58, 4294901760
    %665 = vmatpush1.msra.mxu0 %v664
    %666 = vmatprep.subr.mxu0 0.0
    %v667 = vand.u32 %v59, 4294901760
    %668 = vmatpush1.msra.mxu0 %v667
    %v669 = vand.u32 %v25, 4294901760
    %v670 = vsub.f32 %v25, %v669
    %v671 = vand.u32 %v670, 4294901760
    %672 = vmatprep.mubr.f32.mxu0 %v671
    %v673 = vand.u32 %v24, 4294901760
    %v674 = vsub.f32 %v24, %v673
    %v675 = vand.u32 %v674, 4294901760
    %676 = vmatmul.mubr.f32.gmra.mrb[0].mxu0 %v675
    %v677 = vpop.f32.mrb[0].mxu0
    %v678 = vadd.f32 %v561, %v677
    %v679 = vpop.f32.mrb[0].mxu0
    %v680 = vand.u32 %v27, 4294901760
    %v681 = vsub.f32 %v27, %v680
    %v682 = vand.u32 %v681, 4294901760
    %683 = vmatprep.mubr.f32.mxu0 %v682
    %v684 = vand.u32 %v26, 4294901760
    %v685 = vsub.f32 %v26, %v684
    %v686 = vand.u32 %v685, 4294901760
    %687 = vmatmul.mubr.f32.gmra.mrb[0].mxu0 %v686
    %v688 = vpop.f32.mrb[0].mxu0
    %v689 = vadd.f32 %v570, %v688
    %v690 = vpop.f32.mrb[0].mxu0
    %691 = vdwg.mxu0
    %692 = vmatprep.subr.mxu0 0.0
    %v693 = vand.u32 %v28, 4294901760
    %v694 = vsub.f32 %v28, %v693
    %v695 = vand.u32 %v694, 4294901760
    %696 = vmatpush1.msra.mxu0 %v695
    %697 = vmatprep.subr.mxu0 0.0
    %v698 = vand.u32 %v29, 4294901760
    %v699 = vsub.f32 %v29, %v698
    %v700 = vand.u32 %v699, 4294901760
    %701 = vmatpush1.msra.mxu0 %v700
    %702 = vmatprep.subr.mxu0 0.0
    %v703 = vand.u32 %v30, 4294901760
    %v704 = vsub.f32 %v30, %v703
    %v705 = vand.u32 %v704, 4294901760
    %706 = vmatpush1.msra.mxu0 %v705
    %707 = vmatprep.subr.mxu0 0.0
    %v708 = vand.u32 %v31, 4294901760
    %v709 = vsub.f32 %v31, %v708
    %v710 = vand.u32 %v709, 4294901760
    %711 = vmatpush1.msra.mxu0 %v710
    %712 = vmatprep.subr.mxu0 0.0
    %v713 = vand.u32 %v32, 4294901760
    %v714 = vsub.f32 %v32, %v713
    %v715 = vand.u32 %v714, 4294901760
    %716 = vmatpush1.msra.mxu0 %v715
    %717 = vmatprep.subr.mxu0 0.0
    %v718 = vand.u32 %v33, 4294901760
    %v719 = vsub.f32 %v33, %v718
    %v720 = vand.u32 %v719, 4294901760
    %721 = vmatpush1.msra.mxu0 %v720
    %722 = vmatprep.subr.mxu0 0.0
    %v723 = vand.u32 %v34, 4294901760
    %v724 = vsub.f32 %v34, %v723
    %v725 = vand.u32 %v724, 4294901760
    %726 = vmatpush1.msra.mxu0 %v725
    %727 = vmatprep.subr.mxu0 0.0
    %v728 = vand.u32 %v35, 4294901760
    %v729 = vsub.f32 %v35, %v728
    %v730 = vand.u32 %v729, 4294901760
    %731 = vmatpush1.msra.mxu0 %v730
    %732 = vmatprep.subr.mxu0 0.0
    %v733 = vand.u32 %v36, 4294901760
    %v734 = vsub.f32 %v36, %v733
    %v735 = vand.u32 %v734, 4294901760
    %736 = vmatpush1.msra.mxu0 %v735
    %737 = vmatprep.subr.mxu0 0.0
    %v738 = vand.u32 %v37, 4294901760
    %v739 = vsub.f32 %v37, %v738
    %v740 = vand.u32 %v739, 4294901760
    %741 = vmatpush1.msra.mxu0 %v740
    %742 = vmatprep.subr.mxu0 0.0
    %v743 = vand.u32 %v38, 4294901760
    %v744 = vsub.f32 %v38, %v743
    %v745 = vand.u32 %v744, 4294901760
    %746 = vmatpush1.msra.mxu0 %v745
    %747 = vmatprep.subr.mxu0 0.0
    %v748 = vand.u32 %v39, 4294901760
    %v749 = vsub.f32 %v39, %v748
    %v750 = vand.u32 %v749, 4294901760
    %751 = vmatpush1.msra.mxu0 %v750
    %752 = vmatprep.subr.mxu0 0.0
    %v753 = vand.u32 %v40, 4294901760
    %v754 = vsub.f32 %v40, %v753
    %v755 = vand.u32 %v754, 4294901760
    %756 = vmatpush1.msra.mxu0 %v755
    %757 = vmatprep.subr.mxu0 0.0
    %v758 = vand.u32 %v41, 4294901760
    %v759 = vsub.f32 %v41, %v758
    %v760 = vand.u32 %v759, 4294901760
    %761 = vmatpush1.msra.mxu0 %v760
    %762 = vmatprep.subr.mxu0 0.0
    %v763 = vand.u32 %v42, 4294901760
    %v764 = vsub.f32 %v42, %v763
    %v765 = vand.u32 %v764, 4294901760
    %766 = vmatpush1.msra.mxu0 %v765
    %767 = vmatprep.subr.mxu0 0.0
    %v768 = vand.u32 %v43, 4294901760
    %v769 = vsub.f32 %v43, %v768
    %v770 = vand.u32 %v769, 4294901760
    %771 = vmatpush1.msra.mxu0 %v770
    %772 = vmatprep.subr.mxu0 0.0
    %v773 = vand.u32 %v44, 4294901760
    %v774 = vsub.f32 %v44, %v773
    %v775 = vand.u32 %v774, 4294901760
    %776 = vmatpush1.msra.mxu0 %v775
    %777 = vmatprep.subr.mxu0 0.0
    %v778 = vand.u32 %v45, 4294901760
    %v779 = vsub.f32 %v45, %v778
    %v780 = vand.u32 %v779, 4294901760
    %781 = vmatpush1.msra.mxu0 %v780
    %782 = vmatprep.subr.mxu0 0.0
    %v783 = vand.u32 %v46, 4294901760
    %v784 = vsub.f32 %v46, %v783
    %v785 = vand.u32 %v784, 4294901760
    %786 = vmatpush1.msra.mxu0 %v785
    %787 = vmatprep.subr.mxu0 0.0
    %v788 = vand.u32 %v47, 4294901760
    %v789 = vsub.f32 %v47, %v788
    %v790 = vand.u32 %v789, 4294901760
    %791 = vmatpush1.msra.mxu0 %v790
    %792 = vmatprep.subr.mxu0 0.0
    %v793 = vand.u32 %v48, 4294901760
    %v794 = vsub.f32 %v48, %v793
    %v795 = vand.u32 %v794, 4294901760
    %796 = vmatpush1.msra.mxu0 %v795
    %797 = vmatprep.subr.mxu0 0.0
    %v798 = vand.u32 %v49, 4294901760
    %v799 = vsub.f32 %v49, %v798
    %v800 = vand.u32 %v799, 4294901760
    %801 = vmatpush1.msra.mxu0 %v800
    %802 = vmatprep.subr.mxu0 0.0
    %v803 = vand.u32 %v50, 4294901760
    %v804 = vsub.f32 %v50, %v803
    %v805 = vand.u32 %v804, 4294901760
    %806 = vmatpush1.msra.mxu0 %v805
    %807 = vmatprep.subr.mxu0 0.0
    %v808 = vand.u32 %v51, 4294901760
    %v809 = vsub.f32 %v51, %v808
    %v810 = vand.u32 %v809, 4294901760
    %811 = vmatpush1.msra.mxu0 %v810
    %812 = vmatprep.subr.mxu0 0.0
    %v813 = vand.u32 %v52, 4294901760
    %v814 = vsub.f32 %v52, %v813
    %v815 = vand.u32 %v814, 4294901760
    %816 = vmatpush1.msra.mxu0 %v815
    %817 = vmatprep.subr.mxu0 0.0
    %v818 = vand.u32 %v53, 4294901760
    %v819 = vsub.f32 %v53, %v818
    %v820 = vand.u32 %v819, 4294901760
    %821 = vmatpush1.msra.mxu0 %v820
    %822 = vmatprep.subr.mxu0 0.0
    %v823 = vand.u32 %v54, 4294901760
    %v824 = vsub.f32 %v54, %v823
    %v825 = vand.u32 %v824, 4294901760
    %826 = vmatpush1.msra.mxu0 %v825
    %827 = vmatprep.subr.mxu0 0.0
    %v828 = vand.u32 %v55, 4294901760
    %v829 = vsub.f32 %v55, %v828
    %v830 = vand.u32 %v829, 4294901760
    %831 = vmatpush1.msra.mxu0 %v830
    %832 = vmatprep.subr.mxu0 0.0
    %v833 = vand.u32 %v56, 4294901760
    %v834 = vsub.f32 %v56, %v833
    %v835 = vand.u32 %v834, 4294901760
    %836 = vmatpush1.msra.mxu0 %v835
    %837 = vmatprep.subr.mxu0 0.0
    %v838 = vand.u32 %v57, 4294901760
    %v839 = vsub.f32 %v57, %v838
    %v840 = vand.u32 %v839, 4294901760
    %841 = vmatpush1.msra.mxu0 %v840
    %842 = vmatprep.subr.mxu0 0.0
    %v843 = vand.u32 %v58, 4294901760
    %v844 = vsub.f32 %v58, %v843
    %v845 = vand.u32 %v844, 4294901760
    %846 = vmatpush1.msra.mxu0 %v845
    %847 = vmatprep.subr.mxu0 0.0
    %v848 = vand.u32 %v59, 4294901760
    %v849 = vsub.f32 %v59, %v848
    %v850 = vand.u32 %v849, 4294901760
    %851 = vmatpush1.msra.mxu0 %v850
    %v852 = vand.u32 %v25, 4294901760
    %853 = vmatprep.mubr.f32.mxu0 %v852
    %v854 = vand.u32 %v24, 4294901760
    %855 = vmatmul.mubr.f32.gmra.mrb[0].mxu0 %v854
    %v856 = vpop.f32.mrb[0].mxu0
    %v857 = vadd.f32 %v678, %v856
    %v858 = vpop.f32.mrb[0].mxu0
    %v859 = vand.u32 %v27, 4294901760
    %860 = vmatprep.mubr.f32.mxu0 %v859
    %v861 = vand.u32 %v26, 4294901760
    %862 = vmatmul.mubr.f32.gmra.mrb[0].mxu0 %v861
    %v863 = vpop.f32.mrb[0].mxu0
    %v864 = vadd.f32 %v689, %v863
    %v865 = vpop.f32.mrb[0].mxu0
    %866 = vdwg.mxu0
    %867 = vmatprep.subr.mxu0 0.0
    %v868 = vand.u32 %v28, 4294901760
    %869 = vmatpush1.msra.mxu0 %v868
    %870 = vmatprep.subr.mxu0 0.0
    %v871 = vand.u32 %v29, 4294901760
    %872 = vmatpush1.msra.mxu0 %v871
    %873 = vmatprep.subr.mxu0 0.0
    %v874 = vand.u32 %v30, 4294901760
    %875 = vmatpush1.msra.mxu0 %v874
    %876 = vmatprep.subr.mxu0 0.0
    %v877 = vand.u32 %v31, 4294901760
    %878 = vmatpush1.msra.mxu0 %v877
    %879 = vmatprep.subr.mxu0 0.0
    %v880 = vand.u32 %v32, 4294901760
    %881 = vmatpush1.msra.mxu0 %v880
    %882 = vmatprep.subr.mxu0 0.0
    %v883 = vand.u32 %v33, 4294901760
    %884 = vmatpush1.msra.mxu0 %v883
    %885 = vmatprep.subr.mxu0 0.0
    %v886 = vand.u32 %v34, 4294901760
    %887 = vmatpush1.msra.mxu0 %v886
    %888 = vmatprep.subr.mxu0 0.0
    %v889 = vand.u32 %v35, 4294901760
    %890 = vmatpush1.msra.mxu0 %v889
    %891 = vmatprep.subr.mxu0 0.0
    %v892 = vand.u32 %v36, 4294901760
    %893 = vmatpush1.msra.mxu0 %v892
    %894 = vmatprep.subr.mxu0 0.0
    %v895 = vand.u32 %v37, 4294901760
    %896 = vmatpush1.msra.mxu0 %v895
    %897 = vmatprep.subr.mxu0 0.0
    %v898 = vand.u32 %v38, 4294901760
    %899 = vmatpush1.msra.mxu0 %v898
    %900 = vmatprep.subr.mxu0 0.0
    %v901 = vand.u32 %v39, 4294901760
    %902 = vmatpush1.msra.mxu0 %v901
    %903 = vmatprep.subr.mxu0 0.0
    %v904 = vand.u32 %v40, 4294901760
    %905 = vmatpush1.msra.mxu0 %v904
    %906 = vmatprep.subr.mxu0 0.0
    %v907 = vand.u32 %v41, 4294901760
    %908 = vmatpush1.msra.mxu0 %v907
    %909 = vmatprep.subr.mxu0 0.0
    %v910 = vand.u32 %v42, 4294901760
    %911 = vmatpush1.msra.mxu0 %v910
    %912 = vmatprep.subr.mxu0 0.0
    %v913 = vand.u32 %v43, 4294901760
    %914 = vmatpush1.msra.mxu0 %v913
    %915 = vmatprep.subr.mxu0 0.0
    %v916 = vand.u32 %v44, 4294901760
    %917 = vmatpush1.msra.mxu0 %v916
    %918 = vmatprep.subr.mxu0 0.0
    %v919 = vand.u32 %v45, 4294901760
    %920 = vmatpush1.msra.mxu0 %v919
    %921 = vmatprep.subr.mxu0 0.0
    %v922 = vand.u32 %v46, 4294901760
    %923 = vmatpush1.msra.mxu0 %v922
    %924 = vmatprep.subr.mxu0 0.0
    %v925 = vand.u32 %v47, 4294901760
    %926 = vmatpush1.msra.mxu0 %v925
    %927 = vmatprep.subr.mxu0 0.0
    %v928 = vand.u32 %v48, 4294901760
    %929 = vmatpush1.msra.mxu0 %v928
    %930 = vmatprep.subr.mxu0 0.0
    %v931 = vand.u32 %v49, 4294901760
    %932 = vmatpush1.msra.mxu0 %v931
    %933 = vmatprep.subr.mxu0 0.0
    %v934 = vand.u32 %v50, 4294901760
    %935 = vmatpush1.msra.mxu0 %v934
    %936 = vmatprep.subr.mxu0 0.0
    %v937 = vand.u32 %v51, 4294901760
    %938 = vmatpush1.msra.mxu0 %v937
    %939 = vmatprep.subr.mxu0 0.0
    %v940 = vand.u32 %v52, 4294901760
    %941 = vmatpush1.msra.mxu0 %v940
    %942 = vmatprep.subr.mxu0 0.0
    %v943 = vand.u32 %v53, 4294901760
    %944 = vmatpush1.msra.mxu0 %v943
    %945 = vmatprep.subr.mxu0 0.0
    %v946 = vand.u32 %v54, 4294901760
    %947 = vmatpush1.msra.mxu0 %v946
    %948 = vmatprep.subr.mxu0 0.0
    %v949 = vand.u32 %v55, 4294901760
    %950 = vmatpush1.msra.mxu0 %v949
    %951 = vmatprep.subr.mxu0 0.0
    %v952 = vand.u32 %v56, 4294901760
    %953 = vmatpush1.msra.mxu0 %v952
    %954 = vmatprep.subr.mxu0 0.0
    %v955 = vand.u32 %v57, 4294901760
    %956 = vmatpush1.msra.mxu0 %v955
    %957 = vmatprep.subr.mxu0 0.0
    %v958 = vand.u32 %v58, 4294901760
    %959 = vmatpush1.msra.mxu0 %v958
    %960 = vmatprep.subr.mxu0 0.0
    %v961 = vand.u32 %v59, 4294901760
    %962 = vmatpush1.msra.mxu0 %v961
    %v963 = vand.u32 %v25, 4294901760
    %964 = vmatprep.mubr.f32.mxu0 %v963
    %v965 = vand.u32 %v24, 4294901760
    %966 = vmatmul.mubr.f32.gmra.mrb[0].mxu0 %v965
    %v967 = vpop.f32.mrb[0].mxu0
    %v968 = vadd.f32 %v857, %v967
    %v969 = vpop.f32.mrb[0].mxu0
    %v970 = vand.u32 %v27, 4294901760
    %971 = vmatprep.mubr.f32.mxu0 %v970
    %v972 = vand.u32 %v26, 4294901760
    %973 = vmatmul.mubr.f32.gmra.mrb[0].mxu0 %v972
    %v974 = vpop.f32.mrb[0].mxu0
    %v975 = vadd.f32 %v864, %v974
    %v976 = vpop.f32.mrb[0].mxu0
    %977 = vdwg.mxu0
    %v978 = vld [vmem:[%s2] sm:$0xff]
    %v979 = vld [vmem:[%s2 + $0x8] sm:$0xff]
    %v980 = vld [vmem:[%s2 + $0x10] sm:$0xff]
    %v981 = vld [vmem:[%s2 + $0x18] sm:$0xff]
    %vm982 = vcmask 64512
    %v984 = vsel %vm982, %v978, 0
    %v987 = vsel %vm982, %v979, 0
    %v990 = vsel %vm982, %v980, 0
    %v993 = vsel %vm982, %v981, 0
    %995 = vmatprep.subr.mxu0 0.0
    %v996 = vand.u32 %v968, 4294901760
    %997 = vmatpush1.msra.mxu0 %v996
    %998 = vmatprep.subr.mxu0 0.0
    %999 = vmatpush1.msra.mxu0 0.0
    %1000 = vmatprep.subr.mxu0 0.0
    %1001 = vmatpush1.msra.mxu0 0.0
    %1002 = vmatprep.subr.mxu0 0.0
    %1003 = vmatpush1.msra.mxu0 0.0
    %1004 = vmatprep.subr.mxu0 0.0
    %1005 = vmatpush1.msra.mxu0 0.0
    %1006 = vmatprep.subr.mxu0 0.0
    %1007 = vmatpush1.msra.mxu0 0.0
    %1008 = vmatprep.subr.mxu0 0.0
    %1009 = vmatpush1.msra.mxu0 0.0
    %1010 = vmatprep.subr.mxu0 0.0
    %1011 = vmatpush1.msra.mxu0 0.0
    %1012 = vmatprep.subr.mxu0 0.0
    %1013 = vmatpush1.msra.mxu0 0.0
    %1014 = vmatprep.subr.mxu0 0.0
    %1015 = vmatpush1.msra.mxu0 0.0
    %1016 = vmatprep.subr.mxu0 0.0
    %1017 = vmatpush1.msra.mxu0 0.0
    %1018 = vmatprep.subr.mxu0 0.0
    %1019 = vmatpush1.msra.mxu0 0.0
    %1020 = vmatprep.subr.mxu0 0.0
    %1021 = vmatpush1.msra.mxu0 0.0
    %1022 = vmatprep.subr.mxu0 0.0
    %1023 = vmatpush1.msra.mxu0 0.0
    %1024 = vmatprep.subr.mxu0 0.0
    %1025 = vmatpush1.msra.mxu0 0.0
    %1026 = vmatprep.subr.mxu0 0.0
    %1027 = vmatpush1.msra.mxu0 0.0
    %1028 = vmatprep.subr.mxu0 0.0
    %1029 = vmatpush1.msra.mxu0 0.0
    %1030 = vmatprep.subr.mxu0 0.0
    %1031 = vmatpush1.msra.mxu0 0.0
    %1032 = vmatprep.subr.mxu0 0.0
    %1033 = vmatpush1.msra.mxu0 0.0
    %1034 = vmatprep.subr.mxu0 0.0
    %1035 = vmatpush1.msra.mxu0 0.0
    %1036 = vmatprep.subr.mxu0 0.0
    %1037 = vmatpush1.msra.mxu0 0.0
    %1038 = vmatprep.subr.mxu0 0.0
    %1039 = vmatpush1.msra.mxu0 0.0
    %1040 = vmatprep.subr.mxu0 0.0
    %1041 = vmatpush1.msra.mxu0 0.0
    %1042 = vmatprep.subr.mxu0 0.0
    %1043 = vmatpush1.msra.mxu0 0.0
    %1044 = vmatprep.subr.mxu0 0.0
    %1045 = vmatpush1.msra.mxu0 0.0
    %1046 = vmatprep.subr.mxu0 0.0
    %1047 = vmatpush1.msra.mxu0 0.0
    %1048 = vmatprep.subr.mxu0 0.0
    %1049 = vmatpush1.msra.mxu0 0.0
    %1050 = vmatprep.subr.mxu0 0.0
    %1051 = vmatpush1.msra.mxu0 0.0
    %1052 = vmatprep.subr.mxu0 0.0
    %1053 = vmatpush1.msra.mxu0 0.0
    %1054 = vmatprep.subr.mxu0 0.0
    %1055 = vmatpush1.msra.mxu0 0.0
    %1056 = vmatprep.subr.mxu0 0.0
    %1057 = vmatpush1.msra.mxu0 0.0
    %1058 = vmatprep.subr.mxu0 0.0
    %1059 = vmatpush1.msra.mxu0 0.0
    %1060 = vmatprep.mubr.f32.mxu0 0.0
    %v1061 = vand.u32 %v984, 4294901760
    %v1062 = vsub.f32 %v984, %v1061
    %v1063 = vand.u32 %v1062, 4294901760
    %v1064 = vsub.f32 %v1062, %v1063
    %v1065 = vand.u32 %v1064, 4294901760
    %1066 = vmatmul.mubr.f32.gmra.mrb[0].mxu0 %v1065
    %v1067 = vpop.f32.mrb[0].mxu0
    %v1068 = vadd.f32 0.0, %v1067
    %v1069 = vpop.f32.mrb[0].mxu0
    %1070 = vmatprep.mubr.f32.mxu0 0.0
    %v1071 = vand.u32 %v987, 4294901760
    %v1072 = vsub.f32 %v987, %v1071
    %v1073 = vand.u32 %v1072, 4294901760
    %v1074 = vsub.f32 %v1072, %v1073
    %v1075 = vand.u32 %v1074, 4294901760
    %1076 = vmatmul.mubr.f32.gmra.mrb[0].mxu0 %v1075
    %v1077 = vpop.f32.mrb[0].mxu0
    %v1078 = vadd.f32 0.0, %v1077
    %v1079 = vpop.f32.mrb[0].mxu0
    %1080 = vmatprep.mubr.f32.mxu0 0.0
    %v1081 = vand.u32 %v990, 4294901760
    %v1082 = vsub.f32 %v990, %v1081
    %v1083 = vand.u32 %v1082, 4294901760
    %v1084 = vsub.f32 %v1082, %v1083
    %v1085 = vand.u32 %v1084, 4294901760
    %1086 = vmatmul.mubr.f32.gmra.mrb[0].mxu0 %v1085
    %v1087 = vpop.f32.mrb[0].mxu0
    %v1088 = vadd.f32 0.0, %v1087
    %v1089 = vpop.f32.mrb[0].mxu0
    %1090 = vmatprep.mubr.f32.mxu0 0.0
    %v1091 = vand.u32 %v993, 4294901760
    %v1092 = vsub.f32 %v993, %v1091
    %v1093 = vand.u32 %v1092, 4294901760
    %v1094 = vsub.f32 %v1092, %v1093
    %v1095 = vand.u32 %v1094, 4294901760
    %1096 = vmatmul.mubr.f32.gmra.mrb[0].mxu0 %v1095
    %v1097 = vpop.f32.mrb[0].mxu0
    %v1098 = vadd.f32 0.0, %v1097
    %v1099 = vpop.f32.mrb[0].mxu0
    %1100 = vdwg.mxu0
    %1101 = vmatprep.subr.mxu0 0.0
    %v1102 = vand.u32 %v968, 4294901760
    %v1103 = vsub.f32 %v968, %v1102
    %v1104 = vand.u32 %v1103, 4294901760
    %v1105 = vsub.f32 %v1103, %v1104
    %v1106 = vand.u32 %v1105, 4294901760
    %1107 = vmatpush1.msra.mxu0 %v1106
    %1108 = vmatprep.subr.mxu0 0.0
    %1109 = vmatpush1.msra.mxu0 0.0
    %1110 = vmatprep.subr.mxu0 0.0
    %1111 = vmatpush1.msra.mxu0 0.0
    %1112 = vmatprep.subr.mxu0 0.0
    %1113 = vmatpush1.msra.mxu0 0.0
    %1114 = vmatprep.subr.mxu0 0.0
    %1115 = vmatpush1.msra.mxu0 0.0
    %1116 = vmatprep.subr.mxu0 0.0
    %1117 = vmatpush1.msra.mxu0 0.0
    %1118 = vmatprep.subr.mxu0 0.0
    %1119 = vmatpush1.msra.mxu0 0.0
    %1120 = vmatprep.subr.mxu0 0.0
    %1121 = vmatpush1.msra.mxu0 0.0
    %1122 = vmatprep.subr.mxu0 0.0
    %1123 = vmatpush1.msra.mxu0 0.0
    %1124 = vmatprep.subr.mxu0 0.0
    %1125 = vmatpush1.msra.mxu0 0.0
    %1126 = vmatprep.subr.mxu0 0.0
    %1127 = vmatpush1.msra.mxu0 0.0
    %1128 = vmatprep.subr.mxu0 0.0
    %1129 = vmatpush1.msra.mxu0 0.0
    %1130 = vmatprep.subr.mxu0 0.0
    %1131 = vmatpush1.msra.mxu0 0.0
    %1132 = vmatprep.subr.mxu0 0.0
    %1133 = vmatpush1.msra.mxu0 0.0
    %1134 = vmatprep.subr.mxu0 0.0
    %1135 = vmatpush1.msra.mxu0 0.0
    %1136 = vmatprep.subr.mxu0 0.0
    %1137 = vmatpush1.msra.mxu0 0.0
    %1138 = vmatprep.subr.mxu0 0.0
    %1139 = vmatpush1.msra.mxu0 0.0
    %1140 = vmatprep.subr.mxu0 0.0
    %1141 = vmatpush1.msra.mxu0 0.0
    %1142 = vmatprep.subr.mxu0 0.0
    %1143 = vmatpush1.msra.mxu0 0.0
    %1144 = vmatprep.subr.mxu0 0.0
    %1145 = vmatpush1.msra.mxu0 0.0
    %1146 = vmatprep.subr.mxu0 0.0
    %1147 = vmatpush1.msra.mxu0 0.0
    %1148 = vmatprep.subr.mxu0 0.0
    %1149 = vmatpush1.msra.mxu0 0.0
    %1150 = vmatprep.subr.mxu0 0.0
    %1151 = vmatpush1.msra.mxu0 0.0
    %1152 = vmatprep.subr.mxu0 0.0
    %1153 = vmatpush1.msra.mxu0 0.0
    %1154 = vmatprep.subr.mxu0 0.0
    %1155 = vmatpush1.msra.mxu0 0.0
    %1156 = vmatprep.subr.mxu0 0.0
    %1157 = vmatpush1.msra.mxu0 0.0
    %1158 = vmatprep.subr.mxu0 0.0
    %1159 = vmatpush1.msra.mxu0 0.0
    %1160 = vmatprep.subr.mxu0 0.0
    %1161 = vmatpush1.msra.mxu0 0.0
    %1162 = vmatprep.subr.mxu0 0.0
    %1163 = vmatpush1.msra.mxu0 0.0
    %1164 = vmatprep.subr.mxu0 0.0
    %1165 = vmatpush1.msra.mxu0 0.0
    %1166 = vmatprep.subr.mxu0 0.0
    %1167 = vmatpush1.msra.mxu0 0.0
    %1168 = vmatprep.subr.mxu0 0.0
    %1169 = vmatpush1.msra.mxu0 0.0
    %1170 = vmatprep.mubr.f32.mxu0 0.0
    %v1171 = vand.u32 %v984, 4294901760
    %1172 = vmatmul.mubr.f32.gmra.mrb[0].mxu0 %v1171
    %v1173 = vpop.f32.mrb[0].mxu0
    %v1174 = vadd.f32 %v1068, %v1173
    %v1175 = vpop.f32.mrb[0].mxu0
    %1176 = vmatprep.mubr.f32.mxu0 0.0
    %v1177 = vand.u32 %v987, 4294901760
    %1178 = vmatmul.mubr.f32.gmra.mrb[0].mxu0 %v1177
    %v1179 = vpop.f32.mrb[0].mxu0
    %v1180 = vadd.f32 %v1078, %v1179
    %v1181 = vpop.f32.mrb[0].mxu0
    %1182 = vmatprep.mubr.f32.mxu0 0.0
    %v1183 = vand.u32 %v990, 4294901760
    %1184 = vmatmul.mubr.f32.gmra.mrb[0].mxu0 %v1183
    %v1185 = vpop.f32.mrb[0].mxu0
    %v1186 = vadd.f32 %v1088, %v1185
    %v1187 = vpop.f32.mrb[0].mxu0
    %1188 = vmatprep.mubr.f32.mxu0 0.0
    %v1189 = vand.u32 %v993, 4294901760
    %1190 = vmatmul.mubr.f32.gmra.mrb[0].mxu0 %v1189
    %v1191 = vpop.f32.mrb[0].mxu0
    %v1192 = vadd.f32 %v1098, %v1191
    %v1193 = vpop.f32.mrb[0].mxu0
    %1194 = vdwg.mxu0
    %1195 = vmatprep.subr.mxu0 0.0
    %v1196 = vand.u32 %v968, 4294901760
    %v1197 = vsub.f32 %v968, %v1196
    %1198 = vmatpush1.msra.mxu0 %v1197
    %1199 = vmatprep.subr.mxu0 0.0
    %1200 = vmatpush1.msra.mxu0 0.0
    %1201 = vmatprep.subr.mxu0 0.0
    %1202 = vmatpush1.msra.mxu0 0.0
    %1203 = vmatprep.subr.mxu0 0.0
    %1204 = vmatpush1.msra.mxu0 0.0
    %1205 = vmatprep.subr.mxu0 0.0
    %1206 = vmatpush1.msra.mxu0 0.0
    %1207 = vmatprep.subr.mxu0 0.0
    %1208 = vmatpush1.msra.mxu0 0.0
    %1209 = vmatprep.subr.mxu0 0.0
    %1210 = vmatpush1.msra.mxu0 0.0
    %1211 = vmatprep.subr.mxu0 0.0
    %1212 = vmatpush1.msra.mxu0 0.0
    %1213 = vmatprep.subr.mxu0 0.0
    %1214 = vmatpush1.msra.mxu0 0.0
    %1215 = vmatprep.subr.mxu0 0.0
    %1216 = vmatpush1.msra.mxu0 0.0
    %1217 = vmatprep.subr.mxu0 0.0
    %1218 = vmatpush1.msra.mxu0 0.0
    %1219 = vmatprep.subr.mxu0 0.0
    %1220 = vmatpush1.msra.mxu0 0.0
    %1221 = vmatprep.subr.mxu0 0.0
    %1222 = vmatpush1.msra.mxu0 0.0
    %1223 = vmatprep.subr.mxu0 0.0
    %1224 = vmatpush1.msra.mxu0 0.0
    %1225 = vmatprep.subr.mxu0 0.0
    %1226 = vmatpush1.msra.mxu0 0.0
    %1227 = vmatprep.subr.mxu0 0.0
    %1228 = vmatpush1.msra.mxu0 0.0
    %1229 = vmatprep.subr.mxu0 0.0
    %1230 = vmatpush1.msra.mxu0 0.0
    %1231 = vmatprep.subr.mxu0 0.0
    %1232 = vmatpush1.msra.mxu0 0.0
    %1233 = vmatprep.subr.mxu0 0.0
    %1234 = vmatpush1.msra.mxu0 0.0
    %1235 = vmatprep.subr.mxu0 0.0
    %1236 = vmatpush1.msra.mxu0 0.0
    %1237 = vmatprep.subr.mxu0 0.0
    %1238 = vmatpush1.msra.mxu0 0.0
    %1239 = vmatprep.subr.mxu0 0.0
    %1240 = vmatpush1.msra.mxu0 0.0
    %1241 = vmatprep.subr.mxu0 0.0
    %1242 = vmatpush1.msra.mxu0 0.0
    %1243 = vmatprep.subr.mxu0 0.0
    %1244 = vmatpush1.msra.mxu0 0.0
    %1245 = vmatprep.subr.mxu0 0.0
    %1246 = vmatpush1.msra.mxu0 0.0
    %1247 = vmatprep.subr.mxu0 0.0
    %1248 = vmatpush1.msra.mxu0 0.0
    %1249 = vmatprep.subr.mxu0 0.0
    %1250 = vmatpush1.msra.mxu0 0.0
    %1251 = vmatprep.subr.mxu0 0.0
    %1252 = vmatpush1.msra.mxu0 0.0
    %1253 = vmatprep.subr.mxu0 0.0
    %1254 = vmatpush1.msra.mxu0 0.0
    %1255 = vmatprep.subr.mxu0 0.0
    %1256 = vmatpush1.msra.mxu0 0.0
    %1257 = vmatprep.subr.mxu0 0.0
    %1258 = vmatpush1.msra.mxu0 0.0
    %1259 = vmatprep.subr.mxu0 0.0
    %1260 = vmatpush1.msra.mxu0 0.0
    %1261 = vmatprep.mubr.f32.mxu0 0.0
    %v1262 = vand.u32 %v984, 4294901760
    %v1263 = vsub.f32 %v984, %v1262
    %1264 = vmatmul.mubr.f32.gmra.mrb[0].mxu0 %v1263
    %v1265 = vpop.f32.mrb[0].mxu0
    %v1266 = vadd.f32 %v1174, %v1265
    %v1267 = vpop.f32.mrb[0].mxu0
    %1268 = vmatprep.mubr.f32.mxu0 0.0
    %v1269 = vand.u32 %v987, 4294901760
    %v1270 = vsub.f32 %v987, %v1269
    %1271 = vmatmul.mubr.f32.gmra.mrb[0].mxu0 %v1270
    %v1272 = vpop.f32.mrb[0].mxu0
    %v1273 = vadd.f32 %v1180, %v1272
    %v1274 = vpop.f32.mrb[0].mxu0
    %1275 = vmatprep.mubr.f32.mxu0 0.0
    %v1276 = vand.u32 %v990, 4294901760
    %v1277 = vsub.f32 %v990, %v1276
    %1278 = vmatmul.mubr.f32.gmra.mrb[0].mxu0 %v1277
    %v1279 = vpop.f32.mrb[0].mxu0
    %v1280 = vadd.f32 %v1186, %v1279
    %v1281 = vpop.f32.mrb[0].mxu0
    %1282 = vmatprep.mubr.f32.mxu0 0.0
    %v1283 = vand.u32 %v993, 4294901760
    %v1284 = vsub.f32 %v993, %v1283
    %1285 = vmatmul.mubr.f32.gmra.mrb[0].mxu0 %v1284
    %v1286 = vpop.f32.mrb[0].mxu0
    %v1287 = vadd.f32 %v1192, %v1286
    %v1288 = vpop.f32.mrb[0].mxu0
    %1289 = vdwg.mxu0
    %1290 = vmatprep.subr.mxu0 0.0
    %v1291 = vand.u32 %v968, 4294901760
    %1292 = vmatpush1.msra.mxu0 %v1291
    %1293 = vmatprep.subr.mxu0 0.0
    %1294 = vmatpush1.msra.mxu0 0.0
    %1295 = vmatprep.subr.mxu0 0.0
    %1296 = vmatpush1.msra.mxu0 0.0
    %1297 = vmatprep.subr.mxu0 0.0
    %1298 = vmatpush1.msra.mxu0 0.0
    %1299 = vmatprep.subr.mxu0 0.0
    %1300 = vmatpush1.msra.mxu0 0.0
    %1301 = vmatprep.subr.mxu0 0.0
    %1302 = vmatpush1.msra.mxu0 0.0
    %1303 = vmatprep.subr.mxu0 0.0
    %1304 = vmatpush1.msra.mxu0 0.0
    %1305 = vmatprep.subr.mxu0 0.0
    %1306 = vmatpush1.msra.mxu0 0.0
    %1307 = vmatprep.subr.mxu0 0.0
    %1308 = vmatpush1.msra.mxu0 0.0
    %1309 = vmatprep.subr.mxu0 0.0
    %1310 = vmatpush1.msra.mxu0 0.0
    %1311 = vmatprep.subr.mxu0 0.0
    %1312 = vmatpush1.msra.mxu0 0.0
    %1313 = vmatprep.subr.mxu0 0.0
    %1314 = vmatpush1.msra.mxu0 0.0
    %1315 = vmatprep.subr.mxu0 0.0
    %1316 = vmatpush1.msra.mxu0 0.0
    %1317 = vmatprep.subr.mxu0 0.0
    %1318 = vmatpush1.msra.mxu0 0.0
    %1319 = vmatprep.subr.mxu0 0.0
    %1320 = vmatpush1.msra.mxu0 0.0
    %1321 = vmatprep.subr.mxu0 0.0
    %1322 = vmatpush1.msra.mxu0 0.0
    %1323 = vmatprep.subr.mxu0 0.0
    %1324 = vmatpush1.msra.mxu0 0.0
    %1325 = vmatprep.subr.mxu0 0.0
    %1326 = vmatpush1.msra.mxu0 0.0
    %1327 = vmatprep.subr.mxu0 0.0
    %1328 = vmatpush1.msra.mxu0 0.0
    %1329 = vmatprep.subr.mxu0 0.0
    %1330 = vmatpush1.msra.mxu0 0.0
    %1331 = vmatprep.subr.mxu0 0.0
    %1332 = vmatpush1.msra.mxu0 0.0
    %1333 = vmatprep.subr.mxu0 0.0
    %1334 = vmatpush1.msra.mxu0 0.0
    %1335 = vmatprep.subr.mxu0 0.0
    %1336 = vmatpush1.msra.mxu0 0.0
    %1337 = vmatprep.subr.mxu0 0.0
    %1338 = vmatpush1.msra.mxu0 0.0
    %1339 = vmatprep.subr.mxu0 0.0
    %1340 = vmatpush1.msra.mxu0 0.0
    %1341 = vmatprep.subr.mxu0 0.0
    %1342 = vmatpush1.msra.mxu0 0.0
    %1343 = vmatprep.subr.mxu0 0.0
    %1344 = vmatpush1.msra.mxu0 0.0
    %1345 = vmatprep.subr.mxu0 0.0
    %1346 = vmatpush1.msra.mxu0 0.0
    %1347 = vmatprep.subr.mxu0 0.0
    %1348 = vmatpush1.msra.mxu0 0.0
    %1349 = vmatprep.subr.mxu0 0.0
    %1350 = vmatpush1.msra.mxu0 0.0
    %1351 = vmatprep.subr.mxu0 0.0
    %1352 = vmatpush1.msra.mxu0 0.0
    %1353 = vmatprep.subr.mxu0 0.0
    %1354 = vmatpush1.msra.mxu0 0.0
    %1355 = vmatprep.mubr.f32.mxu0 0.0
    %v1356 = vand.u32 %v984, 4294901760
    %v1357 = vsub.f32 %v984, %v1356
    %v1358 = vand.u32 %v1357, 4294901760
    %1359 = vmatmul.mubr.f32.gmra.mrb[0].mxu0 %v1358
    %v1360 = vpop.f32.mrb[0].mxu0
    %v1361 = vadd.f32 %v1266, %v1360
    %v1362 = vpop.f32.mrb[0].mxu0
    %1363 = vmatprep.mubr.f32.mxu0 0.0
    %v1364 = vand.u32 %v987, 4294901760
    %v1365 = vsub.f32 %v987, %v1364
    %v1366 = vand.u32 %v1365, 4294901760
    %1367 = vmatmul.mubr.f32.gmra.mrb[0].mxu0 %v1366
    %v1368 = vpop.f32.mrb[0].mxu0
    %v1369 = vadd.f32 %v1273, %v1368
    %v1370 = vpop.f32.mrb[0].mxu0
    %1371 = vmatprep.mubr.f32.mxu0 0.0
    %v1372 = vand.u32 %v990, 4294901760
    %v1373 = vsub.f32 %v990, %v1372
    %v1374 = vand.u32 %v1373, 4294901760
    %1375 = vmatmul.mubr.f32.gmra.mrb[0].mxu0 %v1374
    %v1376 = vpop.f32.mrb[0].mxu0
    %v1377 = vadd.f32 %v1280, %v1376
    %v1378 = vpop.f32.mrb[0].mxu0
    %1379 = vmatprep.mubr.f32.mxu0 0.0
    %v1380 = vand.u32 %v993, 4294901760
    %v1381 = vsub.f32 %v993, %v1380
    %v1382 = vand.u32 %v1381, 4294901760
    %1383 = vmatmul.mubr.f32.gmra.mrb[0].mxu0 %v1382
    %v1384 = vpop.f32.mrb[0].mxu0
    %v1385 = vadd.f32 %v1287, %v1384
    %v1386 = vpop.f32.mrb[0].mxu0
    %1387 = vdwg.mxu0
    %1388 = vmatprep.subr.mxu0 0.0
    %v1389 = vand.u32 %v968, 4294901760
    %v1390 = vsub.f32 %v968, %v1389
    %v1391 = vand.u32 %v1390, 4294901760
    %1392 = vmatpush1.msra.mxu0 %v1391
    %1393 = vmatprep.subr.mxu0 0.0
    %1394 = vmatpush1.msra.mxu0 0.0
    %1395 = vmatprep.subr.mxu0 0.0
    %1396 = vmatpush1.msra.mxu0 0.0
    %1397 = vmatprep.subr.mxu0 0.0
    %1398 = vmatpush1.msra.mxu0 0.0
    %1399 = vmatprep.subr.mxu0 0.0
    %1400 = vmatpush1.msra.mxu0 0.0
    %1401 = vmatprep.subr.mxu0 0.0
    %1402 = vmatpush1.msra.mxu0 0.0
    %1403 = vmatprep.subr.mxu0 0.0
    %1404 = vmatpush1.msra.mxu0 0.0
    %1405 = vmatprep.subr.mxu0 0.0
    %1406 = vmatpush1.msra.mxu0 0.0
    %1407 = vmatprep.subr.mxu0 0.0
    %1408 = vmatpush1.msra.mxu0 0.0
    %1409 = vmatprep.subr.mxu0 0.0
    %1410 = vmatpush1.msra.mxu0 0.0
    %1411 = vmatprep.subr.mxu0 0.0
    %1412 = vmatpush1.msra.mxu0 0.0
    %1413 = vmatprep.subr.mxu0 0.0
    %1414 = vmatpush1.msra.mxu0 0.0
    %1415 = vmatprep.subr.mxu0 0.0
    %1416 = vmatpush1.msra.mxu0 0.0
    %1417 = vmatprep.subr.mxu0 0.0
    %1418 = vmatpush1.msra.mxu0 0.0
    %1419 = vmatprep.subr.mxu0 0.0
    %1420 = vmatpush1.msra.mxu0 0.0
    %1421 = vmatprep.subr.mxu0 0.0
    %1422 = vmatpush1.msra.mxu0 0.0
    %1423 = vmatprep.subr.mxu0 0.0
    %1424 = vmatpush1.msra.mxu0 0.0
    %1425 = vmatprep.subr.mxu0 0.0
    %1426 = vmatpush1.msra.mxu0 0.0
    %1427 = vmatprep.subr.mxu0 0.0
    %1428 = vmatpush1.msra.mxu0 0.0
    %1429 = vmatprep.subr.mxu0 0.0
    %1430 = vmatpush1.msra.mxu0 0.0
    %1431 = vmatprep.subr.mxu0 0.0
    %1432 = vmatpush1.msra.mxu0 0.0
    %1433 = vmatprep.subr.mxu0 0.0
    %1434 = vmatpush1.msra.mxu0 0.0
    %1435 = vmatprep.subr.mxu0 0.0
    %1436 = vmatpush1.msra.mxu0 0.0
    %1437 = vmatprep.subr.mxu0 0.0
    %1438 = vmatpush1.msra.mxu0 0.0
    %1439 = vmatprep.subr.mxu0 0.0
    %1440 = vmatpush1.msra.mxu0 0.0
    %1441 = vmatprep.subr.mxu0 0.0
    %1442 = vmatpush1.msra.mxu0 0.0
    %1443 = vmatprep.subr.mxu0 0.0
    %1444 = vmatpush1.msra.mxu0 0.0
    %1445 = vmatprep.subr.mxu0 0.0
    %1446 = vmatpush1.msra.mxu0 0.0
    %1447 = vmatprep.subr.mxu0 0.0
    %1448 = vmatpush1.msra.mxu0 0.0
    %1449 = vmatprep.subr.mxu0 0.0
    %1450 = vmatpush1.msra.mxu0 0.0
    %1451 = vmatprep.subr.mxu0 0.0
    %1452 = vmatpush1.msra.mxu0 0.0
    %1453 = vmatprep.subr.mxu0 0.0
    %1454 = vmatpush1.msra.mxu0 0.0
    %1455 = vmatprep.mubr.f32.mxu0 0.0
    %v1456 = vand.u32 %v984, 4294901760
    %1457 = vmatmul.mubr.f32.gmra.mrb[0].mxu0 %v1456
    %v1458 = vpop.f32.mrb[0].mxu0
    %v1459 = vadd.f32 %v1361, %v1458
    %v1460 = vpop.f32.mrb[0].mxu0
    %1461 = vmatprep.mubr.f32.mxu0 0.0
    %v1462 = vand.u32 %v987, 4294901760
    %1463 = vmatmul.mubr.f32.gmra.mrb[0].mxu0 %v1462
    %v1464 = vpop.f32.mrb[0].mxu0
    %v1465 = vadd.f32 %v1369, %v1464
    %v1466 = vpop.f32.mrb[0].mxu0
    %1467 = vmatprep.mubr.f32.mxu0 0.0
    %v1468 = vand.u32 %v990, 4294901760
    %1469 = vmatmul.mubr.f32.gmra.mrb[0].mxu0 %v1468
    %v1470 = vpop.f32.mrb[0].mxu0
    %v1471 = vadd.f32 %v1377, %v1470
    %v1472 = vpop.f32.mrb[0].mxu0
    %1473 = vmatprep.mubr.f32.mxu0 0.0
    %v1474 = vand.u32 %v993, 4294901760
    %1475 = vmatmul.mubr.f32.gmra.mrb[0].mxu0 %v1474
    %v1476 = vpop.f32.mrb[0].mxu0
    %v1477 = vadd.f32 %v1385, %v1476
    %v1478 = vpop.f32.mrb[0].mxu0
    %1479 = vdwg.mxu0
    %1480 = vmatprep.subr.mxu0 0.0
    %v1481 = vand.u32 %v968, 4294901760
    %1482 = vmatpush1.msra.mxu0 %v1481
    %1483 = vmatprep.subr.mxu0 0.0
    %1484 = vmatpush1.msra.mxu0 0.0
    %1485 = vmatprep.subr.mxu0 0.0
    %1486 = vmatpush1.msra.mxu0 0.0
    %1487 = vmatprep.subr.mxu0 0.0
    %1488 = vmatpush1.msra.mxu0 0.0
    %1489 = vmatprep.subr.mxu0 0.0
    %1490 = vmatpush1.msra.mxu0 0.0
    %1491 = vmatprep.subr.mxu0 0.0
    %1492 = vmatpush1.msra.mxu0 0.0
    %1493 = vmatprep.subr.mxu0 0.0
    %1494 = vmatpush1.msra.mxu0 0.0
    %1495 = vmatprep.subr.mxu0 0.0
    %1496 = vmatpush1.msra.mxu0 0.0
    %1497 = vmatprep.subr.mxu0 0.0
    %1498 = vmatpush1.msra.mxu0 0.0
    %1499 = vmatprep.subr.mxu0 0.0
    %1500 = vmatpush1.msra.mxu0 0.0
    %1501 = vmatprep.subr.mxu0 0.0
    %1502 = vmatpush1.msra.mxu0 0.0
    %1503 = vmatprep.subr.mxu0 0.0
    %1504 = vmatpush1.msra.mxu0 0.0
    %1505 = vmatprep.subr.mxu0 0.0
    %1506 = vmatpush1.msra.mxu0 0.0
    %1507 = vmatprep.subr.mxu0 0.0
    %1508 = vmatpush1.msra.mxu0 0.0
    %1509 = vmatprep.subr.mxu0 0.0
    %1510 = vmatpush1.msra.mxu0 0.0
    %1511 = vmatprep.subr.mxu0 0.0
    %1512 = vmatpush1.msra.mxu0 0.0
    %1513 = vmatprep.subr.mxu0 0.0
    %1514 = vmatpush1.msra.mxu0 0.0
    %1515 = vmatprep.subr.mxu0 0.0
    %1516 = vmatpush1.msra.mxu0 0.0
    %1517 = vmatprep.subr.mxu0 0.0
    %1518 = vmatpush1.msra.mxu0 0.0
    %1519 = vmatprep.subr.mxu0 0.0
    %1520 = vmatpush1.msra.mxu0 0.0
    %1521 = vmatprep.subr.mxu0 0.0
    %1522 = vmatpush1.msra.mxu0 0.0
    %1523 = vmatprep.subr.mxu0 0.0
    %1524 = vmatpush1.msra.mxu0 0.0
    %1525 = vmatprep.subr.mxu0 0.0
    %1526 = vmatpush1.msra.mxu0 0.0
    %1527 = vmatprep.subr.mxu0 0.0
    %1528 = vmatpush1.msra.mxu0 0.0
    %1529 = vmatprep.subr.mxu0 0.0
    %1530 = vmatpush1.msra.mxu0 0.0
    %1531 = vmatprep.subr.mxu0 0.0
    %1532 = vmatpush1.msra.mxu0 0.0
    %1533 = vmatprep.subr.mxu0 0.0
    %1534 = vmatpush1.msra.mxu0 0.0
    %1535 = vmatprep.subr.mxu0 0.0
    %1536 = vmatpush1.msra.mxu0 0.0
    %1537 = vmatprep.subr.mxu0 0.0
    %1538 = vmatpush1.msra.mxu0 0.0
    %1539 = vmatprep.subr.mxu0 0.0
    %1540 = vmatpush1.msra.mxu0 0.0
    %1541 = vmatprep.subr.mxu0 0.0
    %1542 = vmatpush1.msra.mxu0 0.0
    %1543 = vmatprep.subr.mxu0 0.0
    %1544 = vmatpush1.msra.mxu0 0.0
    %1545 = vmatprep.mubr.f32.mxu0 0.0
    %v1546 = vand.u32 %v984, 4294901760
    %1547 = vmatmul.mubr.f32.gmra.mrb[0].mxu0 %v1546
    %v1548 = vpop.f32.mrb[0].mxu0
    %v1549 = vadd.f32 %v1459, %v1548
    %v1550 = vpop.f32.mrb[0].mxu0
    %1551 = vmatprep.mubr.f32.mxu0 0.0
    %v1552 = vand.u32 %v987, 4294901760
    %1553 = vmatmul.mubr.f32.gmra.mrb[0].mxu0 %v1552
    %v1554 = vpop.f32.mrb[0].mxu0
    %v1555 = vadd.f32 %v1465, %v1554
    %v1556 = vpop.f32.mrb[0].mxu0
    %1557 = vmatprep.mubr.f32.mxu0 0.0
    %v1558 = vand.u32 %v990, 4294901760
    %1559 = vmatmul.mubr.f32.gmra.mrb[0].mxu0 %v1558
    %v1560 = vpop.f32.mrb[0].mxu0
    %v1561 = vadd.f32 %v1471, %v1560
    %v1562 = vpop.f32.mrb[0].mxu0
    %1563 = vmatprep.mubr.f32.mxu0 0.0
    %v1564 = vand.u32 %v993, 4294901760
    %1565 = vmatmul.mubr.f32.gmra.mrb[0].mxu0 %v1564
    %v1566 = vpop.f32.mrb[0].mxu0
    %v1567 = vadd.f32 %v1477, %v1566
    %v1568 = vpop.f32.mrb[0].mxu0
    %1569 = vdwg.mxu0
    %v1570 = vld [vmem:[%s3] sm:$0xff]
    %v1571 = vld [vmem:[%s3 + $0x8] sm:$0xff]
    %v1572 = vld [vmem:[%s3 + $0x10] sm:$0xff]
    %v1573 = vld [vmem:[%s3 + $0x18] sm:$0x1]
    %vm1574 = vcmask 203776
    %v1576 = vsel %vm1574, %v1555, 0
    %vm1578 = vcmask 1040384
    %v1580 = vsel %vm1578, %v1573, 0
    %1582 = vmatprep.subr.mxu0 0.0
    %v1583 = vand.u32 %v1570, 4294901760
    %1584 = vmatpush1.msra.mxu0 %v1583
    %1585 = vmatprep.subr.mxu0 0.0
    %v1586 = vand.u32 %v1571, 4294901760
    %1587 = vmatpush1.msra.mxu0 %v1586
    %1588 = vmatprep.subr.mxu0 0.0
    %v1589 = vand.u32 %v1572, 4294901760
    %1590 = vmatpush1.msra.mxu0 %v1589
    %1591 = vmatprep.subr.mxu0 0.0
    %v1592 = vand.u32 %v1580, 4294901760
    %1593 = vmatpush1.msra.mxu0 %v1592
    %1594 = vmatprep.subr.mxu0 0.0
    %1595 = vmatpush1.msra.mxu0 0.0
    %1596 = vmatprep.subr.mxu0 0.0
    %1597 = vmatpush1.msra.mxu0 0.0
    %1598 = vmatprep.subr.mxu0 0.0
    %1599 = vmatpush1.msra.mxu0 0.0
    %1600 = vmatprep.subr.mxu0 0.0
    %1601 = vmatpush1.msra.mxu0 0.0
    %1602 = vmatprep.subr.mxu0 0.0
    %1603 = vmatpush1.msra.mxu0 0.0
    %1604 = vmatprep.subr.mxu0 0.0
    %1605 = vmatpush1.msra.mxu0 0.0
    %1606 = vmatprep.subr.mxu0 0.0
    %1607 = vmatpush1.msra.mxu0 0.0
    %1608 = vmatprep.subr.mxu0 0.0
    %1609 = vmatpush1.msra.mxu0 0.0
    %1610 = vmatprep.subr.mxu0 0.0
    %1611 = vmatpush1.msra.mxu0 0.0
    %1612 = vmatprep.subr.mxu0 0.0
    %1613 = vmatpush1.msra.mxu0 0.0
    %1614 = vmatprep.subr.mxu0 0.0
    %1615 = vmatpush1.msra.mxu0 0.0
    %1616 = vmatprep.subr.mxu0 0.0
    %1617 = vmatpush1.msra.mxu0 0.0
    %1618 = vmatprep.subr.mxu0 0.0
    %1619 = vmatpush1.msra.mxu0 0.0
    %1620 = vmatprep.subr.mxu0 0.0
    %1621 = vmatpush1.msra.mxu0 0.0
    %1622 = vmatprep.subr.mxu0 0.0
    %1623 = vmatpush1.msra.mxu0 0.0
    %1624 = vmatprep.subr.mxu0 0.0
    %1625 = vmatpush1.msra.mxu0 0.0
    %1626 = vmatprep.subr.mxu0 0.0
    %1627 = vmatpush1.msra.mxu0 0.0
    %1628 = vmatprep.subr.mxu0 0.0
    %1629 = vmatpush1.msra.mxu0 0.0
    %1630 = vmatprep.subr.mxu0 0.0
    %1631 = vmatpush1.msra.mxu0 0.0
    %1632 = vmatprep.subr.mxu0 0.0
    %1633 = vmatpush1.msra.mxu0 0.0
    %1634 = vmatprep.subr.mxu0 0.0
    %1635 = vmatpush1.msra.mxu0 0.0
    %1636 = vmatprep.subr.mxu0 0.0
    %1637 = vmatpush1.msra.mxu0 0.0
    %1638 = vmatprep.subr.mxu0 0.0
    %1639 = vmatpush1.msra.mxu0 0.0
    %1640 = vmatprep.subr.mxu0 0.0
    %1641 = vmatpush1.msra.mxu0 0.0
    %1642 = vmatprep.subr.mxu0 0.0
    %1643 = vmatpush1.msra.mxu0 0.0
    %1644 = vmatprep.subr.mxu0 0.0
    %1645 = vmatpush1.msra.mxu0 0.0
    %1646 = vmatprep.subr.mxu0 0.0
    %1647 = vmatpush1.msra.mxu0 0.0
    %1648 = vmatprep.subr.mxu0 0.0
    %1649 = vmatpush1.msra.mxu0 0.0
    %1650 = vmatprep.mubr.f32.mxu0 0.0
    %v1651 = vand.u32 %v1576, 4294901760
    %v1652 = vsub.f32 %v1576, %v1651
    %v1653 = vand.u32 %v1652, 4294901760
    %v1654 = vsub.f32 %v1652, %v1653
    %v1655 = vand.u32 %v1654, 4294901760
    %1656 = vmatmul.mubr.f32.gmra.mrb[0].mxu0 %v1655
    %v1657 = vpop.f32.mrb[0].mxu0
    %v1658 = vadd.f32 0.0, %v1657
    %v1659 = vpop.f32.mrb[0].mxu0
    %1660 = vdwg.mxu0
    %1661 = vmatprep.subr.mxu0 0.0
    %v1662 = vand.u32 %v1570, 4294901760
    %v1663 = vsub.f32 %v1570, %v1662
    %v1664 = vand.u32 %v1663, 4294901760
    %v1665 = vsub.f32 %v1663, %v1664
    %v1666 = vand.u32 %v1665, 4294901760
    %1667 = vmatpush1.msra.mxu0 %v1666
    %1668 = vmatprep.subr.mxu0 0.0
    %v1669 = vand.u32 %v1571, 4294901760
    %v1670 = vsub.f32 %v1571, %v1669
    %v1671 = vand.u32 %v1670, 4294901760
    %v1672 = vsub.f32 %v1670, %v1671
    %v1673 = vand.u32 %v1672, 4294901760
    %1674 = vmatpush1.msra.mxu0 %v1673
    %1675 = vmatprep.subr.mxu0 0.0
    %v1676 = vand.u32 %v1572, 4294901760
    %v1677 = vsub.f32 %v1572, %v1676
    %v1678 = vand.u32 %v1677, 4294901760
    %v1679 = vsub.f32 %v1677, %v1678
    %v1680 = vand.u32 %v1679, 4294901760
    %1681 = vmatpush1.msra.mxu0 %v1680
    %1682 = vmatprep.subr.mxu0 0.0
    %v1683 = vand.u32 %v1580, 4294901760
    %v1684 = vsub.f32 %v1580, %v1683
    %v1685 = vand.u32 %v1684, 4294901760
    %v1686 = vsub.f32 %v1684, %v1685
    %v1687 = vand.u32 %v1686, 4294901760
    %1688 = vmatpush1.msra.mxu0 %v1687
    %1689 = vmatprep.subr.mxu0 0.0
    %1690 = vmatpush1.msra.mxu0 0.0
    %1691 = vmatprep.subr.mxu0 0.0
    %1692 = vmatpush1.msra.mxu0 0.0
    %1693 = vmatprep.subr.mxu0 0.0
    %1694 = vmatpush1.msra.mxu0 0.0
    %1695 = vmatprep.subr.mxu0 0.0
    %1696 = vmatpush1.msra.mxu0 0.0
    %1697 = vmatprep.subr.mxu0 0.0
    %1698 = vmatpush1.msra.mxu0 0.0
    %1699 = vmatprep.subr.mxu0 0.0
    %1700 = vmatpush1.msra.mxu0 0.0
    %1701 = vmatprep.subr.mxu0 0.0
    %1702 = vmatpush1.msra.mxu0 0.0
    %1703 = vmatprep.subr.mxu0 0.0
    %1704 = vmatpush1.msra.mxu0 0.0
    %1705 = vmatprep.subr.mxu0 0.0
    %1706 = vmatpush1.msra.mxu0 0.0
    %1707 = vmatprep.subr.mxu0 0.0
    %1708 = vmatpush1.msra.mxu0 0.0
    %1709 = vmatprep.subr.mxu0 0.0
    %1710 = vmatpush1.msra.mxu0 0.0
    %1711 = vmatprep.subr.mxu0 0.0
    %1712 = vmatpush1.msra.mxu0 0.0
    %1713 = vmatprep.subr.mxu0 0.0
    %1714 = vmatpush1.msra.mxu0 0.0
    %1715 = vmatprep.subr.mxu0 0.0
    %1716 = vmatpush1.msra.mxu0 0.0
    %1717 = vmatprep.subr.mxu0 0.0
    %1718 = vmatpush1.msra.mxu0 0.0
    %1719 = vmatprep.subr.mxu0 0.0
    %1720 = vmatpush1.msra.mxu0 0.0
    %1721 = vmatprep.subr.mxu0 0.0
    %1722 = vmatpush1.msra.mxu0 0.0
    %1723 = vmatprep.subr.mxu0 0.0
    %1724 = vmatpush1.msra.mxu0 0.0
    %1725 = vmatprep.subr.mxu0 0.0
    %1726 = vmatpush1.msra.mxu0 0.0
    %1727 = vmatprep.subr.mxu0 0.0
    %1728 = vmatpush1.msra.mxu0 0.0
    %1729 = vmatprep.subr.mxu0 0.0
    %1730 = vmatpush1.msra.mxu0 0.0
    %1731 = vmatprep.subr.mxu0 0.0
    %1732 = vmatpush1.msra.mxu0 0.0
    %1733 = vmatprep.subr.mxu0 0.0
    %1734 = vmatpush1.msra.mxu0 0.0
    %1735 = vmatprep.subr.mxu0 0.0
    %1736 = vmatpush1.msra.mxu0 0.0
    %1737 = vmatprep.subr.mxu0 0.0
    %1738 = vmatpush1.msra.mxu0 0.0
    %1739 = vmatprep.subr.mxu0 0.0
    %1740 = vmatpush1.msra.mxu0 0.0
    %1741 = vmatprep.subr.mxu0 0.0
    %1742 = vmatpush1.msra.mxu0 0.0
    %1743 = vmatprep.subr.mxu0 0.0
    %1744 = vmatpush1.msra.mxu0 0.0
    %1745 = vmatprep.mubr.f32.mxu0 0.0
    %v1746 = vand.u32 %v1576, 4294901760
    %1747 = vmatmul.mubr.f32.gmra.mrb[0].mxu0 %v1746
    %v1748 = vpop.f32.mrb[0].mxu0
    %v1749 = vadd.f32 %v1658, %v1748
    %v1750 = vpop.f32.mrb[0].mxu0
    %1751 = vdwg.mxu0
    %1752 = vmatprep.subr.mxu0 0.0
    %v1753 = vand.u32 %v1570, 4294901760
    %v1754 = vsub.f32 %v1570, %v1753
    %1755 = vmatpush1.msra.mxu0 %v1754
    %1756 = vmatprep.subr.mxu0 0.0
    %v1757 = vand.u32 %v1571, 4294901760
    %v1758 = vsub.f32 %v1571, %v1757
    %1759 = vmatpush1.msra.mxu0 %v1758
    %1760 = vmatprep.subr.mxu0 0.0
    %v1761 = vand.u32 %v1572, 4294901760
    %v1762 = vsub.f32 %v1572, %v1761
    %1763 = vmatpush1.msra.mxu0 %v1762
    %1764 = vmatprep.subr.mxu0 0.0
    %v1765 = vand.u32 %v1580, 4294901760
    %v1766 = vsub.f32 %v1580, %v1765
    %1767 = vmatpush1.msra.mxu0 %v1766
    %1768 = vmatprep.subr.mxu0 0.0
    %1769 = vmatpush1.msra.mxu0 0.0
    %1770 = vmatprep.subr.mxu0 0.0
    %1771 = vmatpush1.msra.mxu0 0.0
    %1772 = vmatprep.subr.mxu0 0.0
    %1773 = vmatpush1.msra.mxu0 0.0
    %1774 = vmatprep.subr.mxu0 0.0
    %1775 = vmatpush1.msra.mxu0 0.0
    %1776 = vmatprep.subr.mxu0 0.0
    %1777 = vmatpush1.msra.mxu0 0.0
    %1778 = vmatprep.subr.mxu0 0.0
    %1779 = vmatpush1.msra.mxu0 0.0
    %1780 = vmatprep.subr.mxu0 0.0
    %1781 = vmatpush1.msra.mxu0 0.0
    %1782 = vmatprep.subr.mxu0 0.0
    %1783 = vmatpush1.msra.mxu0 0.0
    %1784 = vmatprep.subr.mxu0 0.0
    %1785 = vmatpush1.msra.mxu0 0.0
    %1786 = vmatprep.subr.mxu0 0.0
    %1787 = vmatpush1.msra.mxu0 0.0
    %1788 = vmatprep.subr.mxu0 0.0
    %1789 = vmatpush1.msra.mxu0 0.0
    %1790 = vmatprep.subr.mxu0 0.0
    %1791 = vmatpush1.msra.mxu0 0.0
    %1792 = vmatprep.subr.mxu0 0.0
    %1793 = vmatpush1.msra.mxu0 0.0
    %1794 = vmatprep.subr.mxu0 0.0
    %1795 = vmatpush1.msra.mxu0 0.0
    %1796 = vmatprep.subr.mxu0 0.0
    %1797 = vmatpush1.msra.mxu0 0.0
    %1798 = vmatprep.subr.mxu0 0.0
    %1799 = vmatpush1.msra.mxu0 0.0
    %1800 = vmatprep.subr.mxu0 0.0
    %1801 = vmatpush1.msra.mxu0 0.0
    %1802 = vmatprep.subr.mxu0 0.0
    %1803 = vmatpush1.msra.mxu0 0.0
    %1804 = vmatprep.subr.mxu0 0.0
    %1805 = vmatpush1.msra.mxu0 0.0
    %1806 = vmatprep.subr.mxu0 0.0
    %1807 = vmatpush1.msra.mxu0 0.0
    %1808 = vmatprep.subr.mxu0 0.0
    %1809 = vmatpush1.msra.mxu0 0.0
    %1810 = vmatprep.subr.mxu0 0.0
    %1811 = vmatpush1.msra.mxu0 0.0
    %1812 = vmatprep.subr.mxu0 0.0
    %1813 = vmatpush1.msra.mxu0 0.0
    %1814 = vmatprep.subr.mxu0 0.0
    %1815 = vmatpush1.msra.mxu0 0.0
    %1816 = vmatprep.subr.mxu0 0.0
    %1817 = vmatpush1.msra.mxu0 0.0
    %1818 = vmatprep.subr.mxu0 0.0
    %1819 = vmatpush1.msra.mxu0 0.0
    %1820 = vmatprep.subr.mxu0 0.0
    %1821 = vmatpush1.msra.mxu0 0.0
    %1822 = vmatprep.subr.mxu0 0.0
    %1823 = vmatpush1.msra.mxu0 0.0
    %1824 = vmatprep.mubr.f32.mxu0 0.0
    %v1825 = vand.u32 %v1576, 4294901760
    %v1826 = vsub.f32 %v1576, %v1825
    %1827 = vmatmul.mubr.f32.gmra.mrb[0].mxu0 %v1826
    %v1828 = vpop.f32.mrb[0].mxu0
    %v1829 = vadd.f32 %v1749, %v1828
    %v1830 = vpop.f32.mrb[0].mxu0
    %1831 = vdwg.mxu0
    %1832 = vmatprep.subr.mxu0 0.0
    %v1833 = vand.u32 %v1570, 4294901760
    %1834 = vmatpush1.msra.mxu0 %v1833
    %1835 = vmatprep.subr.mxu0 0.0
    %v1836 = vand.u32 %v1571, 4294901760
    %1837 = vmatpush1.msra.mxu0 %v1836
    %1838 = vmatprep.subr.mxu0 0.0
    %v1839 = vand.u32 %v1572, 4294901760
    %1840 = vmatpush1.msra.mxu0 %v1839
    %1841 = vmatprep.subr.mxu0 0.0
    %v1842 = vand.u32 %v1580, 4294901760
    %1843 = vmatpush1.msra.mxu0 %v1842
    %1844 = vmatprep.subr.mxu0 0.0
    %1845 = vmatpush1.msra.mxu0 0.0
    %1846 = vmatprep.subr.mxu0 0.0
    %1847 = vmatpush1.msra.mxu0 0.0
    %1848 = vmatprep.subr.mxu0 0.0
    %1849 = vmatpush1.msra.mxu0 0.0
    %1850 = vmatprep.subr.mxu0 0.0
    %1851 = vmatpush1.msra.mxu0 0.0
    %1852 = vmatprep.subr.mxu0 0.0
    %1853 = vmatpush1.msra.mxu0 0.0
    %1854 = vmatprep.subr.mxu0 0.0
    %1855 = vmatpush1.msra.mxu0 0.0
    %1856 = vmatprep.subr.mxu0 0.0
    %1857 = vmatpush1.msra.mxu0 0.0
    %1858 = vmatprep.subr.mxu0 0.0
    %1859 = vmatpush1.msra.mxu0 0.0
    %1860 = vmatprep.subr.mxu0 0.0
    %1861 = vmatpush1.msra.mxu0 0.0
    %1862 = vmatprep.subr.mxu0 0.0
    %1863 = vmatpush1.msra.mxu0 0.0
    %1864 = vmatprep.subr.mxu0 0.0
    %1865 = vmatpush1.msra.mxu0 0.0
    %1866 = vmatprep.subr.mxu0 0.0
    %1867 = vmatpush1.msra.mxu0 0.0
    %1868 = vmatprep.subr.mxu0 0.0
    %1869 = vmatpush1.msra.mxu0 0.0
    %1870 = vmatprep.subr.mxu0 0.0
    %1871 = vmatpush1.msra.mxu0 0.0
    %1872 = vmatprep.subr.mxu0 0.0
    %1873 = vmatpush1.msra.mxu0 0.0
    %1874 = vmatprep.subr.mxu0 0.0
    %1875 = vmatpush1.msra.mxu0 0.0
    %1876 = vmatprep.subr.mxu0 0.0
    %1877 = vmatpush1.msra.mxu0 0.0
    %1878 = vmatprep.subr.mxu0 0.0
    %1879 = vmatpush1.msra.mxu0 0.0
    %1880 = vmatprep.subr.mxu0 0.0
    %1881 = vmatpush1.msra.mxu0 0.0
    %1882 = vmatprep.subr.mxu0 0.0
    %1883 = vmatpush1.msra.mxu0 0.0
    %1884 = vmatprep.subr.mxu0 0.0
    %1885 = vmatpush1.msra.mxu0 0.0
    %1886 = vmatprep.subr.mxu0 0.0
    %1887 = vmatpush1.msra.mxu0 0.0
    %1888 = vmatprep.subr.mxu0 0.0
    %1889 = vmatpush1.msra.mxu0 0.0
    %1890 = vmatprep.subr.mxu0 0.0
    %1891 = vmatpush1.msra.mxu0 0.0
    %1892 = vmatprep.subr.mxu0 0.0
    %1893 = vmatpush1.msra.mxu0 0.0
    %1894 = vmatprep.subr.mxu0 0.0
    %1895 = vmatpush1.msra.mxu0 0.0
    %1896 = vmatprep.subr.mxu0 0.0
    %1897 = vmatpush1.msra.mxu0 0.0
    %1898 = vmatprep.subr.mxu0 0.0
    %1899 = vmatpush1.msra.mxu0 0.0
    %1900 = vmatprep.mubr.f32.mxu0 0.0
    %v1901 = vand.u32 %v1576, 4294901760
    %v1902 = vsub.f32 %v1576, %v1901
    %v1903 = vand.u32 %v1902, 4294901760
    %1904 = vmatmul.mubr.f32.gmra.mrb[0].mxu0 %v1903
    %v1905 = vpop.f32.mrb[0].mxu0
    %v1906 = vadd.f32 %v1829, %v1905
    %v1907 = vpop.f32.mrb[0].mxu0
    %1908 = vdwg.mxu0
    %1909 = vmatprep.subr.mxu0 0.0
    %v1910 = vand.u32 %v1570, 4294901760
    %v1911 = vsub.f32 %v1570, %v1910
    %v1912 = vand.u32 %v1911, 4294901760
    %1913 = vmatpush1.msra.mxu0 %v1912
    %1914 = vmatprep.subr.mxu0 0.0
    %v1915 = vand.u32 %v1571, 4294901760
    %v1916 = vsub.f32 %v1571, %v1915
    %v1917 = vand.u32 %v1916, 4294901760
    %1918 = vmatpush1.msra.mxu0 %v1917
    %1919 = vmatprep.subr.mxu0 0.0
    %v1920 = vand.u32 %v1572, 4294901760
    %v1921 = vsub.f32 %v1572, %v1920
    %v1922 = vand.u32 %v1921, 4294901760
    %1923 = vmatpush1.msra.mxu0 %v1922
    %1924 = vmatprep.subr.mxu0 0.0
    %v1925 = vand.u32 %v1580, 4294901760
    %v1926 = vsub.f32 %v1580, %v1925
    %v1927 = vand.u32 %v1926, 4294901760
    %1928 = vmatpush1.msra.mxu0 %v1927
    %1929 = vmatprep.subr.mxu0 0.0
    %1930 = vmatpush1.msra.mxu0 0.0
    %1931 = vmatprep.subr.mxu0 0.0
    %1932 = vmatpush1.msra.mxu0 0.0
    %1933 = vmatprep.subr.mxu0 0.0
    %1934 = vmatpush1.msra.mxu0 0.0
    %1935 = vmatprep.subr.mxu0 0.0
    %1936 = vmatpush1.msra.mxu0 0.0
    %1937 = vmatprep.subr.mxu0 0.0
    %1938 = vmatpush1.msra.mxu0 0.0
    %1939 = vmatprep.subr.mxu0 0.0
    %1940 = vmatpush1.msra.mxu0 0.0
    %1941 = vmatprep.subr.mxu0 0.0
    %1942 = vmatpush1.msra.mxu0 0.0
    %1943 = vmatprep.subr.mxu0 0.0
    %1944 = vmatpush1.msra.mxu0 0.0
    %1945 = vmatprep.subr.mxu0 0.0
    %1946 = vmatpush1.msra.mxu0 0.0
    %1947 = vmatprep.subr.mxu0 0.0
    %1948 = vmatpush1.msra.mxu0 0.0
    %1949 = vmatprep.subr.mxu0 0.0
    %1950 = vmatpush1.msra.mxu0 0.0
    %1951 = vmatprep.subr.mxu0 0.0
    %1952 = vmatpush1.msra.mxu0 0.0
    %1953 = vmatprep.subr.mxu0 0.0
    %1954 = vmatpush1.msra.mxu0 0.0
    %1955 = vmatprep.subr.mxu0 0.0
    %1956 = vmatpush1.msra.mxu0 0.0
    %1957 = vmatprep.subr.mxu0 0.0
    %1958 = vmatpush1.msra.mxu0 0.0
    %1959 = vmatprep.subr.mxu0 0.0
    %1960 = vmatpush1.msra.mxu0 0.0
    %1961 = vmatprep.subr.mxu0 0.0
    %1962 = vmatpush1.msra.mxu0 0.0
    %1963 = vmatprep.subr.mxu0 0.0
    %1964 = vmatpush1.msra.mxu0 0.0
    %1965 = vmatprep.subr.mxu0 0.0
    %1966 = vmatpush1.msra.mxu0 0.0
    %1967 = vmatprep.subr.mxu0 0.0
    %1968 = vmatpush1.msra.mxu0 0.0
    %1969 = vmatprep.subr.mxu0 0.0
    %1970 = vmatpush1.msra.mxu0 0.0
    %1971 = vmatprep.subr.mxu0 0.0
    %1972 = vmatpush1.msra.mxu0 0.0
    %1973 = vmatprep.subr.mxu0 0.0
    %1974 = vmatpush1.msra.mxu0 0.0
    %1975 = vmatprep.subr.mxu0 0.0
    %1976 = vmatpush1.msra.mxu0 0.0
    %1977 = vmatprep.subr.mxu0 0.0
    %1978 = vmatpush1.msra.mxu0 0.0
    %1979 = vmatprep.subr.mxu0 0.0
    %1980 = vmatpush1.msra.mxu0 0.0
    %1981 = vmatprep.subr.mxu0 0.0
    %1982 = vmatpush1.msra.mxu0 0.0
    %1983 = vmatprep.subr.mxu0 0.0
    %1984 = vmatpush1.msra.mxu0 0.0
    %1985 = vmatprep.mubr.f32.mxu0 0.0
    %v1986 = vand.u32 %v1576, 4294901760
    %1987 = vmatmul.mubr.f32.gmra.mrb[0].mxu0 %v1986
    %v1988 = vpop.f32.mrb[0].mxu0
    %v1989 = vadd.f32 %v1906, %v1988
    %v1990 = vpop.f32.mrb[0].mxu0
    %1991 = vdwg.mxu0
    %1992 = vmatprep.subr.mxu0 0.0
    %v1993 = vand.u32 %v1570, 4294901760
    %1994 = vmatpush1.msra.mxu0 %v1993
    %1995 = vmatprep.subr.mxu0 0.0
    %v1996 = vand.u32 %v1571, 4294901760
    %1997 = vmatpush1.msra.mxu0 %v1996
    %1998 = vmatprep.subr.mxu0 0.0
    %v1999 = vand.u32 %v1572, 4294901760
    %2000 = vmatpush1.msra.mxu0 %v1999
    %2001 = vmatprep.subr.mxu0 0.0
    %v2002 = vand.u32 %v1580, 4294901760
    %2003 = vmatpush1.msra.mxu0 %v2002
    %2004 = vmatprep.subr.mxu0 0.0
    %2005 = vmatpush1.msra.mxu0 0.0
    %2006 = vmatprep.subr.mxu0 0.0
    %2007 = vmatpush1.msra.mxu0 0.0
    %2008 = vmatprep.subr.mxu0 0.0
    %2009 = vmatpush1.msra.mxu0 0.0
    %2010 = vmatprep.subr.mxu0 0.0
    %2011 = vmatpush1.msra.mxu0 0.0
    %2012 = vmatprep.subr.mxu0 0.0
    %2013 = vmatpush1.msra.mxu0 0.0
    %2014 = vmatprep.subr.mxu0 0.0
    %2015 = vmatpush1.msra.mxu0 0.0
    %2016 = vmatprep.subr.mxu0 0.0
    %2017 = vmatpush1.msra.mxu0 0.0
    %2018 = vmatprep.subr.mxu0 0.0
    %2019 = vmatpush1.msra.mxu0 0.0
    %2020 = vmatprep.subr.mxu0 0.0
    %2021 = vmatpush1.msra.mxu0 0.0
    %2022 = vmatprep.subr.mxu0 0.0
    %2023 = vmatpush1.msra.mxu0 0.0
    %2024 = vmatprep.subr.mxu0 0.0
    %2025 = vmatpush1.msra.mxu0 0.0
    %2026 = vmatprep.subr.mxu0 0.0
    %2027 = vmatpush1.msra.mxu0 0.0
    %2028 = vmatprep.subr.mxu0 0.0
    %2029 = vmatpush1.msra.mxu0 0.0
    %2030 = vmatprep.subr.mxu0 0.0
    %2031 = vmatpush1.msra.mxu0 0.0
    %2032 = vmatprep.subr.mxu0 0.0
    %2033 = vmatpush1.msra.mxu0 0.0
    %2034 = vmatprep.subr.mxu0 0.0
    %2035 = vmatpush1.msra.mxu0 0.0
    %2036 = vmatprep.subr.mxu0 0.0
    %2037 = vmatpush1.msra.mxu0 0.0
    %2038 = vmatprep.subr.mxu0 0.0
    %2039 = vmatpush1.msra.mxu0 0.0
    %2040 = vmatprep.subr.mxu0 0.0
    %2041 = vmatpush1.msra.mxu0 0.0
    %2042 = vmatprep.subr.mxu0 0.0
    %2043 = vmatpush1.msra.mxu0 0.0
    %2044 = vmatprep.subr.mxu0 0.0
    %2045 = vmatpush1.msra.mxu0 0.0
    %2046 = vmatprep.subr.mxu0 0.0
    %2047 = vmatpush1.msra.mxu0 0.0
    %2048 = vmatprep.subr.mxu0 0.0
    %2049 = vmatpush1.msra.mxu0 0.0
    %2050 = vmatprep.subr.mxu0 0.0
    %2051 = vmatpush1.msra.mxu0 0.0
    %2052 = vmatprep.subr.mxu0 0.0
    %2053 = vmatpush1.msra.mxu0 0.0
    %2054 = vmatprep.subr.mxu0 0.0
    %2055 = vmatpush1.msra.mxu0 0.0
    %2056 = vmatprep.subr.mxu0 0.0
    %2057 = vmatpush1.msra.mxu0 0.0
    %2058 = vmatprep.subr.mxu0 0.0
    %2059 = vmatpush1.msra.mxu0 0.0
    %2060 = vmatprep.mubr.f32.mxu0 0.0
    %v2061 = vand.u32 %v1576, 4294901760
    %2062 = vmatmul.mubr.f32.gmra.mrb[0].mxu0 %v2061
    %v2063 = vpop.f32.mrb[0].mxu0
    %v2064 = vadd.f32 %v1989, %v2063
    %v2065 = vpop.f32.mrb[0].mxu0
    %2066 = vdwg.mxu0
    %v2067 = vadd.f32 %v1549, %v2064
    %v2068 = vld [vmem:[%s4] sm:$0xff]
    %v2069 = vld [vmem:[%s4 + $0x8] sm:$0xff]
    %v2070 = vld [vmem:[%s4 + $0x10] sm:$0xff]
    %v2071 = vld [vmem:[%s4 + $0x18] sm:$0x1]
    %v2073 = vsel %vm1574, %v1561, 0
    %v2076 = vsel %vm1578, %v2071, 0
    %2078 = vmatprep.subr.mxu0 0.0
    %v2079 = vand.u32 %v2068, 4294901760
    %2080 = vmatpush1.msra.mxu0 %v2079
    %2081 = vmatprep.subr.mxu0 0.0
    %v2082 = vand.u32 %v2069, 4294901760
    %2083 = vmatpush1.msra.mxu0 %v2082
    %2084 = vmatprep.subr.mxu0 0.0
    %v2085 = vand.u32 %v2070, 4294901760
    %2086 = vmatpush1.msra.mxu0 %v2085
    %2087 = vmatprep.subr.mxu0 0.0
    %v2088 = vand.u32 %v2076, 4294901760
    %2089 = vmatpush1.msra.mxu0 %v2088
    %2090 = vmatprep.subr.mxu0 0.0
    %2091 = vmatpush1.msra.mxu0 0.0
    %2092 = vmatprep.subr.mxu0 0.0
    %2093 = vmatpush1.msra.mxu0 0.0
    %2094 = vmatprep.subr.mxu0 0.0
    %2095 = vmatpush1.msra.mxu0 0.0
    %2096 = vmatprep.subr.mxu0 0.0
    %2097 = vmatpush1.msra.mxu0 0.0
    %2098 = vmatprep.subr.mxu0 0.0
    %2099 = vmatpush1.msra.mxu0 0.0
    %2100 = vmatprep.subr.mxu0 0.0
    %2101 = vmatpush1.msra.mxu0 0.0
    %2102 = vmatprep.subr.mxu0 0.0
    %2103 = vmatpush1.msra.mxu0 0.0
    %2104 = vmatprep.subr.mxu0 0.0
    %2105 = vmatpush1.msra.mxu0 0.0
    %2106 = vmatprep.subr.mxu0 0.0
    %2107 = vmatpush1.msra.mxu0 0.0
    %2108 = vmatprep.subr.mxu0 0.0
    %2109 = vmatpush1.msra.mxu0 0.0
    %2110 = vmatprep.subr.mxu0 0.0
    %2111 = vmatpush1.msra.mxu0 0.0
    %2112 = vmatprep.subr.mxu0 0.0
    %2113 = vmatpush1.msra.mxu0 0.0
    %2114 = vmatprep.subr.mxu0 0.0
    %2115 = vmatpush1.msra.mxu0 0.0
    %2116 = vmatprep.subr.mxu0 0.0
    %2117 = vmatpush1.msra.mxu0 0.0
    %2118 = vmatprep.subr.mxu0 0.0
    %2119 = vmatpush1.msra.mxu0 0.0
    %2120 = vmatprep.subr.mxu0 0.0
    %2121 = vmatpush1.msra.mxu0 0.0
    %2122 = vmatprep.subr.mxu0 0.0
    %2123 = vmatpush1.msra.mxu0 0.0
    %2124 = vmatprep.subr.mxu0 0.0
    %2125 = vmatpush1.msra.mxu0 0.0
    %2126 = vmatprep.subr.mxu0 0.0
    %2127 = vmatpush1.msra.mxu0 0.0
    %2128 = vmatprep.subr.mxu0 0.0
    %2129 = vmatpush1.msra.mxu0 0.0
    %2130 = vmatprep.subr.mxu0 0.0
    %2131 = vmatpush1.msra.mxu0 0.0
    %2132 = vmatprep.subr.mxu0 0.0
    %2133 = vmatpush1.msra.mxu0 0.0
    %2134 = vmatprep.subr.mxu0 0.0
    %2135 = vmatpush1.msra.mxu0 0.0
    %2136 = vmatprep.subr.mxu0 0.0
    %2137 = vmatpush1.msra.mxu0 0.0
    %2138 = vmatprep.subr.mxu0 0.0
    %2139 = vmatpush1.msra.mxu0 0.0
    %2140 = vmatprep.subr.mxu0 0.0
    %2141 = vmatpush1.msra.mxu0 0.0
    %2142 = vmatprep.subr.mxu0 0.0
    %2143 = vmatpush1.msra.mxu0 0.0
    %2144 = vmatprep.subr.mxu0 0.0
    %2145 = vmatpush1.msra.mxu0 0.0
    %2146 = vmatprep.mubr.f32.mxu0 0.0
    %v2147 = vand.u32 %v2073, 4294901760
    %v2148 = vsub.f32 %v2073, %v2147
    %v2149 = vand.u32 %v2148, 4294901760
    %v2150 = vsub.f32 %v2148, %v2149
    %v2151 = vand.u32 %v2150, 4294901760
    %2152 = vmatmul.mubr.f32.gmra.mrb[0].mxu0 %v2151
    %v2153 = vpop.f32.mrb[0].mxu0
    %v2154 = vadd.f32 0.0, %v2153
    %v2155 = vpop.f32.mrb[0].mxu0
    %2156 = vdwg.mxu0
    %2157 = vmatprep.subr.mxu0 0.0
    %v2158 = vand.u32 %v2068, 4294901760
    %v2159 = vsub.f32 %v2068, %v2158
    %v2160 = vand.u32 %v2159, 4294901760
    %v2161 = vsub.f32 %v2159, %v2160
    %v2162 = vand.u32 %v2161, 4294901760
    %2163 = vmatpush1.msra.mxu0 %v2162
    %2164 = vmatprep.subr.mxu0 0.0
    %v2165 = vand.u32 %v2069, 4294901760
    %v2166 = vsub.f32 %v2069, %v2165
    %v2167 = vand.u32 %v2166, 4294901760
    %v2168 = vsub.f32 %v2166, %v2167
    %v2169 = vand.u32 %v2168, 4294901760
    %2170 = vmatpush1.msra.mxu0 %v2169
    %2171 = vmatprep.subr.mxu0 0.0
    %v2172 = vand.u32 %v2070, 4294901760
    %v2173 = vsub.f32 %v2070, %v2172
    %v2174 = vand.u32 %v2173, 4294901760
    %v2175 = vsub.f32 %v2173, %v2174
    %v2176 = vand.u32 %v2175, 4294901760
    %2177 = vmatpush1.msra.mxu0 %v2176
    %2178 = vmatprep.subr.mxu0 0.0
    %v2179 = vand.u32 %v2076, 4294901760
    %v2180 = vsub.f32 %v2076, %v2179
    %v2181 = vand.u32 %v2180, 4294901760
    %v2182 = vsub.f32 %v2180, %v2181
    %v2183 = vand.u32 %v2182, 4294901760
    %2184 = vmatpush1.msra.mxu0 %v2183
    %2185 = vmatprep.subr.mxu0 0.0
    %2186 = vmatpush1.msra.mxu0 0.0
    %2187 = vmatprep.subr.mxu0 0.0
    %2188 = vmatpush1.msra.mxu0 0.0
    %2189 = vmatprep.subr.mxu0 0.0
    %2190 = vmatpush1.msra.mxu0 0.0
    %2191 = vmatprep.subr.mxu0 0.0
    %2192 = vmatpush1.msra.mxu0 0.0
    %2193 = vmatprep.subr.mxu0 0.0
    %2194 = vmatpush1.msra.mxu0 0.0
    %2195 = vmatprep.subr.mxu0 0.0
    %2196 = vmatpush1.msra.mxu0 0.0
    %2197 = vmatprep.subr.mxu0 0.0
    %2198 = vmatpush1.msra.mxu0 0.0
    %2199 = vmatprep.subr.mxu0 0.0
    %2200 = vmatpush1.msra.mxu0 0.0
    %2201 = vmatprep.subr.mxu0 0.0
    %2202 = vmatpush1.msra.mxu0 0.0
    %2203 = vmatprep.subr.mxu0 0.0
    %2204 = vmatpush1.msra.mxu0 0.0
    %2205 = vmatprep.subr.mxu0 0.0
    %2206 = vmatpush1.msra.mxu0 0.0
    %2207 = vmatprep.subr.mxu0 0.0
    %2208 = vmatpush1.msra.mxu0 0.0
    %2209 = vmatprep.subr.mxu0 0.0
    %2210 = vmatpush1.msra.mxu0 0.0
    %2211 = vmatprep.subr.mxu0 0.0
    %2212 = vmatpush1.msra.mxu0 0.0
    %2213 = vmatprep.subr.mxu0 0.0
    %2214 = vmatpush1.msra.mxu0 0.0
    %2215 = vmatprep.subr.mxu0 0.0
    %2216 = vmatpush1.msra.mxu0 0.0
    %2217 = vmatprep.subr.mxu0 0.0
    %2218 = vmatpush1.msra.mxu0 0.0
    %2219 = vmatprep.subr.mxu0 0.0
    %2220 = vmatpush1.msra.mxu0 0.0
    %2221 = vmatprep.subr.mxu0 0.0
    %2222 = vmatpush1.msra.mxu0 0.0
    %2223 = vmatprep.subr.mxu0 0.0
    %2224 = vmatpush1.msra.mxu0 0.0
    %2225 = vmatprep.subr.mxu0 0.0
    %2226 = vmatpush1.msra.mxu0 0.0
    %2227 = vmatprep.subr.mxu0 0.0
    %2228 = vmatpush1.msra.mxu0 0.0
    %2229 = vmatprep.subr.mxu0 0.0
    %2230 = vmatpush1.msra.mxu0 0.0
    %2231 = vmatprep.subr.mxu0 0.0
    %2232 = vmatpush1.msra.mxu0 0.0
    %2233 = vmatprep.subr.mxu0 0.0
    %2234 = vmatpush1.msra.mxu0 0.0
    %2235 = vmatprep.subr.mxu0 0.0
    %2236 = vmatpush1.msra.mxu0 0.0
    %2237 = vmatprep.subr.mxu0 0.0
    %2238 = vmatpush1.msra.mxu0 0.0
    %2239 = vmatprep.subr.mxu0 0.0
    %2240 = vmatpush1.msra.mxu0 0.0
    %2241 = vmatprep.mubr.f32.mxu0 0.0
    %v2242 = vand.u32 %v2073, 4294901760
    %2243 = vmatmul.mubr.f32.gmra.mrb[0].mxu0 %v2242
    %v2244 = vpop.f32.mrb[0].mxu0
    %v2245 = vadd.f32 %v2154, %v2244
    %v2246 = vpop.f32.mrb[0].mxu0
    %2247 = vdwg.mxu0
    %2248 = vmatprep.subr.mxu0 0.0
    %v2249 = vand.u32 %v2068, 4294901760
    %v2250 = vsub.f32 %v2068, %v2249
    %2251 = vmatpush1.msra.mxu0 %v2250
    %2252 = vmatprep.subr.mxu0 0.0
    %v2253 = vand.u32 %v2069, 4294901760
    %v2254 = vsub.f32 %v2069, %v2253
    %2255 = vmatpush1.msra.mxu0 %v2254
    %2256 = vmatprep.subr.mxu0 0.0
    %v2257 = vand.u32 %v2070, 4294901760
    %v2258 = vsub.f32 %v2070, %v2257
    %2259 = vmatpush1.msra.mxu0 %v2258
    %2260 = vmatprep.subr.mxu0 0.0
    %v2261 = vand.u32 %v2076, 4294901760
    %v2262 = vsub.f32 %v2076, %v2261
    %2263 = vmatpush1.msra.mxu0 %v2262
    %2264 = vmatprep.subr.mxu0 0.0
    %2265 = vmatpush1.msra.mxu0 0.0
    %2266 = vmatprep.subr.mxu0 0.0
    %2267 = vmatpush1.msra.mxu0 0.0
    %2268 = vmatprep.subr.mxu0 0.0
    %2269 = vmatpush1.msra.mxu0 0.0
    %2270 = vmatprep.subr.mxu0 0.0
    %2271 = vmatpush1.msra.mxu0 0.0
    %2272 = vmatprep.subr.mxu0 0.0
    %2273 = vmatpush1.msra.mxu0 0.0
    %2274 = vmatprep.subr.mxu0 0.0
    %2275 = vmatpush1.msra.mxu0 0.0
    %2276 = vmatprep.subr.mxu0 0.0
    %2277 = vmatpush1.msra.mxu0 0.0
    %2278 = vmatprep.subr.mxu0 0.0
    %2279 = vmatpush1.msra.mxu0 0.0
    %2280 = vmatprep.subr.mxu0 0.0
    %2281 = vmatpush1.msra.mxu0 0.0
    %2282 = vmatprep.subr.mxu0 0.0
    %2283 = vmatpush1.msra.mxu0 0.0
    %2284 = vmatprep.subr.mxu0 0.0
    %2285 = vmatpush1.msra.mxu0 0.0
    %2286 = vmatprep.subr.mxu0 0.0
    %2287 = vmatpush1.msra.mxu0 0.0
    %2288 = vmatprep.subr.mxu0 0.0
    %2289 = vmatpush1.msra.mxu0 0.0
    %2290 = vmatprep.subr.mxu0 0.0
    %2291 = vmatpush1.msra.mxu0 0.0
    %2292 = vmatprep.subr.mxu0 0.0
    %2293 = vmatpush1.msra.mxu0 0.0
    %2294 = vmatprep.subr.mxu0 0.0
    %2295 = vmatpush1.msra.mxu0 0.0
    %2296 = vmatprep.subr.mxu0 0.0
    %2297 = vmatpush1.msra.mxu0 0.0
    %2298 = vmatprep.subr.mxu0 0.0
    %2299 = vmatpush1.msra.mxu0 0.0
    %2300 = vmatprep.subr.mxu0 0.0
    %2301 = vmatpush1.msra.mxu0 0.0
    %2302 = vmatprep.subr.mxu0 0.0
    %2303 = vmatpush1.msra.mxu0 0.0
    %2304 = vmatprep.subr.mxu0 0.0
    %2305 = vmatpush1.msra.mxu0 0.0
    %2306 = vmatprep.subr.mxu0 0.0
    %2307 = vmatpush1.msra.mxu0 0.0
    %2308 = vmatprep.subr.mxu0 0.0
    %2309 = vmatpush1.msra.mxu0 0.0
    %2310 = vmatprep.subr.mxu0 0.0
    %2311 = vmatpush1.msra.mxu0 0.0
    %2312 = vmatprep.subr.mxu0 0.0
    %2313 = vmatpush1.msra.mxu0 0.0
    %2314 = vmatprep.subr.mxu0 0.0
    %2315 = vmatpush1.msra.mxu0 0.0
    %2316 = vmatprep.subr.mxu0 0.0
    %2317 = vmatpush1.msra.mxu0 0.0
    %2318 = vmatprep.subr.mxu0 0.0
    %2319 = vmatpush1.msra.mxu0 0.0
    %2320 = vmatprep.mubr.f32.mxu0 0.0
    %v2321 = vand.u32 %v2073, 4294901760
    %v2322 = vsub.f32 %v2073, %v2321
    %2323 = vmatmul.mubr.f32.gmra.mrb[0].mxu0 %v2322
    %v2324 = vpop.f32.mrb[0].mxu0
    %v2325 = vadd.f32 %v2245, %v2324
    %v2326 = vpop.f32.mrb[0].mxu0
    %2327 = vdwg.mxu0
    %2328 = vmatprep.subr.mxu0 0.0
    %v2329 = vand.u32 %v2068, 4294901760
    %2330 = vmatpush1.msra.mxu0 %v2329
    %2331 = vmatprep.subr.mxu0 0.0
    %v2332 = vand.u32 %v2069, 4294901760
    %2333 = vmatpush1.msra.mxu0 %v2332
    %2334 = vmatprep.subr.mxu0 0.0
    %v2335 = vand.u32 %v2070, 4294901760
    %2336 = vmatpush1.msra.mxu0 %v2335
    %2337 = vmatprep.subr.mxu0 0.0
    %v2338 = vand.u32 %v2076, 4294901760
    %2339 = vmatpush1.msra.mxu0 %v2338
    %2340 = vmatprep.subr.mxu0 0.0
    %2341 = vmatpush1.msra.mxu0 0.0
    %2342 = vmatprep.subr.mxu0 0.0
    %2343 = vmatpush1.msra.mxu0 0.0
    %2344 = vmatprep.subr.mxu0 0.0
    %2345 = vmatpush1.msra.mxu0 0.0
    %2346 = vmatprep.subr.mxu0 0.0
    %2347 = vmatpush1.msra.mxu0 0.0
    %2348 = vmatprep.subr.mxu0 0.0
    %2349 = vmatpush1.msra.mxu0 0.0
    %2350 = vmatprep.subr.mxu0 0.0
    %2351 = vmatpush1.msra.mxu0 0.0
    %2352 = vmatprep.subr.mxu0 0.0
    %2353 = vmatpush1.msra.mxu0 0.0
    %2354 = vmatprep.subr.mxu0 0.0
    %2355 = vmatpush1.msra.mxu0 0.0
    %2356 = vmatprep.subr.mxu0 0.0
    %2357 = vmatpush1.msra.mxu0 0.0
    %2358 = vmatprep.subr.mxu0 0.0
    %2359 = vmatpush1.msra.mxu0 0.0
    %2360 = vmatprep.subr.mxu0 0.0
    %2361 = vmatpush1.msra.mxu0 0.0
    %2362 = vmatprep.subr.mxu0 0.0
    %2363 = vmatpush1.msra.mxu0 0.0
    %2364 = vmatprep.subr.mxu0 0.0
    %2365 = vmatpush1.msra.mxu0 0.0
    %2366 = vmatprep.subr.mxu0 0.0
    %2367 = vmatpush1.msra.mxu0 0.0
    %2368 = vmatprep.subr.mxu0 0.0
    %2369 = vmatpush1.msra.mxu0 0.0
    %2370 = vmatprep.subr.mxu0 0.0
    %2371 = vmatpush1.msra.mxu0 0.0
    %2372 = vmatprep.subr.mxu0 0.0
    %2373 = vmatpush1.msra.mxu0 0.0
    %2374 = vmatprep.subr.mxu0 0.0
    %2375 = vmatpush1.msra.mxu0 0.0
    %2376 = vmatprep.subr.mxu0 0.0
    %2377 = vmatpush1.msra.mxu0 0.0
    %2378 = vmatprep.subr.mxu0 0.0
    %2379 = vmatpush1.msra.mxu0 0.0
    %2380 = vmatprep.subr.mxu0 0.0
    %2381 = vmatpush1.msra.mxu0 0.0
    %2382 = vmatprep.subr.mxu0 0.0
    %2383 = vmatpush1.msra.mxu0 0.0
    %2384 = vmatprep.subr.mxu0 0.0
    %2385 = vmatpush1.msra.mxu0 0.0
    %2386 = vmatprep.subr.mxu0 0.0
    %2387 = vmatpush1.msra.mxu0 0.0
    %2388 = vmatprep.subr.mxu0 0.0
    %2389 = vmatpush1.msra.mxu0 0.0
    %2390 = vmatprep.subr.mxu0 0.0
    %2391 = vmatpush1.msra.mxu0 0.0
    %2392 = vmatprep.subr.mxu0 0.0
    %2393 = vmatpush1.msra.mxu0 0.0
    %2394 = vmatprep.subr.mxu0 0.0
    %2395 = vmatpush1.msra.mxu0 0.0
    %2396 = vmatprep.mubr.f32.mxu0 0.0
    %v2397 = vand.u32 %v2073, 4294901760
    %v2398 = vsub.f32 %v2073, %v2397
    %v2399 = vand.u32 %v2398, 4294901760
    %2400 = vmatmul.mubr.f32.gmra.mrb[0].mxu0 %v2399
    %v2401 = vpop.f32.mrb[0].mxu0
    %v2402 = vadd.f32 %v2325, %v2401
    %v2403 = vpop.f32.mrb[0].mxu0
    %2404 = vdwg.mxu0
    %2405 = vmatprep.subr.mxu0 0.0
    %v2406 = vand.u32 %v2068, 4294901760
    %v2407 = vsub.f32 %v2068, %v2406
    %v2408 = vand.u32 %v2407, 4294901760
    %2409 = vmatpush1.msra.mxu0 %v2408
    %2410 = vmatprep.subr.mxu0 0.0
    %v2411 = vand.u32 %v2069, 4294901760
    %v2412 = vsub.f32 %v2069, %v2411
    %v2413 = vand.u32 %v2412, 4294901760
    %2414 = vmatpush1.msra.mxu0 %v2413
    %2415 = vmatprep.subr.mxu0 0.0
    %v2416 = vand.u32 %v2070, 4294901760
    %v2417 = vsub.f32 %v2070, %v2416
    %v2418 = vand.u32 %v2417, 4294901760
    %2419 = vmatpush1.msra.mxu0 %v2418
    %2420 = vmatprep.subr.mxu0 0.0
    %v2421 = vand.u32 %v2076, 4294901760
    %v2422 = vsub.f32 %v2076, %v2421
    %v2423 = vand.u32 %v2422, 4294901760
    %2424 = vmatpush1.msra.mxu0 %v2423
    %2425 = vmatprep.subr.mxu0 0.0
    %2426 = vmatpush1.msra.mxu0 0.0
    %2427 = vmatprep.subr.mxu0 0.0
    %2428 = vmatpush1.msra.mxu0 0.0
    %2429 = vmatprep.subr.mxu0 0.0
    %2430 = vmatpush1.msra.mxu0 0.0
    %2431 = vmatprep.subr.mxu0 0.0
    %2432 = vmatpush1.msra.mxu0 0.0
    %2433 = vmatprep.subr.mxu0 0.0
    %2434 = vmatpush1.msra.mxu0 0.0
    %2435 = vmatprep.subr.mxu0 0.0
    %2436 = vmatpush1.msra.mxu0 0.0
    %2437 = vmatprep.subr.mxu0 0.0
    %2438 = vmatpush1.msra.mxu0 0.0
    %2439 = vmatprep.subr.mxu0 0.0
    %2440 = vmatpush1.msra.mxu0 0.0
    %2441 = vmatprep.subr.mxu0 0.0
    %2442 = vmatpush1.msra.mxu0 0.0
    %2443 = vmatprep.subr.mxu0 0.0
    %2444 = vmatpush1.msra.mxu0 0.0
    %2445 = vmatprep.subr.mxu0 0.0
    %2446 = vmatpush1.msra.mxu0 0.0
    %2447 = vmatprep.subr.mxu0 0.0
    %2448 = vmatpush1.msra.mxu0 0.0
    %2449 = vmatprep.subr.mxu0 0.0
    %2450 = vmatpush1.msra.mxu0 0.0
    %2451 = vmatprep.subr.mxu0 0.0
    %2452 = vmatpush1.msra.mxu0 0.0
    %2453 = vmatprep.subr.mxu0 0.0
    %2454 = vmatpush1.msra.mxu0 0.0
    %2455 = vmatprep.subr.mxu0 0.0
    %2456 = vmatpush1.msra.mxu0 0.0
    %2457 = vmatprep.subr.mxu0 0.0
    %2458 = vmatpush1.msra.mxu0 0.0
    %2459 = vmatprep.subr.mxu0 0.0
    %2460 = vmatpush1.msra.mxu0 0.0
    %2461 = vmatprep.subr.mxu0 0.0
    %2462 = vmatpush1.msra.mxu0 0.0
    %2463 = vmatprep.subr.mxu0 0.0
    %2464 = vmatpush1.msra.mxu0 0.0
    %2465 = vmatprep.subr.mxu0 0.0
    %2466 = vmatpush1.msra.mxu0 0.0
    %2467 = vmatprep.subr.mxu0 0.0
    %2468 = vmatpush1.msra.mxu0 0.0
    %2469 = vmatprep.subr.mxu0 0.0
    %2470 = vmatpush1.msra.mxu0 0.0
    %2471 = vmatprep.subr.mxu0 0.0
    %2472 = vmatpush1.msra.mxu0 0.0
    %2473 = vmatprep.subr.mxu0 0.0
    %2474 = vmatpush1.msra.mxu0 0.0
    %2475 = vmatprep.subr.mxu0 0.0
    %2476 = vmatpush1.msra.mxu0 0.0
    %2477 = vmatprep.subr.mxu0 0.0
    %2478 = vmatpush1.msra.mxu0 0.0
    %2479 = vmatprep.subr.mxu0 0.0
    %2480 = vmatpush1.msra.mxu0 0.0
    %2481 = vmatprep.mubr.f32.mxu0 0.0
    %v2482 = vand.u32 %v2073, 4294901760
    %2483 = vmatmul.mubr.f32.gmra.mrb[0].mxu0 %v2482
    %v2484 = vpop.f32.mrb[0].mxu0
    %v2485 = vadd.f32 %v2402, %v2484
    %v2486 = vpop.f32.mrb[0].mxu0
    %2487 = vdwg.mxu0
    %2488 = vmatprep.subr.mxu0 0.0
    %v2489 = vand.u32 %v2068, 4294901760
    %2490 = vmatpush1.msra.mxu0 %v2489
    %2491 = vmatprep.subr.mxu0 0.0
    %v2492 = vand.u32 %v2069, 4294901760
    %2493 = vmatpush1.msra.mxu0 %v2492
    %2494 = vmatprep.subr.mxu0 0.0
    %v2495 = vand.u32 %v2070, 4294901760
    %2496 = vmatpush1.msra.mxu0 %v2495
    %2497 = vmatprep.subr.mxu0 0.0
    %v2498 = vand.u32 %v2076, 4294901760
    %2499 = vmatpush1.msra.mxu0 %v2498
    %2500 = vmatprep.subr.mxu0 0.0
    %2501 = vmatpush1.msra.mxu0 0.0
    %2502 = vmatprep.subr.mxu0 0.0
    %2503 = vmatpush1.msra.mxu0 0.0
    %2504 = vmatprep.subr.mxu0 0.0
    %2505 = vmatpush1.msra.mxu0 0.0
    %2506 = vmatprep.subr.mxu0 0.0
    %2507 = vmatpush1.msra.mxu0 0.0
    %2508 = vmatprep.subr.mxu0 0.0
    %2509 = vmatpush1.msra.mxu0 0.0
    %2510 = vmatprep.subr.mxu0 0.0
    %2511 = vmatpush1.msra.mxu0 0.0
    %2512 = vmatprep.subr.mxu0 0.0
    %2513 = vmatpush1.msra.mxu0 0.0
    %2514 = vmatprep.subr.mxu0 0.0
    %2515 = vmatpush1.msra.mxu0 0.0
    %2516 = vmatprep.subr.mxu0 0.0
    %2517 = vmatpush1.msra.mxu0 0.0
    %2518 = vmatprep.subr.mxu0 0.0
    %2519 = vmatpush1.msra.mxu0 0.0
    %2520 = vmatprep.subr.mxu0 0.0
    %2521 = vmatpush1.msra.mxu0 0.0
    %2522 = vmatprep.subr.mxu0 0.0
    %2523 = vmatpush1.msra.mxu0 0.0
    %2524 = vmatprep.subr.mxu0 0.0
    %2525 = vmatpush1.msra.mxu0 0.0
    %2526 = vmatprep.subr.mxu0 0.0
    %2527 = vmatpush1.msra.mxu0 0.0
    %2528 = vmatprep.subr.mxu0 0.0
    %2529 = vmatpush1.msra.mxu0 0.0
    %2530 = vmatprep.subr.mxu0 0.0
    %2531 = vmatpush1.msra.mxu0 0.0
    %2532 = vmatprep.subr.mxu0 0.0
    %2533 = vmatpush1.msra.mxu0 0.0
    %2534 = vmatprep.subr.mxu0 0.0
    %2535 = vmatpush1.msra.mxu0 0.0
    %2536 = vmatprep.subr.mxu0 0.0
    %2537 = vmatpush1.msra.mxu0 0.0
    %2538 = vmatprep.subr.mxu0 0.0
    %2539 = vmatpush1.msra.mxu0 0.0
    %2540 = vmatprep.subr.mxu0 0.0
    %2541 = vmatpush1.msra.mxu0 0.0
    %2542 = vmatprep.subr.mxu0 0.0
    %2543 = vmatpush1.msra.mxu0 0.0
    %2544 = vmatprep.subr.mxu0 0.0
    %2545 = vmatpush1.msra.mxu0 0.0
    %2546 = vmatprep.subr.mxu0 0.0
    %2547 = vmatpush1.msra.mxu0 0.0
    %2548 = vmatprep.subr.mxu0 0.0
    %2549 = vmatpush1.msra.mxu0 0.0
    %2550 = vmatprep.subr.mxu0 0.0
    %2551 = vmatpush1.msra.mxu0 0.0
    %2552 = vmatprep.subr.mxu0 0.0
    %2553 = vmatpush1.msra.mxu0 0.0
    %2554 = vmatprep.subr.mxu0 0.0
    %2555 = vmatpush1.msra.mxu0 0.0
    %2556 = vmatprep.mubr.f32.mxu0 0.0
    %v2557 = vand.u32 %v2073, 4294901760
    %2558 = vmatmul.mubr.f32.gmra.mrb[0].mxu0 %v2557
    %v2559 = vpop.f32.mrb[0].mxu0
    %v2560 = vadd.f32 %v2485, %v2559
    %v2561 = vpop.f32.mrb[0].mxu0
    %2562 = vdwg.mxu0
    %v2563 = vadd.f32 %v2067, %v2560
    %v2564 = vsel %vm1574, %v1567, 0.0
    %2565 = vadd.xlane.f32.xlu0 %v2564
    %v2566 = vpop.xlane.xlu0 %2565
    %v2567 = vrcp.pop 25.0
    %v2568 = vmul.f32 %v2566, %v2567
    %v2569 = vsub.f32 0.0, %v2563
    %v2570 = vmul.f32 %v2569, 1.442695
    %v2571 = vpow.pop %v2570
    %v2572 = vadd.f32 %v2571, 1.0
    %v2573 = vrcp.pop %v2572
    %v2574 = vmul.f32 1.0, %v2573
    %v2575 = vmul.f32 %v2574, 0.5
    %v2576 = vsub.f32 0.0, %v2568
    %v2577 = vmul.f32 %v2576, 1.442695
    %v2578 = vpow.pop %v2577
    %v2579 = vadd.f32 %v2578, 1.0
    %v2580 = vrcp.pop %v2579
    %v2581 = vmul.f32 1.0, %v2580
    %v2582 = vmul.f32 %v2581, 0.5
    %v2583 = vadd.f32 %v2575, %v2582
    %2584 = vmatprep.subr.mxu0 0.0
    %v2585 = vand.u32 %v975, 4294901760
    %2586 = vmatpush1.msra.mxu0 %v2585
    %2587 = vmatprep.subr.mxu0 0.0
    %2588 = vmatpush1.msra.mxu0 0.0
    %2589 = vmatprep.subr.mxu0 0.0
    %2590 = vmatpush1.msra.mxu0 0.0
    %2591 = vmatprep.subr.mxu0 0.0
    %2592 = vmatpush1.msra.mxu0 0.0
    %2593 = vmatprep.subr.mxu0 0.0
    %2594 = vmatpush1.msra.mxu0 0.0
    %2595 = vmatprep.subr.mxu0 0.0
    %2596 = vmatpush1.msra.mxu0 0.0
    %2597 = vmatprep.subr.mxu0 0.0
    %2598 = vmatpush1.msra.mxu0 0.0
    %2599 = vmatprep.subr.mxu0 0.0
    %2600 = vmatpush1.msra.mxu0 0.0
    %2601 = vmatprep.subr.mxu0 0.0
    %2602 = vmatpush1.msra.mxu0 0.0
    %2603 = vmatprep.subr.mxu0 0.0
    %2604 = vmatpush1.msra.mxu0 0.0
    %2605 = vmatprep.subr.mxu0 0.0
    %2606 = vmatpush1.msra.mxu0 0.0
    %2607 = vmatprep.subr.mxu0 0.0
    %2608 = vmatpush1.msra.mxu0 0.0
    %2609 = vmatprep.subr.mxu0 0.0
    %2610 = vmatpush1.msra.mxu0 0.0
    %2611 = vmatprep.subr.mxu0 0.0
    %2612 = vmatpush1.msra.mxu0 0.0
    %2613 = vmatprep.subr.mxu0 0.0
    %2614 = vmatpush1.msra.mxu0 0.0
    %2615 = vmatprep.subr.mxu0 0.0
    %2616 = vmatpush1.msra.mxu0 0.0
    %2617 = vmatprep.subr.mxu0 0.0
    %2618 = vmatpush1.msra.mxu0 0.0
    %2619 = vmatprep.subr.mxu0 0.0
    %2620 = vmatpush1.msra.mxu0 0.0
    %2621 = vmatprep.subr.mxu0 0.0
    %2622 = vmatpush1.msra.mxu0 0.0
    %2623 = vmatprep.subr.mxu0 0.0
    %2624 = vmatpush1.msra.mxu0 0.0
    %2625 = vmatprep.subr.mxu0 0.0
    %2626 = vmatpush1.msra.mxu0 0.0
    %2627 = vmatprep.subr.mxu0 0.0
    %2628 = vmatpush1.msra.mxu0 0.0
    %2629 = vmatprep.subr.mxu0 0.0
    %2630 = vmatpush1.msra.mxu0 0.0
    %2631 = vmatprep.subr.mxu0 0.0
    %2632 = vmatpush1.msra.mxu0 0.0
    %2633 = vmatprep.subr.mxu0 0.0
    %2634 = vmatpush1.msra.mxu0 0.0
    %2635 = vmatprep.subr.mxu0 0.0
    %2636 = vmatpush1.msra.mxu0 0.0
    %2637 = vmatprep.subr.mxu0 0.0
    %2638 = vmatpush1.msra.mxu0 0.0
    %2639 = vmatprep.subr.mxu0 0.0
    %2640 = vmatpush1.msra.mxu0 0.0
    %2641 = vmatprep.subr.mxu0 0.0
    %2642 = vmatpush1.msra.mxu0 0.0
    %2643 = vmatprep.subr.mxu0 0.0
    %2644 = vmatpush1.msra.mxu0 0.0
    %2645 = vmatprep.subr.mxu0 0.0
    %2646 = vmatpush1.msra.mxu0 0.0
    %2647 = vmatprep.subr.mxu0 0.0
    %2648 = vmatpush1.msra.mxu0 0.0
    %2649 = vmatprep.mubr.f32.mxu0 0.0
    %v2650 = vand.u32 %v984, 4294901760
    %v2651 = vsub.f32 %v984, %v2650
    %v2652 = vand.u32 %v2651, 4294901760
    %v2653 = vsub.f32 %v2651, %v2652
    %v2654 = vand.u32 %v2653, 4294901760
    %2655 = vmatmul.mubr.f32.gmra.mrb[0].mxu0 %v2654
    %v2656 = vpop.f32.mrb[0].mxu0
    %v2657 = vadd.f32 0.0, %v2656
    %v2658 = vpop.f32.mrb[0].mxu0
    %2659 = vmatprep.mubr.f32.mxu0 0.0
    %v2660 = vand.u32 %v987, 4294901760
    %v2661 = vsub.f32 %v987, %v2660
    %v2662 = vand.u32 %v2661, 4294901760
    %v2663 = vsub.f32 %v2661, %v2662
    %v2664 = vand.u32 %v2663, 4294901760
    %2665 = vmatmul.mubr.f32.gmra.mrb[0].mxu0 %v2664
    %v2666 = vpop.f32.mrb[0].mxu0
    %v2667 = vadd.f32 0.0, %v2666
    %v2668 = vpop.f32.mrb[0].mxu0
    %2669 = vmatprep.mubr.f32.mxu0 0.0
    %v2670 = vand.u32 %v990, 4294901760
    %v2671 = vsub.f32 %v990, %v2670
    %v2672 = vand.u32 %v2671, 4294901760
    %v2673 = vsub.f32 %v2671, %v2672
    %v2674 = vand.u32 %v2673, 4294901760
    %2675 = vmatmul.mubr.f32.gmra.mrb[0].mxu0 %v2674
    %v2676 = vpop.f32.mrb[0].mxu0
    %v2677 = vadd.f32 0.0, %v2676
    %v2678 = vpop.f32.mrb[0].mxu0
    %2679 = vmatprep.mubr.f32.mxu0 0.0
    %v2680 = vand.u32 %v993, 4294901760
    %v2681 = vsub.f32 %v993, %v2680
    %v2682 = vand.u32 %v2681, 4294901760
    %v2683 = vsub.f32 %v2681, %v2682
    %v2684 = vand.u32 %v2683, 4294901760
    %2685 = vmatmul.mubr.f32.gmra.mrb[0].mxu0 %v2684
    %v2686 = vpop.f32.mrb[0].mxu0
    %v2687 = vadd.f32 0.0, %v2686
    %v2688 = vpop.f32.mrb[0].mxu0
    %2689 = vdwg.mxu0
    %2690 = vmatprep.subr.mxu0 0.0
    %v2691 = vand.u32 %v975, 4294901760
    %v2692 = vsub.f32 %v975, %v2691
    %v2693 = vand.u32 %v2692, 4294901760
    %v2694 = vsub.f32 %v2692, %v2693
    %v2695 = vand.u32 %v2694, 4294901760
    %2696 = vmatpush1.msra.mxu0 %v2695
    %2697 = vmatprep.subr.mxu0 0.0
    %2698 = vmatpush1.msra.mxu0 0.0
    %2699 = vmatprep.subr.mxu0 0.0
    %2700 = vmatpush1.msra.mxu0 0.0
    %2701 = vmatprep.subr.mxu0 0.0
    %2702 = vmatpush1.msra.mxu0 0.0
    %2703 = vmatprep.subr.mxu0 0.0
    %2704 = vmatpush1.msra.mxu0 0.0
    %2705 = vmatprep.subr.mxu0 0.0
    %2706 = vmatpush1.msra.mxu0 0.0
    %2707 = vmatprep.subr.mxu0 0.0
    %2708 = vmatpush1.msra.mxu0 0.0
    %2709 = vmatprep.subr.mxu0 0.0
    %2710 = vmatpush1.msra.mxu0 0.0
    %2711 = vmatprep.subr.mxu0 0.0
    %2712 = vmatpush1.msra.mxu0 0.0
    %2713 = vmatprep.subr.mxu0 0.0
    %2714 = vmatpush1.msra.mxu0 0.0
    %2715 = vmatprep.subr.mxu0 0.0
    %2716 = vmatpush1.msra.mxu0 0.0
    %2717 = vmatprep.subr.mxu0 0.0
    %2718 = vmatpush1.msra.mxu0 0.0
    %2719 = vmatprep.subr.mxu0 0.0
    %2720 = vmatpush1.msra.mxu0 0.0
    %2721 = vmatprep.subr.mxu0 0.0
    %2722 = vmatpush1.msra.mxu0 0.0
    %2723 = vmatprep.subr.mxu0 0.0
    %2724 = vmatpush1.msra.mxu0 0.0
    %2725 = vmatprep.subr.mxu0 0.0
    %2726 = vmatpush1.msra.mxu0 0.0
    %2727 = vmatprep.subr.mxu0 0.0
    %2728 = vmatpush1.msra.mxu0 0.0
    %2729 = vmatprep.subr.mxu0 0.0
    %2730 = vmatpush1.msra.mxu0 0.0
    %2731 = vmatprep.subr.mxu0 0.0
    %2732 = vmatpush1.msra.mxu0 0.0
    %2733 = vmatprep.subr.mxu0 0.0
    %2734 = vmatpush1.msra.mxu0 0.0
    %2735 = vmatprep.subr.mxu0 0.0
    %2736 = vmatpush1.msra.mxu0 0.0
    %2737 = vmatprep.subr.mxu0 0.0
    %2738 = vmatpush1.msra.mxu0 0.0
    %2739 = vmatprep.subr.mxu0 0.0
    %2740 = vmatpush1.msra.mxu0 0.0
    %2741 = vmatprep.subr.mxu0 0.0
    %2742 = vmatpush1.msra.mxu0 0.0
    %2743 = vmatprep.subr.mxu0 0.0
    %2744 = vmatpush1.msra.mxu0 0.0
    %2745 = vmatprep.subr.mxu0 0.0
    %2746 = vmatpush1.msra.mxu0 0.0
    %2747 = vmatprep.subr.mxu0 0.0
    %2748 = vmatpush1.msra.mxu0 0.0
    %2749 = vmatprep.subr.mxu0 0.0
    %2750 = vmatpush1.msra.mxu0 0.0
    %2751 = vmatprep.subr.mxu0 0.0
    %2752 = vmatpush1.msra.mxu0 0.0
    %2753 = vmatprep.subr.mxu0 0.0
    %2754 = vmatpush1.msra.mxu0 0.0
    %2755 = vmatprep.subr.mxu0 0.0
    %2756 = vmatpush1.msra.mxu0 0.0
    %2757 = vmatprep.subr.mxu0 0.0
    %2758 = vmatpush1.msra.mxu0 0.0
    %2759 = vmatprep.mubr.f32.mxu0 0.0
    %v2760 = vand.u32 %v984, 4294901760
    %2761 = vmatmul.mubr.f32.gmra.mrb[0].mxu0 %v2760
    %v2762 = vpop.f32.mrb[0].mxu0
    %v2763 = vadd.f32 %v2657, %v2762
    %v2764 = vpop.f32.mrb[0].mxu0
    %2765 = vmatprep.mubr.f32.mxu0 0.0
    %v2766 = vand.u32 %v987, 4294901760
    %2767 = vmatmul.mubr.f32.gmra.mrb[0].mxu0 %v2766
    %v2768 = vpop.f32.mrb[0].mxu0
    %v2769 = vadd.f32 %v2667, %v2768
    %v2770 = vpop.f32.mrb[0].mxu0
    %2771 = vmatprep.mubr.f32.mxu0 0.0
    %v2772 = vand.u32 %v990, 4294901760
    %2773 = vmatmul.mubr.f32.gmra.mrb[0].mxu0 %v2772
    %v2774 = vpop.f32.mrb[0].mxu0
    %v2775 = vadd.f32 %v2677, %v2774
    %v2776 = vpop.f32.mrb[0].mxu0
    %2777 = vmatprep.mubr.f32.mxu0 0.0
    %v2778 = vand.u32 %v993, 4294901760
    %2779 = vmatmul.mubr.f32.gmra.mrb[0].mxu0 %v2778
    %v2780 = vpop.f32.mrb[0].mxu0
    %v2781 = vadd.f32 %v2687, %v2780
    %v2782 = vpop.f32.mrb[0].mxu0
    %2783 = vdwg.mxu0
    %2784 = vmatprep.subr.mxu0 0.0
    %v2785 = vand.u32 %v975, 4294901760
    %v2786 = vsub.f32 %v975, %v2785
    %2787 = vmatpush1.msra.mxu0 %v2786
    %2788 = vmatprep.subr.mxu0 0.0
    %2789 = vmatpush1.msra.mxu0 0.0
    %2790 = vmatprep.subr.mxu0 0.0
    %2791 = vmatpush1.msra.mxu0 0.0
    %2792 = vmatprep.subr.mxu0 0.0
    %2793 = vmatpush1.msra.mxu0 0.0
    %2794 = vmatprep.subr.mxu0 0.0
    %2795 = vmatpush1.msra.mxu0 0.0
    %2796 = vmatprep.subr.mxu0 0.0
    %2797 = vmatpush1.msra.mxu0 0.0
    %2798 = vmatprep.subr.mxu0 0.0
    %2799 = vmatpush1.msra.mxu0 0.0
    %2800 = vmatprep.subr.mxu0 0.0
    %2801 = vmatpush1.msra.mxu0 0.0
    %2802 = vmatprep.subr.mxu0 0.0
    %2803 = vmatpush1.msra.mxu0 0.0
    %2804 = vmatprep.subr.mxu0 0.0
    %2805 = vmatpush1.msra.mxu0 0.0
    %2806 = vmatprep.subr.mxu0 0.0
    %2807 = vmatpush1.msra.mxu0 0.0
    %2808 = vmatprep.subr.mxu0 0.0
    %2809 = vmatpush1.msra.mxu0 0.0
    %2810 = vmatprep.subr.mxu0 0.0
    %2811 = vmatpush1.msra.mxu0 0.0
    %2812 = vmatprep.subr.mxu0 0.0
    %2813 = vmatpush1.msra.mxu0 0.0
    %2814 = vmatprep.subr.mxu0 0.0
    %2815 = vmatpush1.msra.mxu0 0.0
    %2816 = vmatprep.subr.mxu0 0.0
    %2817 = vmatpush1.msra.mxu0 0.0
    %2818 = vmatprep.subr.mxu0 0.0
    %2819 = vmatpush1.msra.mxu0 0.0
    %2820 = vmatprep.subr.mxu0 0.0
    %2821 = vmatpush1.msra.mxu0 0.0
    %2822 = vmatprep.subr.mxu0 0.0
    %2823 = vmatpush1.msra.mxu0 0.0
    %2824 = vmatprep.subr.mxu0 0.0
    %2825 = vmatpush1.msra.mxu0 0.0
    %2826 = vmatprep.subr.mxu0 0.0
    %2827 = vmatpush1.msra.mxu0 0.0
    %2828 = vmatprep.subr.mxu0 0.0
    %2829 = vmatpush1.msra.mxu0 0.0
    %2830 = vmatprep.subr.mxu0 0.0
    %2831 = vmatpush1.msra.mxu0 0.0
    %2832 = vmatprep.subr.mxu0 0.0
    %2833 = vmatpush1.msra.mxu0 0.0
    %2834 = vmatprep.subr.mxu0 0.0
    %2835 = vmatpush1.msra.mxu0 0.0
    %2836 = vmatprep.subr.mxu0 0.0
    %2837 = vmatpush1.msra.mxu0 0.0
    %2838 = vmatprep.subr.mxu0 0.0
    %2839 = vmatpush1.msra.mxu0 0.0
    %2840 = vmatprep.subr.mxu0 0.0
    %2841 = vmatpush1.msra.mxu0 0.0
    %2842 = vmatprep.subr.mxu0 0.0
    %2843 = vmatpush1.msra.mxu0 0.0
    %2844 = vmatprep.subr.mxu0 0.0
    %2845 = vmatpush1.msra.mxu0 0.0
    %2846 = vmatprep.subr.mxu0 0.0
    %2847 = vmatpush1.msra.mxu0 0.0
    %2848 = vmatprep.subr.mxu0 0.0
    %2849 = vmatpush1.msra.mxu0 0.0
    %2850 = vmatprep.mubr.f32.mxu0 0.0
    %v2851 = vand.u32 %v984, 4294901760
    %v2852 = vsub.f32 %v984, %v2851
    %2853 = vmatmul.mubr.f32.gmra.mrb[0].mxu0 %v2852
    %v2854 = vpop.f32.mrb[0].mxu0
    %v2855 = vadd.f32 %v2763, %v2854
    %v2856 = vpop.f32.mrb[0].mxu0
    %2857 = vmatprep.mubr.f32.mxu0 0.0
    %v2858 = vand.u32 %v987, 4294901760
    %v2859 = vsub.f32 %v987, %v2858
    %2860 = vmatmul.mubr.f32.gmra.mrb[0].mxu0 %v2859
    %v2861 = vpop.f32.mrb[0].mxu0
    %v2862 = vadd.f32 %v2769, %v2861
    %v2863 = vpop.f32.mrb[0].mxu0
    %2864 = vmatprep.mubr.f32.mxu0 0.0
    %v2865 = vand.u32 %v990, 4294901760
    %v2866 = vsub.f32 %v990, %v2865
    %2867 = vmatmul.mubr.f32.gmra.mrb[0].mxu0 %v2866
    %v2868 = vpop.f32.mrb[0].mxu0
    %v2869 = vadd.f32 %v2775, %v2868
    %v2870 = vpop.f32.mrb[0].mxu0
    %2871 = vmatprep.mubr.f32.mxu0 0.0
    %v2872 = vand.u32 %v993, 4294901760
    %v2873 = vsub.f32 %v993, %v2872
    %2874 = vmatmul.mubr.f32.gmra.mrb[0].mxu0 %v2873
    %v2875 = vpop.f32.mrb[0].mxu0
    %v2876 = vadd.f32 %v2781, %v2875
    %v2877 = vpop.f32.mrb[0].mxu0
    %2878 = vdwg.mxu0
    %2879 = vmatprep.subr.mxu0 0.0
    %v2880 = vand.u32 %v975, 4294901760
    %2881 = vmatpush1.msra.mxu0 %v2880
    %2882 = vmatprep.subr.mxu0 0.0
    %2883 = vmatpush1.msra.mxu0 0.0
    %2884 = vmatprep.subr.mxu0 0.0
    %2885 = vmatpush1.msra.mxu0 0.0
    %2886 = vmatprep.subr.mxu0 0.0
    %2887 = vmatpush1.msra.mxu0 0.0
    %2888 = vmatprep.subr.mxu0 0.0
    %2889 = vmatpush1.msra.mxu0 0.0
    %2890 = vmatprep.subr.mxu0 0.0
    %2891 = vmatpush1.msra.mxu0 0.0
    %2892 = vmatprep.subr.mxu0 0.0
    %2893 = vmatpush1.msra.mxu0 0.0
    %2894 = vmatprep.subr.mxu0 0.0
    %2895 = vmatpush1.msra.mxu0 0.0
    %2896 = vmatprep.subr.mxu0 0.0
    %2897 = vmatpush1.msra.mxu0 0.0
    %2898 = vmatprep.subr.mxu0 0.0
    %2899 = vmatpush1.msra.mxu0 0.0
    %2900 = vmatprep.subr.mxu0 0.0
    %2901 = vmatpush1.msra.mxu0 0.0
    %2902 = vmatprep.subr.mxu0 0.0
    %2903 = vmatpush1.msra.mxu0 0.0
    %2904 = vmatprep.subr.mxu0 0.0
    %2905 = vmatpush1.msra.mxu0 0.0
    %2906 = vmatprep.subr.mxu0 0.0
    %2907 = vmatpush1.msra.mxu0 0.0
    %2908 = vmatprep.subr.mxu0 0.0
    %2909 = vmatpush1.msra.mxu0 0.0
    %2910 = vmatprep.subr.mxu0 0.0
    %2911 = vmatpush1.msra.mxu0 0.0
    %2912 = vmatprep.subr.mxu0 0.0
    %2913 = vmatpush1.msra.mxu0 0.0
    %2914 = vmatprep.subr.mxu0 0.0
    %2915 = vmatpush1.msra.mxu0 0.0
    %2916 = vmatprep.subr.mxu0 0.0
    %2917 = vmatpush1.msra.mxu0 0.0
    %2918 = vmatprep.subr.mxu0 0.0
    %2919 = vmatpush1.msra.mxu0 0.0
    %2920 = vmatprep.subr.mxu0 0.0
    %2921 = vmatpush1.msra.mxu0 0.0
    %2922 = vmatprep.subr.mxu0 0.0
    %2923 = vmatpush1.msra.mxu0 0.0
    %2924 = vmatprep.subr.mxu0 0.0
    %2925 = vmatpush1.msra.mxu0 0.0
    %2926 = vmatprep.subr.mxu0 0.0
    %2927 = vmatpush1.msra.mxu0 0.0
    %2928 = vmatprep.subr.mxu0 0.0
    %2929 = vmatpush1.msra.mxu0 0.0
    %2930 = vmatprep.subr.mxu0 0.0
    %2931 = vmatpush1.msra.mxu0 0.0
    %2932 = vmatprep.subr.mxu0 0.0
    %2933 = vmatpush1.msra.mxu0 0.0
    %2934 = vmatprep.subr.mxu0 0.0
    %2935 = vmatpush1.msra.mxu0 0.0
    %2936 = vmatprep.subr.mxu0 0.0
    %2937 = vmatpush1.msra.mxu0 0.0
    %2938 = vmatprep.subr.mxu0 0.0
    %2939 = vmatpush1.msra.mxu0 0.0
    %2940 = vmatprep.subr.mxu0 0.0
    %2941 = vmatpush1.msra.mxu0 0.0
    %2942 = vmatprep.subr.mxu0 0.0
    %2943 = vmatpush1.msra.mxu0 0.0
    %2944 = vmatprep.mubr.f32.mxu0 0.0
    %v2945 = vand.u32 %v984, 4294901760
    %v2946 = vsub.f32 %v984, %v2945
    %v2947 = vand.u32 %v2946, 4294901760
    %2948 = vmatmul.mubr.f32.gmra.mrb[0].mxu0 %v2947
    %v2949 = vpop.f32.mrb[0].mxu0
    %v2950 = vadd.f32 %v2855, %v2949
    %v2951 = vpop.f32.mrb[0].mxu0
    %2952 = vmatprep.mubr.f32.mxu0 0.0
    %v2953 = vand.u32 %v987, 4294901760
    %v2954 = vsub.f32 %v987, %v2953
    %v2955 = vand.u32 %v2954, 4294901760
    %2956 = vmatmul.mubr.f32.gmra.mrb[0].mxu0 %v2955
    %v2957 = vpop.f32.mrb[0].mxu0
    %v2958 = vadd.f32 %v2862, %v2957
    %v2959 = vpop.f32.mrb[0].mxu0
    %2960 = vmatprep.mubr.f32.mxu0 0.0
    %v2961 = vand.u32 %v990, 4294901760
    %v2962 = vsub.f32 %v990, %v2961
    %v2963 = vand.u32 %v2962, 4294901760
    %2964 = vmatmul.mubr.f32.gmra.mrb[0].mxu0 %v2963
    %v2965 = vpop.f32.mrb[0].mxu0
    %v2966 = vadd.f32 %v2869, %v2965
    %v2967 = vpop.f32.mrb[0].mxu0
    %2968 = vmatprep.mubr.f32.mxu0 0.0
    %v2969 = vand.u32 %v993, 4294901760
    %v2970 = vsub.f32 %v993, %v2969
    %v2971 = vand.u32 %v2970, 4294901760
    %2972 = vmatmul.mubr.f32.gmra.mrb[0].mxu0 %v2971
    %v2973 = vpop.f32.mrb[0].mxu0
    %v2974 = vadd.f32 %v2876, %v2973
    %v2975 = vpop.f32.mrb[0].mxu0
    %2976 = vdwg.mxu0
    %2977 = vmatprep.subr.mxu0 0.0
    %v2978 = vand.u32 %v975, 4294901760
    %v2979 = vsub.f32 %v975, %v2978
    %v2980 = vand.u32 %v2979, 4294901760
    %2981 = vmatpush1.msra.mxu0 %v2980
    %2982 = vmatprep.subr.mxu0 0.0
    %2983 = vmatpush1.msra.mxu0 0.0
    %2984 = vmatprep.subr.mxu0 0.0
    %2985 = vmatpush1.msra.mxu0 0.0
    %2986 = vmatprep.subr.mxu0 0.0
    %2987 = vmatpush1.msra.mxu0 0.0
    %2988 = vmatprep.subr.mxu0 0.0
    %2989 = vmatpush1.msra.mxu0 0.0
    %2990 = vmatprep.subr.mxu0 0.0
    %2991 = vmatpush1.msra.mxu0 0.0
    %2992 = vmatprep.subr.mxu0 0.0
    %2993 = vmatpush1.msra.mxu0 0.0
    %2994 = vmatprep.subr.mxu0 0.0
    %2995 = vmatpush1.msra.mxu0 0.0
    %2996 = vmatprep.subr.mxu0 0.0
    %2997 = vmatpush1.msra.mxu0 0.0
    %2998 = vmatprep.subr.mxu0 0.0
    %2999 = vmatpush1.msra.mxu0 0.0
    %3000 = vmatprep.subr.mxu0 0.0
    %3001 = vmatpush1.msra.mxu0 0.0
    %3002 = vmatprep.subr.mxu0 0.0
    %3003 = vmatpush1.msra.mxu0 0.0
    %3004 = vmatprep.subr.mxu0 0.0
    %3005 = vmatpush1.msra.mxu0 0.0
    %3006 = vmatprep.subr.mxu0 0.0
    %3007 = vmatpush1.msra.mxu0 0.0
    %3008 = vmatprep.subr.mxu0 0.0
    %3009 = vmatpush1.msra.mxu0 0.0
    %3010 = vmatprep.subr.mxu0 0.0
    %3011 = vmatpush1.msra.mxu0 0.0
    %3012 = vmatprep.subr.mxu0 0.0
    %3013 = vmatpush1.msra.mxu0 0.0
    %3014 = vmatprep.subr.mxu0 0.0
    %3015 = vmatpush1.msra.mxu0 0.0
    %3016 = vmatprep.subr.mxu0 0.0
    %3017 = vmatpush1.msra.mxu0 0.0
    %3018 = vmatprep.subr.mxu0 0.0
    %3019 = vmatpush1.msra.mxu0 0.0
    %3020 = vmatprep.subr.mxu0 0.0
    %3021 = vmatpush1.msra.mxu0 0.0
    %3022 = vmatprep.subr.mxu0 0.0
    %3023 = vmatpush1.msra.mxu0 0.0
    %3024 = vmatprep.subr.mxu0 0.0
    %3025 = vmatpush1.msra.mxu0 0.0
    %3026 = vmatprep.subr.mxu0 0.0
    %3027 = vmatpush1.msra.mxu0 0.0
    %3028 = vmatprep.subr.mxu0 0.0
    %3029 = vmatpush1.msra.mxu0 0.0
    %3030 = vmatprep.subr.mxu0 0.0
    %3031 = vmatpush1.msra.mxu0 0.0
    %3032 = vmatprep.subr.mxu0 0.0
    %3033 = vmatpush1.msra.mxu0 0.0
    %3034 = vmatprep.subr.mxu0 0.0
    %3035 = vmatpush1.msra.mxu0 0.0
    %3036 = vmatprep.subr.mxu0 0.0
    %3037 = vmatpush1.msra.mxu0 0.0
    %3038 = vmatprep.subr.mxu0 0.0
    %3039 = vmatpush1.msra.mxu0 0.0
    %3040 = vmatprep.subr.mxu0 0.0
    %3041 = vmatpush1.msra.mxu0 0.0
    %3042 = vmatprep.subr.mxu0 0.0
    %3043 = vmatpush1.msra.mxu0 0.0
    %3044 = vmatprep.mubr.f32.mxu0 0.0
    %v3045 = vand.u32 %v984, 4294901760
    %3046 = vmatmul.mubr.f32.gmra.mrb[0].mxu0 %v3045
    %v3047 = vpop.f32.mrb[0].mxu0
    %v3048 = vadd.f32 %v2950, %v3047
    %v3049 = vpop.f32.mrb[0].mxu0
    %3050 = vmatprep.mubr.f32.mxu0 0.0
    %v3051 = vand.u32 %v987, 4294901760
    %3052 = vmatmul.mubr.f32.gmra.mrb[0].mxu0 %v3051
    %v3053 = vpop.f32.mrb[0].mxu0
    %v3054 = vadd.f32 %v2958, %v3053
    %v3055 = vpop.f32.mrb[0].mxu0
    %3056 = vmatprep.mubr.f32.mxu0 0.0
    %v3057 = vand.u32 %v990, 4294901760
    %3058 = vmatmul.mubr.f32.gmra.mrb[0].mxu0 %v3057
    %v3059 = vpop.f32.mrb[0].mxu0
    %v3060 = vadd.f32 %v2966, %v3059
    %v3061 = vpop.f32.mrb[0].mxu0
    %3062 = vmatprep.mubr.f32.mxu0 0.0
    %v3063 = vand.u32 %v993, 4294901760
    %3064 = vmatmul.mubr.f32.gmra.mrb[0].mxu0 %v3063
    %v3065 = vpop.f32.mrb[0].mxu0
    %v3066 = vadd.f32 %v2974, %v3065
    %v3067 = vpop.f32.mrb[0].mxu0
    %3068 = vdwg.mxu0
    %3069 = vmatprep.subr.mxu0 0.0
    %v3070 = vand.u32 %v975, 4294901760
    %3071 = vmatpush1.msra.mxu0 %v3070
    %3072 = vmatprep.subr.mxu0 0.0
    %3073 = vmatpush1.msra.mxu0 0.0
    %3074 = vmatprep.subr.mxu0 0.0
    %3075 = vmatpush1.msra.mxu0 0.0
    %3076 = vmatprep.subr.mxu0 0.0
    %3077 = vmatpush1.msra.mxu0 0.0
    %3078 = vmatprep.subr.mxu0 0.0
    %3079 = vmatpush1.msra.mxu0 0.0
    %3080 = vmatprep.subr.mxu0 0.0
    %3081 = vmatpush1.msra.mxu0 0.0
    %3082 = vmatprep.subr.mxu0 0.0
    %3083 = vmatpush1.msra.mxu0 0.0
    %3084 = vmatprep.subr.mxu0 0.0
    %3085 = vmatpush1.msra.mxu0 0.0
    %3086 = vmatprep.subr.mxu0 0.0
    %3087 = vmatpush1.msra.mxu0 0.0
    %3088 = vmatprep.subr.mxu0 0.0
    %3089 = vmatpush1.msra.mxu0 0.0
    %3090 = vmatprep.subr.mxu0 0.0
    %3091 = vmatpush1.msra.mxu0 0.0
    %3092 = vmatprep.subr.mxu0 0.0
    %3093 = vmatpush1.msra.mxu0 0.0
    %3094 = vmatprep.subr.mxu0 0.0
    %3095 = vmatpush1.msra.mxu0 0.0
    %3096 = vmatprep.subr.mxu0 0.0
    %3097 = vmatpush1.msra.mxu0 0.0
    %3098 = vmatprep.subr.mxu0 0.0
    %3099 = vmatpush1.msra.mxu0 0.0
    %3100 = vmatprep.subr.mxu0 0.0
    %3101 = vmatpush1.msra.mxu0 0.0
    %3102 = vmatprep.subr.mxu0 0.0
    %3103 = vmatpush1.msra.mxu0 0.0
    %3104 = vmatprep.subr.mxu0 0.0
    %3105 = vmatpush1.msra.mxu0 0.0
    %3106 = vmatprep.subr.mxu0 0.0
    %3107 = vmatpush1.msra.mxu0 0.0
    %3108 = vmatprep.subr.mxu0 0.0
    %3109 = vmatpush1.msra.mxu0 0.0
    %3110 = vmatprep.subr.mxu0 0.0
    %3111 = vmatpush1.msra.mxu0 0.0
    %3112 = vmatprep.subr.mxu0 0.0
    %3113 = vmatpush1.msra.mxu0 0.0
    %3114 = vmatprep.subr.mxu0 0.0
    %3115 = vmatpush1.msra.mxu0 0.0
    %3116 = vmatprep.subr.mxu0 0.0
    %3117 = vmatpush1.msra.mxu0 0.0
    %3118 = vmatprep.subr.mxu0 0.0
    %3119 = vmatpush1.msra.mxu0 0.0
    %3120 = vmatprep.subr.mxu0 0.0
    %3121 = vmatpush1.msra.mxu0 0.0
    %3122 = vmatprep.subr.mxu0 0.0
    %3123 = vmatpush1.msra.mxu0 0.0
    %3124 = vmatprep.subr.mxu0 0.0
    %3125 = vmatpush1.msra.mxu0 0.0
    %3126 = vmatprep.subr.mxu0 0.0
    %3127 = vmatpush1.msra.mxu0 0.0
    %3128 = vmatprep.subr.mxu0 0.0
    %3129 = vmatpush1.msra.mxu0 0.0
    %3130 = vmatprep.subr.mxu0 0.0
    %3131 = vmatpush1.msra.mxu0 0.0
    %3132 = vmatprep.subr.mxu0 0.0
    %3133 = vmatpush1.msra.mxu0 0.0
    %3134 = vmatprep.mubr.f32.mxu0 0.0
    %v3135 = vand.u32 %v984, 4294901760
    %3136 = vmatmul.mubr.f32.gmra.mrb[0].mxu0 %v3135
    %v3137 = vpop.f32.mrb[0].mxu0
    %v3138 = vadd.f32 %v3048, %v3137
    %v3139 = vpop.f32.mrb[0].mxu0
    %3140 = vmatprep.mubr.f32.mxu0 0.0
    %v3141 = vand.u32 %v987, 4294901760
    %3142 = vmatmul.mubr.f32.gmra.mrb[0].mxu0 %v3141
    %v3143 = vpop.f32.mrb[0].mxu0
    %v3144 = vadd.f32 %v3054, %v3143
    %v3145 = vpop.f32.mrb[0].mxu0
    %3146 = vmatprep.mubr.f32.mxu0 0.0
    %v3147 = vand.u32 %v990, 4294901760
    %3148 = vmatmul.mubr.f32.gmra.mrb[0].mxu0 %v3147
    %v3149 = vpop.f32.mrb[0].mxu0
    %v3150 = vadd.f32 %v3060, %v3149
    %v3151 = vpop.f32.mrb[0].mxu0
    %3152 = vmatprep.mubr.f32.mxu0 0.0
    %v3153 = vand.u32 %v993, 4294901760
    %3154 = vmatmul.mubr.f32.gmra.mrb[0].mxu0 %v3153
    %v3155 = vpop.f32.mrb[0].mxu0
    %v3156 = vadd.f32 %v3066, %v3155
    %v3157 = vpop.f32.mrb[0].mxu0
    %3158 = vdwg.mxu0
    %v3160 = vsel %vm1574, %v3144, 0
    %3162 = vmatprep.subr.mxu0 0.0
    %v3163 = vand.u32 %v1570, 4294901760
    %3164 = vmatpush1.msra.mxu0 %v3163
    %3165 = vmatprep.subr.mxu0 0.0
    %v3166 = vand.u32 %v1571, 4294901760
    %3167 = vmatpush1.msra.mxu0 %v3166
    %3168 = vmatprep.subr.mxu0 0.0
    %v3169 = vand.u32 %v1572, 4294901760
    %3170 = vmatpush1.msra.mxu0 %v3169
    %3171 = vmatprep.subr.mxu0 0.0
    %v3172 = vand.u32 %v1580, 4294901760
    %3173 = vmatpush1.msra.mxu0 %v3172
    %3174 = vmatprep.subr.mxu0 0.0
    %3175 = vmatpush1.msra.mxu0 0.0
    %3176 = vmatprep.subr.mxu0 0.0
    %3177 = vmatpush1.msra.mxu0 0.0
    %3178 = vmatprep.subr.mxu0 0.0
    %3179 = vmatpush1.msra.mxu0 0.0
    %3180 = vmatprep.subr.mxu0 0.0
    %3181 = vmatpush1.msra.mxu0 0.0
    %3182 = vmatprep.subr.mxu0 0.0
    %3183 = vmatpush1.msra.mxu0 0.0
    %3184 = vmatprep.subr.mxu0 0.0
    %3185 = vmatpush1.msra.mxu0 0.0
    %3186 = vmatprep.subr.mxu0 0.0
    %3187 = vmatpush1.msra.mxu0 0.0
    %3188 = vmatprep.subr.mxu0 0.0
    %3189 = vmatpush1.msra.mxu0 0.0
    %3190 = vmatprep.subr.mxu0 0.0
    %3191 = vmatpush1.msra.mxu0 0.0
    %3192 = vmatprep.subr.mxu0 0.0
    %3193 = vmatpush1.msra.mxu0 0.0
    %3194 = vmatprep.subr.mxu0 0.0
    %3195 = vmatpush1.msra.mxu0 0.0
    %3196 = vmatprep.subr.mxu0 0.0
    %3197 = vmatpush1.msra.mxu0 0.0
    %3198 = vmatprep.subr.mxu0 0.0
    %3199 = vmatpush1.msra.mxu0 0.0
    %3200 = vmatprep.subr.mxu0 0.0
    %3201 = vmatpush1.msra.mxu0 0.0
    %3202 = vmatprep.subr.mxu0 0.0
    %3203 = vmatpush1.msra.mxu0 0.0
    %3204 = vmatprep.subr.mxu0 0.0
    %3205 = vmatpush1.msra.mxu0 0.0
    %3206 = vmatprep.subr.mxu0 0.0
    %3207 = vmatpush1.msra.mxu0 0.0
    %3208 = vmatprep.subr.mxu0 0.0
    %3209 = vmatpush1.msra.mxu0 0.0
    %3210 = vmatprep.subr.mxu0 0.0
    %3211 = vmatpush1.msra.mxu0 0.0
    %3212 = vmatprep.subr.mxu0 0.0
    %3213 = vmatpush1.msra.mxu0 0.0
    %3214 = vmatprep.subr.mxu0 0.0
    %3215 = vmatpush1.msra.mxu0 0.0
    %3216 = vmatprep.subr.mxu0 0.0
    %3217 = vmatpush1.msra.mxu0 0.0
    %3218 = vmatprep.subr.mxu0 0.0
    %3219 = vmatpush1.msra.mxu0 0.0
    %3220 = vmatprep.subr.mxu0 0.0
    %3221 = vmatpush1.msra.mxu0 0.0
    %3222 = vmatprep.subr.mxu0 0.0
    %3223 = vmatpush1.msra.mxu0 0.0
    %3224 = vmatprep.subr.mxu0 0.0
    %3225 = vmatpush1.msra.mxu0 0.0
    %3226 = vmatprep.subr.mxu0 0.0
    %3227 = vmatpush1.msra.mxu0 0.0
    %3228 = vmatprep.subr.mxu0 0.0
    %3229 = vmatpush1.msra.mxu0 0.0
    %3230 = vmatprep.mubr.f32.mxu0 0.0
    %v3231 = vand.u32 %v3160, 4294901760
    %v3232 = vsub.f32 %v3160, %v3231
    %v3233 = vand.u32 %v3232, 4294901760
    %v3234 = vsub.f32 %v3232, %v3233
    %v3235 = vand.u32 %v3234, 4294901760
    %3236 = vmatmul.mubr.f32.gmra.mrb[0].mxu0 %v3235
    %v3237 = vpop.f32.mrb[0].mxu0
    %v3238 = vadd.f32 0.0, %v3237
    %v3239 = vpop.f32.mrb[0].mxu0
    %3240 = vdwg.mxu0
    %3241 = vmatprep.subr.mxu0 0.0
    %v3242 = vand.u32 %v1570, 4294901760
    %v3243 = vsub.f32 %v1570, %v3242
    %v3244 = vand.u32 %v3243, 4294901760
    %v3245 = vsub.f32 %v3243, %v3244
    %v3246 = vand.u32 %v3245, 4294901760
    %3247 = vmatpush1.msra.mxu0 %v3246
    %3248 = vmatprep.subr.mxu0 0.0
    %v3249 = vand.u32 %v1571, 4294901760
    %v3250 = vsub.f32 %v1571, %v3249
    %v3251 = vand.u32 %v3250, 4294901760
    %v3252 = vsub.f32 %v3250, %v3251
    %v3253 = vand.u32 %v3252, 4294901760
    %3254 = vmatpush1.msra.mxu0 %v3253
    %3255 = vmatprep.subr.mxu0 0.0
    %v3256 = vand.u32 %v1572, 4294901760
    %v3257 = vsub.f32 %v1572, %v3256
    %v3258 = vand.u32 %v3257, 4294901760
    %v3259 = vsub.f32 %v3257, %v3258
    %v3260 = vand.u32 %v3259, 4294901760
    %3261 = vmatpush1.msra.mxu0 %v3260
    %3262 = vmatprep.subr.mxu0 0.0
    %v3263 = vand.u32 %v1580, 4294901760
    %v3264 = vsub.f32 %v1580, %v3263
    %v3265 = vand.u32 %v3264, 4294901760
    %v3266 = vsub.f32 %v3264, %v3265
    %v3267 = vand.u32 %v3266, 4294901760
    %3268 = vmatpush1.msra.mxu0 %v3267
    %3269 = vmatprep.subr.mxu0 0.0
    %3270 = vmatpush1.msra.mxu0 0.0
    %3271 = vmatprep.subr.mxu0 0.0
    %3272 = vmatpush1.msra.mxu0 0.0
    %3273 = vmatprep.subr.mxu0 0.0
    %3274 = vmatpush1.msra.mxu0 0.0
    %3275 = vmatprep.subr.mxu0 0.0
    %3276 = vmatpush1.msra.mxu0 0.0
    %3277 = vmatprep.subr.mxu0 0.0
    %3278 = vmatpush1.msra.mxu0 0.0
    %3279 = vmatprep.subr.mxu0 0.0
    %3280 = vmatpush1.msra.mxu0 0.0
    %3281 = vmatprep.subr.mxu0 0.0
    %3282 = vmatpush1.msra.mxu0 0.0
    %3283 = vmatprep.subr.mxu0 0.0
    %3284 = vmatpush1.msra.mxu0 0.0
    %3285 = vmatprep.subr.mxu0 0.0
    %3286 = vmatpush1.msra.mxu0 0.0
    %3287 = vmatprep.subr.mxu0 0.0
    %3288 = vmatpush1.msra.mxu0 0.0
    %3289 = vmatprep.subr.mxu0 0.0
    %3290 = vmatpush1.msra.mxu0 0.0
    %3291 = vmatprep.subr.mxu0 0.0
    %3292 = vmatpush1.msra.mxu0 0.0
    %3293 = vmatprep.subr.mxu0 0.0
    %3294 = vmatpush1.msra.mxu0 0.0
    %3295 = vmatprep.subr.mxu0 0.0
    %3296 = vmatpush1.msra.mxu0 0.0
    %3297 = vmatprep.subr.mxu0 0.0
    %3298 = vmatpush1.msra.mxu0 0.0
    %3299 = vmatprep.subr.mxu0 0.0
    %3300 = vmatpush1.msra.mxu0 0.0
    %3301 = vmatprep.subr.mxu0 0.0
    %3302 = vmatpush1.msra.mxu0 0.0
    %3303 = vmatprep.subr.mxu0 0.0
    %3304 = vmatpush1.msra.mxu0 0.0
    %3305 = vmatprep.subr.mxu0 0.0
    %3306 = vmatpush1.msra.mxu0 0.0
    %3307 = vmatprep.subr.mxu0 0.0
    %3308 = vmatpush1.msra.mxu0 0.0
    %3309 = vmatprep.subr.mxu0 0.0
    %3310 = vmatpush1.msra.mxu0 0.0
    %3311 = vmatprep.subr.mxu0 0.0
    %3312 = vmatpush1.msra.mxu0 0.0
    %3313 = vmatprep.subr.mxu0 0.0
    %3314 = vmatpush1.msra.mxu0 0.0
    %3315 = vmatprep.subr.mxu0 0.0
    %3316 = vmatpush1.msra.mxu0 0.0
    %3317 = vmatprep.subr.mxu0 0.0
    %3318 = vmatpush1.msra.mxu0 0.0
    %3319 = vmatprep.subr.mxu0 0.0
    %3320 = vmatpush1.msra.mxu0 0.0
    %3321 = vmatprep.subr.mxu0 0.0
    %3322 = vmatpush1.msra.mxu0 0.0
    %3323 = vmatprep.subr.mxu0 0.0
    %3324 = vmatpush1.msra.mxu0 0.0
    %3325 = vmatprep.mubr.f32.mxu0 0.0
    %v3326 = vand.u32 %v3160, 4294901760
    %3327 = vmatmul.mubr.f32.gmra.mrb[0].mxu0 %v3326
    %v3328 = vpop.f32.mrb[0].mxu0
    %v3329 = vadd.f32 %v3238, %v3328
    %v3330 = vpop.f32.mrb[0].mxu0
    %3331 = vdwg.mxu0
    %3332 = vmatprep.subr.mxu0 0.0
    %v3333 = vand.u32 %v1570, 4294901760
    %v3334 = vsub.f32 %v1570, %v3333
    %3335 = vmatpush1.msra.mxu0 %v3334
    %3336 = vmatprep.subr.mxu0 0.0
    %v3337 = vand.u32 %v1571, 4294901760
    %v3338 = vsub.f32 %v1571, %v3337
    %3339 = vmatpush1.msra.mxu0 %v3338
    %3340 = vmatprep.subr.mxu0 0.0
    %v3341 = vand.u32 %v1572, 4294901760
    %v3342 = vsub.f32 %v1572, %v3341
    %3343 = vmatpush1.msra.mxu0 %v3342
    %3344 = vmatprep.subr.mxu0 0.0
    %v3345 = vand.u32 %v1580, 4294901760
    %v3346 = vsub.f32 %v1580, %v3345
    %3347 = vmatpush1.msra.mxu0 %v3346
    %3348 = vmatprep.subr.mxu0 0.0
    %3349 = vmatpush1.msra.mxu0 0.0
    %3350 = vmatprep.subr.mxu0 0.0
    %3351 = vmatpush1.msra.mxu0 0.0
    %3352 = vmatprep.subr.mxu0 0.0
    %3353 = vmatpush1.msra.mxu0 0.0
    %3354 = vmatprep.subr.mxu0 0.0
    %3355 = vmatpush1.msra.mxu0 0.0
    %3356 = vmatprep.subr.mxu0 0.0
    %3357 = vmatpush1.msra.mxu0 0.0
    %3358 = vmatprep.subr.mxu0 0.0
    %3359 = vmatpush1.msra.mxu0 0.0
    %3360 = vmatprep.subr.mxu0 0.0
    %3361 = vmatpush1.msra.mxu0 0.0
    %3362 = vmatprep.subr.mxu0 0.0
    %3363 = vmatpush1.msra.mxu0 0.0
    %3364 = vmatprep.subr.mxu0 0.0
    %3365 = vmatpush1.msra.mxu0 0.0
    %3366 = vmatprep.subr.mxu0 0.0
    %3367 = vmatpush1.msra.mxu0 0.0
    %3368 = vmatprep.subr.mxu0 0.0
    %3369 = vmatpush1.msra.mxu0 0.0
    %3370 = vmatprep.subr.mxu0 0.0
    %3371 = vmatpush1.msra.mxu0 0.0
    %3372 = vmatprep.subr.mxu0 0.0
    %3373 = vmatpush1.msra.mxu0 0.0
    %3374 = vmatprep.subr.mxu0 0.0
    %3375 = vmatpush1.msra.mxu0 0.0
    %3376 = vmatprep.subr.mxu0 0.0
    %3377 = vmatpush1.msra.mxu0 0.0
    %3378 = vmatprep.subr.mxu0 0.0
    %3379 = vmatpush1.msra.mxu0 0.0
    %3380 = vmatprep.subr.mxu0 0.0
    %3381 = vmatpush1.msra.mxu0 0.0
    %3382 = vmatprep.subr.mxu0 0.0
    %3383 = vmatpush1.msra.mxu0 0.0
    %3384 = vmatprep.subr.mxu0 0.0
    %3385 = vmatpush1.msra.mxu0 0.0
    %3386 = vmatprep.subr.mxu0 0.0
    %3387 = vmatpush1.msra.mxu0 0.0
    %3388 = vmatprep.subr.mxu0 0.0
    %3389 = vmatpush1.msra.mxu0 0.0
    %3390 = vmatprep.subr.mxu0 0.0
    %3391 = vmatpush1.msra.mxu0 0.0
    %3392 = vmatprep.subr.mxu0 0.0
    %3393 = vmatpush1.msra.mxu0 0.0
    %3394 = vmatprep.subr.mxu0 0.0
    %3395 = vmatpush1.msra.mxu0 0.0
    %3396 = vmatprep.subr.mxu0 0.0
    %3397 = vmatpush1.msra.mxu0 0.0
    %3398 = vmatprep.subr.mxu0 0.0
    %3399 = vmatpush1.msra.mxu0 0.0
    %3400 = vmatprep.subr.mxu0 0.0
    %3401 = vmatpush1.msra.mxu0 0.0
    %3402 = vmatprep.subr.mxu0 0.0
    %3403 = vmatpush1.msra.mxu0 0.0
    %3404 = vmatprep.mubr.f32.mxu0 0.0
    %v3405 = vand.u32 %v3160, 4294901760
    %v3406 = vsub.f32 %v3160, %v3405
    %3407 = vmatmul.mubr.f32.gmra.mrb[0].mxu0 %v3406
    %v3408 = vpop.f32.mrb[0].mxu0
    %v3409 = vadd.f32 %v3329, %v3408
    %v3410 = vpop.f32.mrb[0].mxu0
    %3411 = vdwg.mxu0
    %3412 = vmatprep.subr.mxu0 0.0
    %v3413 = vand.u32 %v1570, 4294901760
    %3414 = vmatpush1.msra.mxu0 %v3413
    %3415 = vmatprep.subr.mxu0 0.0
    %v3416 = vand.u32 %v1571, 4294901760
    %3417 = vmatpush1.msra.mxu0 %v3416
    %3418 = vmatprep.subr.mxu0 0.0
    %v3419 = vand.u32 %v1572, 4294901760
    %3420 = vmatpush1.msra.mxu0 %v3419
    %3421 = vmatprep.subr.mxu0 0.0
    %v3422 = vand.u32 %v1580, 4294901760
    %3423 = vmatpush1.msra.mxu0 %v3422
    %3424 = vmatprep.subr.mxu0 0.0
    %3425 = vmatpush1.msra.mxu0 0.0
    %3426 = vmatprep.subr.mxu0 0.0
    %3427 = vmatpush1.msra.mxu0 0.0
    %3428 = vmatprep.subr.mxu0 0.0
    %3429 = vmatpush1.msra.mxu0 0.0
    %3430 = vmatprep.subr.mxu0 0.0
    %3431 = vmatpush1.msra.mxu0 0.0
    %3432 = vmatprep.subr.mxu0 0.0
    %3433 = vmatpush1.msra.mxu0 0.0
    %3434 = vmatprep.subr.mxu0 0.0
    %3435 = vmatpush1.msra.mxu0 0.0
    %3436 = vmatprep.subr.mxu0 0.0
    %3437 = vmatpush1.msra.mxu0 0.0
    %3438 = vmatprep.subr.mxu0 0.0
    %3439 = vmatpush1.msra.mxu0 0.0
    %3440 = vmatprep.subr.mxu0 0.0
    %3441 = vmatpush1.msra.mxu0 0.0
    %3442 = vmatprep.subr.mxu0 0.0
    %3443 = vmatpush1.msra.mxu0 0.0
    %3444 = vmatprep.subr.mxu0 0.0
    %3445 = vmatpush1.msra.mxu0 0.0
    %3446 = vmatprep.subr.mxu0 0.0
    %3447 = vmatpush1.msra.mxu0 0.0
    %3448 = vmatprep.subr.mxu0 0.0
    %3449 = vmatpush1.msra.mxu0 0.0
    %3450 = vmatprep.subr.mxu0 0.0
    %3451 = vmatpush1.msra.mxu0 0.0
    %3452 = vmatprep.subr.mxu0 0.0
    %3453 = vmatpush1.msra.mxu0 0.0
    %3454 = vmatprep.subr.mxu0 0.0
    %3455 = vmatpush1.msra.mxu0 0.0
    %3456 = vmatprep.subr.mxu0 0.0
    %3457 = vmatpush1.msra.mxu0 0.0
    %3458 = vmatprep.subr.mxu0 0.0
    %3459 = vmatpush1.msra.mxu0 0.0
    %3460 = vmatprep.subr.mxu0 0.0
    %3461 = vmatpush1.msra.mxu0 0.0
    %3462 = vmatprep.subr.mxu0 0.0
    %3463 = vmatpush1.msra.mxu0 0.0
    %3464 = vmatprep.subr.mxu0 0.0
    %3465 = vmatpush1.msra.mxu0 0.0
    %3466 = vmatprep.subr.mxu0 0.0
    %3467 = vmatpush1.msra.mxu0 0.0
    %3468 = vmatprep.subr.mxu0 0.0
    %3469 = vmatpush1.msra.mxu0 0.0
    %3470 = vmatprep.subr.mxu0 0.0
    %3471 = vmatpush1.msra.mxu0 0.0
    %3472 = vmatprep.subr.mxu0 0.0
    %3473 = vmatpush1.msra.mxu0 0.0
    %3474 = vmatprep.subr.mxu0 0.0
    %3475 = vmatpush1.msra.mxu0 0.0
    %3476 = vmatprep.subr.mxu0 0.0
    %3477 = vmatpush1.msra.mxu0 0.0
    %3478 = vmatprep.subr.mxu0 0.0
    %3479 = vmatpush1.msra.mxu0 0.0
    %3480 = vmatprep.mubr.f32.mxu0 0.0
    %v3481 = vand.u32 %v3160, 4294901760
    %v3482 = vsub.f32 %v3160, %v3481
    %v3483 = vand.u32 %v3482, 4294901760
    %3484 = vmatmul.mubr.f32.gmra.mrb[0].mxu0 %v3483
    %v3485 = vpop.f32.mrb[0].mxu0
    %v3486 = vadd.f32 %v3409, %v3485
    %v3487 = vpop.f32.mrb[0].mxu0
    %3488 = vdwg.mxu0
    %3489 = vmatprep.subr.mxu0 0.0
    %v3490 = vand.u32 %v1570, 4294901760
    %v3491 = vsub.f32 %v1570, %v3490
    %v3492 = vand.u32 %v3491, 4294901760
    %3493 = vmatpush1.msra.mxu0 %v3492
    %3494 = vmatprep.subr.mxu0 0.0
    %v3495 = vand.u32 %v1571, 4294901760
    %v3496 = vsub.f32 %v1571, %v3495
    %v3497 = vand.u32 %v3496, 4294901760
    %3498 = vmatpush1.msra.mxu0 %v3497
    %3499 = vmatprep.subr.mxu0 0.0
    %v3500 = vand.u32 %v1572, 4294901760
    %v3501 = vsub.f32 %v1572, %v3500
    %v3502 = vand.u32 %v3501, 4294901760
    %3503 = vmatpush1.msra.mxu0 %v3502
    %3504 = vmatprep.subr.mxu0 0.0
    %v3505 = vand.u32 %v1580, 4294901760
    %v3506 = vsub.f32 %v1580, %v3505
    %v3507 = vand.u32 %v3506, 4294901760
    %3508 = vmatpush1.msra.mxu0 %v3507
    %3509 = vmatprep.subr.mxu0 0.0
    %3510 = vmatpush1.msra.mxu0 0.0
    %3511 = vmatprep.subr.mxu0 0.0
    %3512 = vmatpush1.msra.mxu0 0.0
    %3513 = vmatprep.subr.mxu0 0.0
    %3514 = vmatpush1.msra.mxu0 0.0
    %3515 = vmatprep.subr.mxu0 0.0
    %3516 = vmatpush1.msra.mxu0 0.0
    %3517 = vmatprep.subr.mxu0 0.0
    %3518 = vmatpush1.msra.mxu0 0.0
    %3519 = vmatprep.subr.mxu0 0.0
    %3520 = vmatpush1.msra.mxu0 0.0
    %3521 = vmatprep.subr.mxu0 0.0
    %3522 = vmatpush1.msra.mxu0 0.0
    %3523 = vmatprep.subr.mxu0 0.0
    %3524 = vmatpush1.msra.mxu0 0.0
    %3525 = vmatprep.subr.mxu0 0.0
    %3526 = vmatpush1.msra.mxu0 0.0
    %3527 = vmatprep.subr.mxu0 0.0
    %3528 = vmatpush1.msra.mxu0 0.0
    %3529 = vmatprep.subr.mxu0 0.0
    %3530 = vmatpush1.msra.mxu0 0.0
    %3531 = vmatprep.subr.mxu0 0.0
    %3532 = vmatpush1.msra.mxu0 0.0
    %3533 = vmatprep.subr.mxu0 0.0
    %3534 = vmatpush1.msra.mxu0 0.0
    %3535 = vmatprep.subr.mxu0 0.0
    %3536 = vmatpush1.msra.mxu0 0.0
    %3537 = vmatprep.subr.mxu0 0.0
    %3538 = vmatpush1.msra.mxu0 0.0
    %3539 = vmatprep.subr.mxu0 0.0
    %3540 = vmatpush1.msra.mxu0 0.0
    %3541 = vmatprep.subr.mxu0 0.0
    %3542 = vmatpush1.msra.mxu0 0.0
    %3543 = vmatprep.subr.mxu0 0.0
    %3544 = vmatpush1.msra.mxu0 0.0
    %3545 = vmatprep.subr.mxu0 0.0
    %3546 = vmatpush1.msra.mxu0 0.0
    %3547 = vmatprep.subr.mxu0 0.0
    %3548 = vmatpush1.msra.mxu0 0.0
    %3549 = vmatprep.subr.mxu0 0.0
    %3550 = vmatpush1.msra.mxu0 0.0
    %3551 = vmatprep.subr.mxu0 0.0
    %3552 = vmatpush1.msra.mxu0 0.0
    %3553 = vmatprep.subr.mxu0 0.0
    %3554 = vmatpush1.msra.mxu0 0.0
    %3555 = vmatprep.subr.mxu0 0.0
    %3556 = vmatpush1.msra.mxu0 0.0
    %3557 = vmatprep.subr.mxu0 0.0
    %3558 = vmatpush1.msra.mxu0 0.0
    %3559 = vmatprep.subr.mxu0 0.0
    %3560 = vmatpush1.msra.mxu0 0.0
    %3561 = vmatprep.subr.mxu0 0.0
    %3562 = vmatpush1.msra.mxu0 0.0
    %3563 = vmatprep.subr.mxu0 0.0
    %3564 = vmatpush1.msra.mxu0 0.0
    %3565 = vmatprep.mubr.f32.mxu0 0.0
    %v3566 = vand.u32 %v3160, 4294901760
    %3567 = vmatmul.mubr.f32.gmra.mrb[0].mxu0 %v3566
    %v3568 = vpop.f32.mrb[0].mxu0
    %v3569 = vadd.f32 %v3486, %v3568
    %v3570 = vpop.f32.mrb[0].mxu0
    %3571 = vdwg.mxu0
    %3572 = vmatprep.subr.mxu0 0.0
    %v3573 = vand.u32 %v1570, 4294901760
    %3574 = vmatpush1.msra.mxu0 %v3573
    %3575 = vmatprep.subr.mxu0 0.0
    %v3576 = vand.u32 %v1571, 4294901760
    %3577 = vmatpush1.msra.mxu0 %v3576
    %3578 = vmatprep.subr.mxu0 0.0
    %v3579 = vand.u32 %v1572, 4294901760
    %3580 = vmatpush1.msra.mxu0 %v3579
    %3581 = vmatprep.subr.mxu0 0.0
    %v3582 = vand.u32 %v1580, 4294901760
    %3583 = vmatpush1.msra.mxu0 %v3582
    %3584 = vmatprep.subr.mxu0 0.0
    %3585 = vmatpush1.msra.mxu0 0.0
    %3586 = vmatprep.subr.mxu0 0.0
    %3587 = vmatpush1.msra.mxu0 0.0
    %3588 = vmatprep.subr.mxu0 0.0
    %3589 = vmatpush1.msra.mxu0 0.0
    %3590 = vmatprep.subr.mxu0 0.0
    %3591 = vmatpush1.msra.mxu0 0.0
    %3592 = vmatprep.subr.mxu0 0.0
    %3593 = vmatpush1.msra.mxu0 0.0
    %3594 = vmatprep.subr.mxu0 0.0
    %3595 = vmatpush1.msra.mxu0 0.0
    %3596 = vmatprep.subr.mxu0 0.0
    %3597 = vmatpush1.msra.mxu0 0.0
    %3598 = vmatprep.subr.mxu0 0.0
    %3599 = vmatpush1.msra.mxu0 0.0
    %3600 = vmatprep.subr.mxu0 0.0
    %3601 = vmatpush1.msra.mxu0 0.0
    %3602 = vmatprep.subr.mxu0 0.0
    %3603 = vmatpush1.msra.mxu0 0.0
    %3604 = vmatprep.subr.mxu0 0.0
    %3605 = vmatpush1.msra.mxu0 0.0
    %3606 = vmatprep.subr.mxu0 0.0
    %3607 = vmatpush1.msra.mxu0 0.0
    %3608 = vmatprep.subr.mxu0 0.0
    %3609 = vmatpush1.msra.mxu0 0.0
    %3610 = vmatprep.subr.mxu0 0.0
    %3611 = vmatpush1.msra.mxu0 0.0
    %3612 = vmatprep.subr.mxu0 0.0
    %3613 = vmatpush1.msra.mxu0 0.0
    %3614 = vmatprep.subr.mxu0 0.0
    %3615 = vmatpush1.msra.mxu0 0.0
    %3616 = vmatprep.subr.mxu0 0.0
    %3617 = vmatpush1.msra.mxu0 0.0
    %3618 = vmatprep.subr.mxu0 0.0
    %3619 = vmatpush1.msra.mxu0 0.0
    %3620 = vmatprep.subr.mxu0 0.0
    %3621 = vmatpush1.msra.mxu0 0.0
    %3622 = vmatprep.subr.mxu0 0.0
    %3623 = vmatpush1.msra.mxu0 0.0
    %3624 = vmatprep.subr.mxu0 0.0
    %3625 = vmatpush1.msra.mxu0 0.0
    %3626 = vmatprep.subr.mxu0 0.0
    %3627 = vmatpush1.msra.mxu0 0.0
    %3628 = vmatprep.subr.mxu0 0.0
    %3629 = vmatpush1.msra.mxu0 0.0
    %3630 = vmatprep.subr.mxu0 0.0
    %3631 = vmatpush1.msra.mxu0 0.0
    %3632 = vmatprep.subr.mxu0 0.0
    %3633 = vmatpush1.msra.mxu0 0.0
    %3634 = vmatprep.subr.mxu0 0.0
    %3635 = vmatpush1.msra.mxu0 0.0
    %3636 = vmatprep.subr.mxu0 0.0
    %3637 = vmatpush1.msra.mxu0 0.0
    %3638 = vmatprep.subr.mxu0 0.0
    %3639 = vmatpush1.msra.mxu0 0.0
    %3640 = vmatprep.mubr.f32.mxu0 0.0
    %v3641 = vand.u32 %v3160, 4294901760
    %3642 = vmatmul.mubr.f32.gmra.mrb[0].mxu0 %v3641
    %v3643 = vpop.f32.mrb[0].mxu0
    %v3644 = vadd.f32 %v3569, %v3643
    %v3645 = vpop.f32.mrb[0].mxu0
    %3646 = vdwg.mxu0
    %v3647 = vadd.f32 %v3138, %v3644
    %v3649 = vsel %vm1574, %v3150, 0
    %3651 = vmatprep.subr.mxu0 0.0
    %v3652 = vand.u32 %v2068, 4294901760
    %3653 = vmatpush1.msra.mxu0 %v3652
    %3654 = vmatprep.subr.mxu0 0.0
    %v3655 = vand.u32 %v2069, 4294901760
    %3656 = vmatpush1.msra.mxu0 %v3655
    %3657 = vmatprep.subr.mxu0 0.0
    %v3658 = vand.u32 %v2070, 4294901760
    %3659 = vmatpush1.msra.mxu0 %v3658
    %3660 = vmatprep.subr.mxu0 0.0
    %v3661 = vand.u32 %v2076, 4294901760
    %3662 = vmatpush1.msra.mxu0 %v3661
    %3663 = vmatprep.subr.mxu0 0.0
    %3664 = vmatpush1.msra.mxu0 0.0
    %3665 = vmatprep.subr.mxu0 0.0
    %3666 = vmatpush1.msra.mxu0 0.0
    %3667 = vmatprep.subr.mxu0 0.0
    %3668 = vmatpush1.msra.mxu0 0.0
    %3669 = vmatprep.subr.mxu0 0.0
    %3670 = vmatpush1.msra.mxu0 0.0
    %3671 = vmatprep.subr.mxu0 0.0
    %3672 = vmatpush1.msra.mxu0 0.0
    %3673 = vmatprep.subr.mxu0 0.0
    %3674 = vmatpush1.msra.mxu0 0.0
    %3675 = vmatprep.subr.mxu0 0.0
    %3676 = vmatpush1.msra.mxu0 0.0
    %3677 = vmatprep.subr.mxu0 0.0
    %3678 = vmatpush1.msra.mxu0 0.0
    %3679 = vmatprep.subr.mxu0 0.0
    %3680 = vmatpush1.msra.mxu0 0.0
    %3681 = vmatprep.subr.mxu0 0.0
    %3682 = vmatpush1.msra.mxu0 0.0
    %3683 = vmatprep.subr.mxu0 0.0
    %3684 = vmatpush1.msra.mxu0 0.0
    %3685 = vmatprep.subr.mxu0 0.0
    %3686 = vmatpush1.msra.mxu0 0.0
    %3687 = vmatprep.subr.mxu0 0.0
    %3688 = vmatpush1.msra.mxu0 0.0
    %3689 = vmatprep.subr.mxu0 0.0
    %3690 = vmatpush1.msra.mxu0 0.0
    %3691 = vmatprep.subr.mxu0 0.0
    %3692 = vmatpush1.msra.mxu0 0.0
    %3693 = vmatprep.subr.mxu0 0.0
    %3694 = vmatpush1.msra.mxu0 0.0
    %3695 = vmatprep.subr.mxu0 0.0
    %3696 = vmatpush1.msra.mxu0 0.0
    %3697 = vmatprep.subr.mxu0 0.0
    %3698 = vmatpush1.msra.mxu0 0.0
    %3699 = vmatprep.subr.mxu0 0.0
    %3700 = vmatpush1.msra.mxu0 0.0
    %3701 = vmatprep.subr.mxu0 0.0
    %3702 = vmatpush1.msra.mxu0 0.0
    %3703 = vmatprep.subr.mxu0 0.0
    %3704 = vmatpush1.msra.mxu0 0.0
    %3705 = vmatprep.subr.mxu0 0.0
    %3706 = vmatpush1.msra.mxu0 0.0
    %3707 = vmatprep.subr.mxu0 0.0
    %3708 = vmatpush1.msra.mxu0 0.0
    %3709 = vmatprep.subr.mxu0 0.0
    %3710 = vmatpush1.msra.mxu0 0.0
    %3711 = vmatprep.subr.mxu0 0.0
    %3712 = vmatpush1.msra.mxu0 0.0
    %3713 = vmatprep.subr.mxu0 0.0
    %3714 = vmatpush1.msra.mxu0 0.0
    %3715 = vmatprep.subr.mxu0 0.0
    %3716 = vmatpush1.msra.mxu0 0.0
    %3717 = vmatprep.subr.mxu0 0.0
    %3718 = vmatpush1.msra.mxu0 0.0
    %3719 = vmatprep.mubr.f32.mxu0 0.0
    %v3720 = vand.u32 %v3649, 4294901760
    %v3721 = vsub.f32 %v3649, %v3720
    %v3722 = vand.u32 %v3721, 4294901760
    %v3723 = vsub.f32 %v3721, %v3722
    %v3724 = vand.u32 %v3723, 4294901760
    %3725 = vmatmul.mubr.f32.gmra.mrb[0].mxu0 %v3724
    %v3726 = vpop.f32.mrb[0].mxu0
    %v3727 = vadd.f32 0.0, %v3726
    %v3728 = vpop.f32.mrb[0].mxu0
    %3729 = vdwg.mxu0
    %3730 = vmatprep.subr.mxu0 0.0
    %v3731 = vand.u32 %v2068, 4294901760
    %v3732 = vsub.f32 %v2068, %v3731
    %v3733 = vand.u32 %v3732, 4294901760
    %v3734 = vsub.f32 %v3732, %v3733
    %v3735 = vand.u32 %v3734, 4294901760
    %3736 = vmatpush1.msra.mxu0 %v3735
    %3737 = vmatprep.subr.mxu0 0.0
    %v3738 = vand.u32 %v2069, 4294901760
    %v3739 = vsub.f32 %v2069, %v3738
    %v3740 = vand.u32 %v3739, 4294901760
    %v3741 = vsub.f32 %v3739, %v3740
    %v3742 = vand.u32 %v3741, 4294901760
    %3743 = vmatpush1.msra.mxu0 %v3742
    %3744 = vmatprep.subr.mxu0 0.0
    %v3745 = vand.u32 %v2070, 4294901760
    %v3746 = vsub.f32 %v2070, %v3745
    %v3747 = vand.u32 %v3746, 4294901760
    %v3748 = vsub.f32 %v3746, %v3747
    %v3749 = vand.u32 %v3748, 4294901760
    %3750 = vmatpush1.msra.mxu0 %v3749
    %3751 = vmatprep.subr.mxu0 0.0
    %v3752 = vand.u32 %v2076, 4294901760
    %v3753 = vsub.f32 %v2076, %v3752
    %v3754 = vand.u32 %v3753, 4294901760
    %v3755 = vsub.f32 %v3753, %v3754
    %v3756 = vand.u32 %v3755, 4294901760
    %3757 = vmatpush1.msra.mxu0 %v3756
    %3758 = vmatprep.subr.mxu0 0.0
    %3759 = vmatpush1.msra.mxu0 0.0
    %3760 = vmatprep.subr.mxu0 0.0
    %3761 = vmatpush1.msra.mxu0 0.0
    %3762 = vmatprep.subr.mxu0 0.0
    %3763 = vmatpush1.msra.mxu0 0.0
    %3764 = vmatprep.subr.mxu0 0.0
    %3765 = vmatpush1.msra.mxu0 0.0
    %3766 = vmatprep.subr.mxu0 0.0
    %3767 = vmatpush1.msra.mxu0 0.0
    %3768 = vmatprep.subr.mxu0 0.0
    %3769 = vmatpush1.msra.mxu0 0.0
    %3770 = vmatprep.subr.mxu0 0.0
    %3771 = vmatpush1.msra.mxu0 0.0
    %3772 = vmatprep.subr.mxu0 0.0
    %3773 = vmatpush1.msra.mxu0 0.0
    %3774 = vmatprep.subr.mxu0 0.0
    %3775 = vmatpush1.msra.mxu0 0.0
    %3776 = vmatprep.subr.mxu0 0.0
    %3777 = vmatpush1.msra.mxu0 0.0
    %3778 = vmatprep.subr.mxu0 0.0
    %3779 = vmatpush1.msra.mxu0 0.0
    %3780 = vmatprep.subr.mxu0 0.0
    %3781 = vmatpush1.msra.mxu0 0.0
    %3782 = vmatprep.subr.mxu0 0.0
    %3783 = vmatpush1.msra.mxu0 0.0
    %3784 = vmatprep.subr.mxu0 0.0
    %3785 = vmatpush1.msra.mxu0 0.0
    %3786 = vmatprep.subr.mxu0 0.0
    %3787 = vmatpush1.msra.mxu0 0.0
    %3788 = vmatprep.subr.mxu0 0.0
    %3789 = vmatpush1.msra.mxu0 0.0
    %3790 = vmatprep.subr.mxu0 0.0
    %3791 = vmatpush1.msra.mxu0 0.0
    %3792 = vmatprep.subr.mxu0 0.0
    %3793 = vmatpush1.msra.mxu0 0.0
    %3794 = vmatprep.subr.mxu0 0.0
    %3795 = vmatpush1.msra.mxu0 0.0
    %3796 = vmatprep.subr.mxu0 0.0
    %3797 = vmatpush1.msra.mxu0 0.0
    %3798 = vmatprep.subr.mxu0 0.0
    %3799 = vmatpush1.msra.mxu0 0.0
    %3800 = vmatprep.subr.mxu0 0.0
    %3801 = vmatpush1.msra.mxu0 0.0
    %3802 = vmatprep.subr.mxu0 0.0
    %3803 = vmatpush1.msra.mxu0 0.0
    %3804 = vmatprep.subr.mxu0 0.0
    %3805 = vmatpush1.msra.mxu0 0.0
    %3806 = vmatprep.subr.mxu0 0.0
    %3807 = vmatpush1.msra.mxu0 0.0
    %3808 = vmatprep.subr.mxu0 0.0
    %3809 = vmatpush1.msra.mxu0 0.0
    %3810 = vmatprep.subr.mxu0 0.0
    %3811 = vmatpush1.msra.mxu0 0.0
    %3812 = vmatprep.subr.mxu0 0.0
    %3813 = vmatpush1.msra.mxu0 0.0
    %3814 = vmatprep.mubr.f32.mxu0 0.0
    %v3815 = vand.u32 %v3649, 4294901760
    %3816 = vmatmul.mubr.f32.gmra.mrb[0].mxu0 %v3815
    %v3817 = vpop.f32.mrb[0].mxu0
    %v3818 = vadd.f32 %v3727, %v3817
    %v3819 = vpop.f32.mrb[0].mxu0
    %3820 = vdwg.mxu0
    %3821 = vmatprep.subr.mxu0 0.0
    %v3822 = vand.u32 %v2068, 4294901760
    %v3823 = vsub.f32 %v2068, %v3822
    %3824 = vmatpush1.msra.mxu0 %v3823
    %3825 = vmatprep.subr.mxu0 0.0
    %v3826 = vand.u32 %v2069, 4294901760
    %v3827 = vsub.f32 %v2069, %v3826
    %3828 = vmatpush1.msra.mxu0 %v3827
    %3829 = vmatprep.subr.mxu0 0.0
    %v3830 = vand.u32 %v2070, 4294901760
    %v3831 = vsub.f32 %v2070, %v3830
    %3832 = vmatpush1.msra.mxu0 %v3831
    %3833 = vmatprep.subr.mxu0 0.0
    %v3834 = vand.u32 %v2076, 4294901760
    %v3835 = vsub.f32 %v2076, %v3834
    %3836 = vmatpush1.msra.mxu0 %v3835
    %3837 = vmatprep.subr.mxu0 0.0
    %3838 = vmatpush1.msra.mxu0 0.0
    %3839 = vmatprep.subr.mxu0 0.0
    %3840 = vmatpush1.msra.mxu0 0.0
    %3841 = vmatprep.subr.mxu0 0.0
    %3842 = vmatpush1.msra.mxu0 0.0
    %3843 = vmatprep.subr.mxu0 0.0
    %3844 = vmatpush1.msra.mxu0 0.0
    %3845 = vmatprep.subr.mxu0 0.0
    %3846 = vmatpush1.msra.mxu0 0.0
    %3847 = vmatprep.subr.mxu0 0.0
    %3848 = vmatpush1.msra.mxu0 0.0
    %3849 = vmatprep.subr.mxu0 0.0
    %3850 = vmatpush1.msra.mxu0 0.0
    %3851 = vmatprep.subr.mxu0 0.0
    %3852 = vmatpush1.msra.mxu0 0.0
    %3853 = vmatprep.subr.mxu0 0.0
    %3854 = vmatpush1.msra.mxu0 0.0
    %3855 = vmatprep.subr.mxu0 0.0
    %3856 = vmatpush1.msra.mxu0 0.0
    %3857 = vmatprep.subr.mxu0 0.0
    %3858 = vmatpush1.msra.mxu0 0.0
    %3859 = vmatprep.subr.mxu0 0.0
    %3860 = vmatpush1.msra.mxu0 0.0
    %3861 = vmatprep.subr.mxu0 0.0
    %3862 = vmatpush1.msra.mxu0 0.0
    %3863 = vmatprep.subr.mxu0 0.0
    %3864 = vmatpush1.msra.mxu0 0.0
    %3865 = vmatprep.subr.mxu0 0.0
    %3866 = vmatpush1.msra.mxu0 0.0
    %3867 = vmatprep.subr.mxu0 0.0
    %3868 = vmatpush1.msra.mxu0 0.0
    %3869 = vmatprep.subr.mxu0 0.0
    %3870 = vmatpush1.msra.mxu0 0.0
    %3871 = vmatprep.subr.mxu0 0.0
    %3872 = vmatpush1.msra.mxu0 0.0
    %3873 = vmatprep.subr.mxu0 0.0
    %3874 = vmatpush1.msra.mxu0 0.0
    %3875 = vmatprep.subr.mxu0 0.0
    %3876 = vmatpush1.msra.mxu0 0.0
    %3877 = vmatprep.subr.mxu0 0.0
    %3878 = vmatpush1.msra.mxu0 0.0
    %3879 = vmatprep.subr.mxu0 0.0
    %3880 = vmatpush1.msra.mxu0 0.0
    %3881 = vmatprep.subr.mxu0 0.0
    %3882 = vmatpush1.msra.mxu0 0.0
    %3883 = vmatprep.subr.mxu0 0.0
    %3884 = vmatpush1.msra.mxu0 0.0
    %3885 = vmatprep.subr.mxu0 0.0
    %3886 = vmatpush1.msra.mxu0 0.0
    %3887 = vmatprep.subr.mxu0 0.0
    %3888 = vmatpush1.msra.mxu0 0.0
    %3889 = vmatprep.subr.mxu0 0.0
    %3890 = vmatpush1.msra.mxu0 0.0
    %3891 = vmatprep.subr.mxu0 0.0
    %3892 = vmatpush1.msra.mxu0 0.0
    %3893 = vmatprep.mubr.f32.mxu0 0.0
    %v3894 = vand.u32 %v3649, 4294901760
    %v3895 = vsub.f32 %v3649, %v3894
    %3896 = vmatmul.mubr.f32.gmra.mrb[0].mxu0 %v3895
    %v3897 = vpop.f32.mrb[0].mxu0
    %v3898 = vadd.f32 %v3818, %v3897
    %v3899 = vpop.f32.mrb[0].mxu0
    %3900 = vdwg.mxu0
    %3901 = vmatprep.subr.mxu0 0.0
    %v3902 = vand.u32 %v2068, 4294901760
    %3903 = vmatpush1.msra.mxu0 %v3902
    %3904 = vmatprep.subr.mxu0 0.0
    %v3905 = vand.u32 %v2069, 4294901760
    %3906 = vmatpush1.msra.mxu0 %v3905
    %3907 = vmatprep.subr.mxu0 0.0
    %v3908 = vand.u32 %v2070, 4294901760
    %3909 = vmatpush1.msra.mxu0 %v3908
    %3910 = vmatprep.subr.mxu0 0.0
    %v3911 = vand.u32 %v2076, 4294901760
    %3912 = vmatpush1.msra.mxu0 %v3911
    %3913 = vmatprep.subr.mxu0 0.0
    %3914 = vmatpush1.msra.mxu0 0.0
    %3915 = vmatprep.subr.mxu0 0.0
    %3916 = vmatpush1.msra.mxu0 0.0
    %3917 = vmatprep.subr.mxu0 0.0
    %3918 = vmatpush1.msra.mxu0 0.0
    %3919 = vmatprep.subr.mxu0 0.0
    %3920 = vmatpush1.msra.mxu0 0.0
    %3921 = vmatprep.subr.mxu0 0.0
    %3922 = vmatpush1.msra.mxu0 0.0
    %3923 = vmatprep.subr.mxu0 0.0
    %3924 = vmatpush1.msra.mxu0 0.0
    %3925 = vmatprep.subr.mxu0 0.0
    %3926 = vmatpush1.msra.mxu0 0.0
    %3927 = vmatprep.subr.mxu0 0.0
    %3928 = vmatpush1.msra.mxu0 0.0
    %3929 = vmatprep.subr.mxu0 0.0
    %3930 = vmatpush1.msra.mxu0 0.0
    %3931 = vmatprep.subr.mxu0 0.0
    %3932 = vmatpush1.msra.mxu0 0.0
    %3933 = vmatprep.subr.mxu0 0.0
    %3934 = vmatpush1.msra.mxu0 0.0
    %3935 = vmatprep.subr.mxu0 0.0
    %3936 = vmatpush1.msra.mxu0 0.0
    %3937 = vmatprep.subr.mxu0 0.0
    %3938 = vmatpush1.msra.mxu0 0.0
    %3939 = vmatprep.subr.mxu0 0.0
    %3940 = vmatpush1.msra.mxu0 0.0
    %3941 = vmatprep.subr.mxu0 0.0
    %3942 = vmatpush1.msra.mxu0 0.0
    %3943 = vmatprep.subr.mxu0 0.0
    %3944 = vmatpush1.msra.mxu0 0.0
    %3945 = vmatprep.subr.mxu0 0.0
    %3946 = vmatpush1.msra.mxu0 0.0
    %3947 = vmatprep.subr.mxu0 0.0
    %3948 = vmatpush1.msra.mxu0 0.0
    %3949 = vmatprep.subr.mxu0 0.0
    %3950 = vmatpush1.msra.mxu0 0.0
    %3951 = vmatprep.subr.mxu0 0.0
    %3952 = vmatpush1.msra.mxu0 0.0
    %3953 = vmatprep.subr.mxu0 0.0
    %3954 = vmatpush1.msra.mxu0 0.0
    %3955 = vmatprep.subr.mxu0 0.0
    %3956 = vmatpush1.msra.mxu0 0.0
    %3957 = vmatprep.subr.mxu0 0.0
    %3958 = vmatpush1.msra.mxu0 0.0
    %3959 = vmatprep.subr.mxu0 0.0
    %3960 = vmatpush1.msra.mxu0 0.0
    %3961 = vmatprep.subr.mxu0 0.0
    %3962 = vmatpush1.msra.mxu0 0.0
    %3963 = vmatprep.subr.mxu0 0.0
    %3964 = vmatpush1.msra.mxu0 0.0
    %3965 = vmatprep.subr.mxu0 0.0
    %3966 = vmatpush1.msra.mxu0 0.0
    %3967 = vmatprep.subr.mxu0 0.0
    %3968 = vmatpush1.msra.mxu0 0.0
    %3969 = vmatprep.mubr.f32.mxu0 0.0
    %v3970 = vand.u32 %v3649, 4294901760
    %v3971 = vsub.f32 %v3649, %v3970
    %v3972 = vand.u32 %v3971, 4294901760
    %3973 = vmatmul.mubr.f32.gmra.mrb[0].mxu0 %v3972
    %v3974 = vpop.f32.mrb[0].mxu0
    %v3975 = vadd.f32 %v3898, %v3974
    %v3976 = vpop.f32.mrb[0].mxu0
    %3977 = vdwg.mxu0
    %3978 = vmatprep.subr.mxu0 0.0
    %v3979 = vand.u32 %v2068, 4294901760
    %v3980 = vsub.f32 %v2068, %v3979
    %v3981 = vand.u32 %v3980, 4294901760
    %3982 = vmatpush1.msra.mxu0 %v3981
    %3983 = vmatprep.subr.mxu0 0.0
    %v3984 = vand.u32 %v2069, 4294901760
    %v3985 = vsub.f32 %v2069, %v3984
    %v3986 = vand.u32 %v3985, 4294901760
    %3987 = vmatpush1.msra.mxu0 %v3986
    %3988 = vmatprep.subr.mxu0 0.0
    %v3989 = vand.u32 %v2070, 4294901760
    %v3990 = vsub.f32 %v2070, %v3989
    %v3991 = vand.u32 %v3990, 4294901760
    %3992 = vmatpush1.msra.mxu0 %v3991
    %3993 = vmatprep.subr.mxu0 0.0
    %v3994 = vand.u32 %v2076, 4294901760
    %v3995 = vsub.f32 %v2076, %v3994
    %v3996 = vand.u32 %v3995, 4294901760
    %3997 = vmatpush1.msra.mxu0 %v3996
    %3998 = vmatprep.subr.mxu0 0.0
    %3999 = vmatpush1.msra.mxu0 0.0
    %4000 = vmatprep.subr.mxu0 0.0
    %4001 = vmatpush1.msra.mxu0 0.0
    %4002 = vmatprep.subr.mxu0 0.0
    %4003 = vmatpush1.msra.mxu0 0.0
    %4004 = vmatprep.subr.mxu0 0.0
    %4005 = vmatpush1.msra.mxu0 0.0
    %4006 = vmatprep.subr.mxu0 0.0
    %4007 = vmatpush1.msra.mxu0 0.0
    %4008 = vmatprep.subr.mxu0 0.0
    %4009 = vmatpush1.msra.mxu0 0.0
    %4010 = vmatprep.subr.mxu0 0.0
    %4011 = vmatpush1.msra.mxu0 0.0
    %4012 = vmatprep.subr.mxu0 0.0
    %4013 = vmatpush1.msra.mxu0 0.0
    %4014 = vmatprep.subr.mxu0 0.0
    %4015 = vmatpush1.msra.mxu0 0.0
    %4016 = vmatprep.subr.mxu0 0.0
    %4017 = vmatpush1.msra.mxu0 0.0
    %4018 = vmatprep.subr.mxu0 0.0
    %4019 = vmatpush1.msra.mxu0 0.0
    %4020 = vmatprep.subr.mxu0 0.0
    %4021 = vmatpush1.msra.mxu0 0.0
    %4022 = vmatprep.subr.mxu0 0.0
    %4023 = vmatpush1.msra.mxu0 0.0
    %4024 = vmatprep.subr.mxu0 0.0
    %4025 = vmatpush1.msra.mxu0 0.0
    %4026 = vmatprep.subr.mxu0 0.0
    %4027 = vmatpush1.msra.mxu0 0.0
    %4028 = vmatprep.subr.mxu0 0.0
    %4029 = vmatpush1.msra.mxu0 0.0
    %4030 = vmatprep.subr.mxu0 0.0
    %4031 = vmatpush1.msra.mxu0 0.0
    %4032 = vmatprep.subr.mxu0 0.0
    %4033 = vmatpush1.msra.mxu0 0.0
    %4034 = vmatprep.subr.mxu0 0.0
    %4035 = vmatpush1.msra.mxu0 0.0
    %4036 = vmatprep.subr.mxu0 0.0
    %4037 = vmatpush1.msra.mxu0 0.0
    %4038 = vmatprep.subr.mxu0 0.0
    %4039 = vmatpush1.msra.mxu0 0.0
    %4040 = vmatprep.subr.mxu0 0.0
    %4041 = vmatpush1.msra.mxu0 0.0
    %4042 = vmatprep.subr.mxu0 0.0
    %4043 = vmatpush1.msra.mxu0 0.0
    %4044 = vmatprep.subr.mxu0 0.0
    %4045 = vmatpush1.msra.mxu0 0.0
    %4046 = vmatprep.subr.mxu0 0.0
    %4047 = vmatpush1.msra.mxu0 0.0
    %4048 = vmatprep.subr.mxu0 0.0
    %4049 = vmatpush1.msra.mxu0 0.0
    %4050 = vmatprep.subr.mxu0 0.0
    %4051 = vmatpush1.msra.mxu0 0.0
    %4052 = vmatprep.subr.mxu0 0.0
    %4053 = vmatpush1.msra.mxu0 0.0
    %4054 = vmatprep.mubr.f32.mxu0 0.0
    %v4055 = vand.u32 %v3649, 4294901760
    %4056 = vmatmul.mubr.f32.gmra.mrb[0].mxu0 %v4055
    %v4057 = vpop.f32.mrb[0].mxu0
    %v4058 = vadd.f32 %v3975, %v4057
    %v4059 = vpop.f32.mrb[0].mxu0
    %4060 = vdwg.mxu0
    %4061 = vmatprep.subr.mxu0 0.0
    %v4062 = vand.u32 %v2068, 4294901760
    %4063 = vmatpush1.msra.mxu0 %v4062
    %4064 = vmatprep.subr.mxu0 0.0
    %v4065 = vand.u32 %v2069, 4294901760
    %4066 = vmatpush1.msra.mxu0 %v4065
    %4067 = vmatprep.subr.mxu0 0.0
    %v4068 = vand.u32 %v2070, 4294901760
    %4069 = vmatpush1.msra.mxu0 %v4068
    %4070 = vmatprep.subr.mxu0 0.0
    %v4071 = vand.u32 %v2076, 4294901760
    %4072 = vmatpush1.msra.mxu0 %v4071
    %4073 = vmatprep.subr.mxu0 0.0
    %4074 = vmatpush1.msra.mxu0 0.0
    %4075 = vmatprep.subr.mxu0 0.0
    %4076 = vmatpush1.msra.mxu0 0.0
    %4077 = vmatprep.subr.mxu0 0.0
    %4078 = vmatpush1.msra.mxu0 0.0
    %4079 = vmatprep.subr.mxu0 0.0
    %4080 = vmatpush1.msra.mxu0 0.0
    %4081 = vmatprep.subr.mxu0 0.0
    %4082 = vmatpush1.msra.mxu0 0.0
    %4083 = vmatprep.subr.mxu0 0.0
    %4084 = vmatpush1.msra.mxu0 0.0
    %4085 = vmatprep.subr.mxu0 0.0
    %4086 = vmatpush1.msra.mxu0 0.0
    %4087 = vmatprep.subr.mxu0 0.0
    %4088 = vmatpush1.msra.mxu0 0.0
    %4089 = vmatprep.subr.mxu0 0.0
    %4090 = vmatpush1.msra.mxu0 0.0
    %4091 = vmatprep.subr.mxu0 0.0
    %4092 = vmatpush1.msra.mxu0 0.0
    %4093 = vmatprep.subr.mxu0 0.0
    %4094 = vmatpush1.msra.mxu0 0.0
    %4095 = vmatprep.subr.mxu0 0.0
    %4096 = vmatpush1.msra.mxu0 0.0
    %4097 = vmatprep.subr.mxu0 0.0
    %4098 = vmatpush1.msra.mxu0 0.0
    %4099 = vmatprep.subr.mxu0 0.0
    %4100 = vmatpush1.msra.mxu0 0.0
    %4101 = vmatprep.subr.mxu0 0.0
    %4102 = vmatpush1.msra.mxu0 0.0
    %4103 = vmatprep.subr.mxu0 0.0
    %4104 = vmatpush1.msra.mxu0 0.0
    %4105 = vmatprep.subr.mxu0 0.0
    %4106 = vmatpush1.msra.mxu0 0.0
    %4107 = vmatprep.subr.mxu0 0.0
    %4108 = vmatpush1.msra.mxu0 0.0
    %4109 = vmatprep.subr.mxu0 0.0
    %4110 = vmatpush1.msra.mxu0 0.0
    %4111 = vmatprep.subr.mxu0 0.0
    %4112 = vmatpush1.msra.mxu0 0.0
    %4113 = vmatprep.subr.mxu0 0.0
    %4114 = vmatpush1.msra.mxu0 0.0
    %4115 = vmatprep.subr.mxu0 0.0
    %4116 = vmatpush1.msra.mxu0 0.0
    %4117 = vmatprep.subr.mxu0 0.0
    %4118 = vmatpush1.msra.mxu0 0.0
    %4119 = vmatprep.subr.mxu0 0.0
    %4120 = vmatpush1.msra.mxu0 0.0
    %4121 = vmatprep.subr.mxu0 0.0
    %4122 = vmatpush1.msra.mxu0 0.0
    %4123 = vmatprep.subr.mxu0 0.0
    %4124 = vmatpush1.msra.mxu0 0.0
    %4125 = vmatprep.subr.mxu0 0.0
    %4126 = vmatpush1.msra.mxu0 0.0
    %4127 = vmatprep.subr.mxu0 0.0
    %4128 = vmatpush1.msra.mxu0 0.0
    %4129 = vmatprep.mubr.f32.mxu0 0.0
    %v4130 = vand.u32 %v3649, 4294901760
    %4131 = vmatmul.mubr.f32.gmra.mrb[0].mxu0 %v4130
    %v4132 = vpop.f32.mrb[0].mxu0
    %v4133 = vadd.f32 %v4058, %v4132
    %v4134 = vpop.f32.mrb[0].mxu0
    %4135 = vdwg.mxu0
    %v4136 = vadd.f32 %v3647, %v4133
    %v4137 = vsel %vm1574, %v3156, 0.0
    %4138 = vadd.xlane.f32.xlu0 %v4137
    %v4139 = vpop.xlane.xlu0 %4138
    %v4140 = vmul.f32 %v4139, %v2567
    %v4141 = vsub.f32 0.0, %v4136
    %v4142 = vmul.f32 %v4141, 1.442695
    %v4143 = vpow.pop %v4142
    %v4144 = vadd.f32 %v4143, 1.0
    %v4145 = vrcp.pop %v4144
    %v4146 = vmul.f32 1.0, %v4145
    %v4147 = vmul.f32 %v4146, 0.5
    %v4148 = vsub.f32 0.0, %v4140
    %v4149 = vmul.f32 %v4148, 1.442695
    %v4150 = vpow.pop %v4149
    %v4151 = vadd.f32 %v4150, 1.0
    %v4152 = vrcp.pop %v4151
    %v4153 = vmul.f32 1.0, %v4152
    %v4154 = vmul.f32 %v4153, 0.5
    %v4155 = vadd.f32 %v4147, %v4154
    %v4156 = vld [vmem:[%s5] sm:$0xff]
    %v4157 = vld [vmem:[%s5 + $0x8] sm:$0xff]
    %v4158 = vld [vmem:[%s5 + $0x10] sm:$0xff]
    %v4159 = vld [vmem:[%s5 + $0x18] sm:$0xff]
    %v4160 = vld [vmem:[%s5 + $0x20] sm:$0xff]
    %v4161 = vld [vmem:[%s5 + $0x28] sm:$0xff]
    %v4162 = vld [vmem:[%s5 + $0x30] sm:$0x1]
    %v4163 = vld [vmem:[%s5 + $0x38] sm:$0x1]
    %v4165 = vsel %vm1574, %v2583, 0
    %v4168 = vsel %vm1574, %v4155, 0
    %v4171 = vsel %vm1578, %v4162, 0
    %v4174 = vsel %vm1578, %v4163, 0
    %v4176 = vand.u32 %v4157, 4294901760
    %4177 = vmatprep.subr.mxu0 %v4176
    %v4178 = vand.u32 %v4156, 4294901760
    %4179 = vmatpush1.msra.mxu0 %v4178
    %v4180 = vand.u32 %v4159, 4294901760
    %4181 = vmatprep.subr.mxu0 %v4180
    %v4182 = vand.u32 %v4158, 4294901760
    %4183 = vmatpush1.msra.mxu0 %v4182
    %v4184 = vand.u32 %v4161, 4294901760
    %4185 = vmatprep.subr.mxu0 %v4184
    %v4186 = vand.u32 %v4160, 4294901760
    %4187 = vmatpush1.msra.mxu0 %v4186
    %v4188 = vand.u32 %v4174, 4294901760
    %4189 = vmatprep.subr.mxu0 %v4188
    %v4190 = vand.u32 %v4171, 4294901760
    %4191 = vmatpush1.msra.mxu0 %v4190
    %4192 = vmatprep.subr.mxu0 0.0
    %4193 = vmatpush1.msra.mxu0 0.0
    %4194 = vmatprep.subr.mxu0 0.0
    %4195 = vmatpush1.msra.mxu0 0.0
    %4196 = vmatprep.subr.mxu0 0.0
    %4197 = vmatpush1.msra.mxu0 0.0
    %4198 = vmatprep.subr.mxu0 0.0
    %4199 = vmatpush1.msra.mxu0 0.0
    %4200 = vmatprep.subr.mxu0 0.0
    %4201 = vmatpush1.msra.mxu0 0.0
    %4202 = vmatprep.subr.mxu0 0.0
    %4203 = vmatpush1.msra.mxu0 0.0
    %4204 = vmatprep.subr.mxu0 0.0
    %4205 = vmatpush1.msra.mxu0 0.0
    %4206 = vmatprep.subr.mxu0 0.0
    %4207 = vmatpush1.msra.mxu0 0.0
    %4208 = vmatprep.subr.mxu0 0.0
    %4209 = vmatpush1.msra.mxu0 0.0
    %4210 = vmatprep.subr.mxu0 0.0
    %4211 = vmatpush1.msra.mxu0 0.0
    %4212 = vmatprep.subr.mxu0 0.0
    %4213 = vmatpush1.msra.mxu0 0.0
    %4214 = vmatprep.subr.mxu0 0.0
    %4215 = vmatpush1.msra.mxu0 0.0
    %4216 = vmatprep.subr.mxu0 0.0
    %4217 = vmatpush1.msra.mxu0 0.0
    %4218 = vmatprep.subr.mxu0 0.0
    %4219 = vmatpush1.msra.mxu0 0.0
    %4220 = vmatprep.subr.mxu0 0.0
    %4221 = vmatpush1.msra.mxu0 0.0
    %4222 = vmatprep.subr.mxu0 0.0
    %4223 = vmatpush1.msra.mxu0 0.0
    %4224 = vmatprep.subr.mxu0 0.0
    %4225 = vmatpush1.msra.mxu0 0.0
    %4226 = vmatprep.subr.mxu0 0.0
    %4227 = vmatpush1.msra.mxu0 0.0
    %4228 = vmatprep.subr.mxu0 0.0
    %4229 = vmatpush1.msra.mxu0 0.0
    %4230 = vmatprep.subr.mxu0 0.0
    %4231 = vmatpush1.msra.mxu0 0.0
    %4232 = vmatprep.subr.mxu0 0.0
    %4233 = vmatpush1.msra.mxu0 0.0
    %4234 = vmatprep.subr.mxu0 0.0
    %4235 = vmatpush1.msra.mxu0 0.0
    %4236 = vmatprep.subr.mxu0 0.0
    %4237 = vmatpush1.msra.mxu0 0.0
    %4238 = vmatprep.subr.mxu0 0.0
    %4239 = vmatpush1.msra.mxu0 0.0
    %4240 = vmatprep.subr.mxu0 0.0
    %4241 = vmatpush1.msra.mxu0 0.0
    %4242 = vmatprep.subr.mxu0 0.0
    %4243 = vmatpush1.msra.mxu0 0.0
    %4244 = vmatprep.subr.mxu0 0.0
    %4245 = vmatpush1.msra.mxu0 0.0
    %4246 = vmatprep.subr.mxu0 0.0
    %4247 = vmatpush1.msra.mxu0 0.0
    %4248 = vmatprep.mubr.f32.mxu0 0.0
    %v4249 = vand.u32 %v4165, 4294901760
    %v4250 = vsub.f32 %v4165, %v4249
    %v4251 = vand.u32 %v4250, 4294901760
    %v4252 = vsub.f32 %v4250, %v4251
    %v4253 = vand.u32 %v4252, 4294901760
    %4254 = vmatmul.mubr.f32.gmra.mrb[0].mxu0 %v4253
    %v4255 = vpop.f32.mrb[0].mxu0
    %v4256 = vadd.f32 0.0, %v4255
    %v4257 = vpop.f32.mrb[0].mxu0
    %v4258 = vadd.f32 0.0, %v4257
    %4259 = vmatprep.mubr.f32.mxu0 0.0
    %v4260 = vand.u32 %v4168, 4294901760
    %v4261 = vsub.f32 %v4168, %v4260
    %v4262 = vand.u32 %v4261, 4294901760
    %v4263 = vsub.f32 %v4261, %v4262
    %v4264 = vand.u32 %v4263, 4294901760
    %4265 = vmatmul.mubr.f32.gmra.mrb[0].mxu0 %v4264
    %v4266 = vpop.f32.mrb[0].mxu0
    %v4267 = vadd.f32 0.0, %v4266
    %v4268 = vpop.f32.mrb[0].mxu0
    %v4269 = vadd.f32 0.0, %v4268
    %4270 = vdwg.mxu0
    %v4271 = vand.u32 %v4157, 4294901760
    %v4272 = vsub.f32 %v4157, %v4271
    %v4273 = vand.u32 %v4272, 4294901760
    %v4274 = vsub.f32 %v4272, %v4273
    %v4275 = vand.u32 %v4274, 4294901760
    %4276 = vmatprep.subr.mxu0 %v4275
    %v4277 = vand.u32 %v4156, 4294901760
    %v4278 = vsub.f32 %v4156, %v4277
    %v4279 = vand.u32 %v4278, 4294901760
    %v4280 = vsub.f32 %v4278, %v4279
    %v4281 = vand.u32 %v4280, 4294901760
    %4282 = vmatpush1.msra.mxu0 %v4281
    %v4283 = vand.u32 %v4159, 4294901760
    %v4284 = vsub.f32 %v4159, %v4283
    %v4285 = vand.u32 %v4284, 4294901760
    %v4286 = vsub.f32 %v4284, %v4285
    %v4287 = vand.u32 %v4286, 4294901760
    %4288 = vmatprep.subr.mxu0 %v4287
    %v4289 = vand.u32 %v4158, 4294901760
    %v4290 = vsub.f32 %v4158, %v4289
    %v4291 = vand.u32 %v4290, 4294901760
    %v4292 = vsub.f32 %v4290, %v4291
    %v4293 = vand.u32 %v4292, 4294901760
    %4294 = vmatpush1.msra.mxu0 %v4293
    %v4295 = vand.u32 %v4161, 4294901760
    %v4296 = vsub.f32 %v4161, %v4295
    %v4297 = vand.u32 %v4296, 4294901760
    %v4298 = vsub.f32 %v4296, %v4297
    %v4299 = vand.u32 %v4298, 4294901760
    %4300 = vmatprep.subr.mxu0 %v4299
    %v4301 = vand.u32 %v4160, 4294901760
    %v4302 = vsub.f32 %v4160, %v4301
    %v4303 = vand.u32 %v4302, 4294901760
    %v4304 = vsub.f32 %v4302, %v4303
    %v4305 = vand.u32 %v4304, 4294901760
    %4306 = vmatpush1.msra.mxu0 %v4305
    %v4307 = vand.u32 %v4174, 4294901760
    %v4308 = vsub.f32 %v4174, %v4307
    %v4309 = vand.u32 %v4308, 4294901760
    %v4310 = vsub.f32 %v4308, %v4309
    %v4311 = vand.u32 %v4310, 4294901760
    %4312 = vmatprep.subr.mxu0 %v4311
    %v4313 = vand.u32 %v4171, 4294901760
    %v4314 = vsub.f32 %v4171, %v4313
    %v4315 = vand.u32 %v4314, 4294901760
    %v4316 = vsub.f32 %v4314, %v4315
    %v4317 = vand.u32 %v4316, 4294901760
    %4318 = vmatpush1.msra.mxu0 %v4317
    %4319 = vmatprep.subr.mxu0 0.0
    %4320 = vmatpush1.msra.mxu0 0.0
    %4321 = vmatprep.subr.mxu0 0.0
    %4322 = vmatpush1.msra.mxu0 0.0
    %4323 = vmatprep.subr.mxu0 0.0
    %4324 = vmatpush1.msra.mxu0 0.0
    %4325 = vmatprep.subr.mxu0 0.0
    %4326 = vmatpush1.msra.mxu0 0.0
    %4327 = vmatprep.subr.mxu0 0.0
    %4328 = vmatpush1.msra.mxu0 0.0
    %4329 = vmatprep.subr.mxu0 0.0
    %4330 = vmatpush1.msra.mxu0 0.0
    %4331 = vmatprep.subr.mxu0 0.0
    %4332 = vmatpush1.msra.mxu0 0.0
    %4333 = vmatprep.subr.mxu0 0.0
    %4334 = vmatpush1.msra.mxu0 0.0
    %4335 = vmatprep.subr.mxu0 0.0
    %4336 = vmatpush1.msra.mxu0 0.0
    %4337 = vmatprep.subr.mxu0 0.0
    %4338 = vmatpush1.msra.mxu0 0.0
    %4339 = vmatprep.subr.mxu0 0.0
    %4340 = vmatpush1.msra.mxu0 0.0
    %4341 = vmatprep.subr.mxu0 0.0
    %4342 = vmatpush1.msra.mxu0 0.0
    %4343 = vmatprep.subr.mxu0 0.0
    %4344 = vmatpush1.msra.mxu0 0.0
    %4345 = vmatprep.subr.mxu0 0.0
    %4346 = vmatpush1.msra.mxu0 0.0
    %4347 = vmatprep.subr.mxu0 0.0
    %4348 = vmatpush1.msra.mxu0 0.0
    %4349 = vmatprep.subr.mxu0 0.0
    %4350 = vmatpush1.msra.mxu0 0.0
    %4351 = vmatprep.subr.mxu0 0.0
    %4352 = vmatpush1.msra.mxu0 0.0
    %4353 = vmatprep.subr.mxu0 0.0
    %4354 = vmatpush1.msra.mxu0 0.0
    %4355 = vmatprep.subr.mxu0 0.0
    %4356 = vmatpush1.msra.mxu0 0.0
    %4357 = vmatprep.subr.mxu0 0.0
    %4358 = vmatpush1.msra.mxu0 0.0
    %4359 = vmatprep.subr.mxu0 0.0
    %4360 = vmatpush1.msra.mxu0 0.0
    %4361 = vmatprep.subr.mxu0 0.0
    %4362 = vmatpush1.msra.mxu0 0.0
    %4363 = vmatprep.subr.mxu0 0.0
    %4364 = vmatpush1.msra.mxu0 0.0
    %4365 = vmatprep.subr.mxu0 0.0
    %4366 = vmatpush1.msra.mxu0 0.0
    %4367 = vmatprep.subr.mxu0 0.0
    %4368 = vmatpush1.msra.mxu0 0.0
    %4369 = vmatprep.subr.mxu0 0.0
    %4370 = vmatpush1.msra.mxu0 0.0
    %4371 = vmatprep.subr.mxu0 0.0
    %4372 = vmatpush1.msra.mxu0 0.0
    %4373 = vmatprep.subr.mxu0 0.0
    %4374 = vmatpush1.msra.mxu0 0.0
    %4375 = vmatprep.mubr.f32.mxu0 0.0
    %v4376 = vand.u32 %v4165, 4294901760
    %4377 = vmatmul.mubr.f32.gmra.mrb[0].mxu0 %v4376
    %v4378 = vpop.f32.mrb[0].mxu0
    %v4379 = vadd.f32 %v4256, %v4378
    %v4380 = vpop.f32.mrb[0].mxu0
    %v4381 = vadd.f32 %v4258, %v4380
    %4382 = vmatprep.mubr.f32.mxu0 0.0
    %v4383 = vand.u32 %v4168, 4294901760
    %4384 = vmatmul.mubr.f32.gmra.mrb[0].mxu0 %v4383
    %v4385 = vpop.f32.mrb[0].mxu0
    %v4386 = vadd.f32 %v4267, %v4385
    %v4387 = vpop.f32.mrb[0].mxu0
    %v4388 = vadd.f32 %v4269, %v4387
    %4389 = vdwg.mxu0
    %v4390 = vand.u32 %v4157, 4294901760
    %v4391 = vsub.f32 %v4157, %v4390
    %4392 = vmatprep.subr.mxu0 %v4391
    %v4393 = vand.u32 %v4156, 4294901760
    %v4394 = vsub.f32 %v4156, %v4393
    %4395 = vmatpush1.msra.mxu0 %v4394
    %v4396 = vand.u32 %v4159, 4294901760
    %v4397 = vsub.f32 %v4159, %v4396
    %4398 = vmatprep.subr.mxu0 %v4397
    %v4399 = vand.u32 %v4158, 4294901760
    %v4400 = vsub.f32 %v4158, %v4399
    %4401 = vmatpush1.msra.mxu0 %v4400
    %v4402 = vand.u32 %v4161, 4294901760
    %v4403 = vsub.f32 %v4161, %v4402
    %4404 = vmatprep.subr.mxu0 %v4403
    %v4405 = vand.u32 %v4160, 4294901760
    %v4406 = vsub.f32 %v4160, %v4405
    %4407 = vmatpush1.msra.mxu0 %v4406
    %v4408 = vand.u32 %v4174, 4294901760
    %v4409 = vsub.f32 %v4174, %v4408
    %4410 = vmatprep.subr.mxu0 %v4409
    %v4411 = vand.u32 %v4171, 4294901760
    %v4412 = vsub.f32 %v4171, %v4411
    %4413 = vmatpush1.msra.mxu0 %v4412
    %4414 = vmatprep.subr.mxu0 0.0
    %4415 = vmatpush1.msra.mxu0 0.0
    %4416 = vmatprep.subr.mxu0 0.0
    %4417 = vmatpush1.msra.mxu0 0.0
    %4418 = vmatprep.subr.mxu0 0.0
    %4419 = vmatpush1.msra.mxu0 0.0
    %4420 = vmatprep.subr.mxu0 0.0
    %4421 = vmatpush1.msra.mxu0 0.0
    %4422 = vmatprep.subr.mxu0 0.0
    %4423 = vmatpush1.msra.mxu0 0.0
    %4424 = vmatprep.subr.mxu0 0.0
    %4425 = vmatpush1.msra.mxu0 0.0
    %4426 = vmatprep.subr.mxu0 0.0
    %4427 = vmatpush1.msra.mxu0 0.0
    %4428 = vmatprep.subr.mxu0 0.0
    %4429 = vmatpush1.msra.mxu0 0.0
    %4430 = vmatprep.subr.mxu0 0.0
    %4431 = vmatpush1.msra.mxu0 0.0
    %4432 = vmatprep.subr.mxu0 0.0
    %4433 = vmatpush1.msra.mxu0 0.0
    %4434 = vmatprep.subr.mxu0 0.0
    %4435 = vmatpush1.msra.mxu0 0.0
    %4436 = vmatprep.subr.mxu0 0.0
    %4437 = vmatpush1.msra.mxu0 0.0
    %4438 = vmatprep.subr.mxu0 0.0
    %4439 = vmatpush1.msra.mxu0 0.0
    %4440 = vmatprep.subr.mxu0 0.0
    %4441 = vmatpush1.msra.mxu0 0.0
    %4442 = vmatprep.subr.mxu0 0.0
    %4443 = vmatpush1.msra.mxu0 0.0
    %4444 = vmatprep.subr.mxu0 0.0
    %4445 = vmatpush1.msra.mxu0 0.0
    %4446 = vmatprep.subr.mxu0 0.0
    %4447 = vmatpush1.msra.mxu0 0.0
    %4448 = vmatprep.subr.mxu0 0.0
    %4449 = vmatpush1.msra.mxu0 0.0
    %4450 = vmatprep.subr.mxu0 0.0
    %4451 = vmatpush1.msra.mxu0 0.0
    %4452 = vmatprep.subr.mxu0 0.0
    %4453 = vmatpush1.msra.mxu0 0.0
    %4454 = vmatprep.subr.mxu0 0.0
    %4455 = vmatpush1.msra.mxu0 0.0
    %4456 = vmatprep.subr.mxu0 0.0
    %4457 = vmatpush1.msra.mxu0 0.0
    %4458 = vmatprep.subr.mxu0 0.0
    %4459 = vmatpush1.msra.mxu0 0.0
    %4460 = vmatprep.subr.mxu0 0.0
    %4461 = vmatpush1.msra.mxu0 0.0
    %4462 = vmatprep.subr.mxu0 0.0
    %4463 = vmatpush1.msra.mxu0 0.0
    %4464 = vmatprep.subr.mxu0 0.0
    %4465 = vmatpush1.msra.mxu0 0.0
    %4466 = vmatprep.subr.mxu0 0.0
    %4467 = vmatpush1.msra.mxu0 0.0
    %4468 = vmatprep.subr.mxu0 0.0
    %4469 = vmatpush1.msra.mxu0 0.0
    %4470 = vmatprep.mubr.f32.mxu0 0.0
    %v4471 = vand.u32 %v4165, 4294901760
    %v4472 = vsub.f32 %v4165, %v4471
    %4473 = vmatmul.mubr.f32.gmra.mrb[0].mxu0 %v4472
    %v4474 = vpop.f32.mrb[0].mxu0
    %v4475 = vadd.f32 %v4379, %v4474
    %v4476 = vpop.f32.mrb[0].mxu0
    %v4477 = vadd.f32 %v4381, %v4476
    %4478 = vmatprep.mubr.f32.mxu0 0.0
    %v4479 = vand.u32 %v4168, 4294901760
    %v4480 = vsub.f32 %v4168, %v4479
    %4481 = vmatmul.mubr.f32.gmra.mrb[0].mxu0 %v4480
    %v4482 = vpop.f32.mrb[0].mxu0
    %v4483 = vadd.f32 %v4386, %v4482
    %v4484 = vpop.f32.mrb[0].mxu0
    %v4485 = vadd.f32 %v4388, %v4484
    %4486 = vdwg.mxu0
    %v4487 = vand.u32 %v4157, 4294901760
    %4488 = vmatprep.subr.mxu0 %v4487
    %v4489 = vand.u32 %v4156, 4294901760
    %4490 = vmatpush1.msra.mxu0 %v4489
    %v4491 = vand.u32 %v4159, 4294901760
    %4492 = vmatprep.subr.mxu0 %v4491
    %v4493 = vand.u32 %v4158, 4294901760
    %4494 = vmatpush1.msra.mxu0 %v4493
    %v4495 = vand.u32 %v4161, 4294901760
    %4496 = vmatprep.subr.mxu0 %v4495
    %v4497 = vand.u32 %v4160, 4294901760
    %4498 = vmatpush1.msra.mxu0 %v4497
    %v4499 = vand.u32 %v4174, 4294901760
    %4500 = vmatprep.subr.mxu0 %v4499
    %v4501 = vand.u32 %v4171, 4294901760
    %4502 = vmatpush1.msra.mxu0 %v4501
    %4503 = vmatprep.subr.mxu0 0.0
    %4504 = vmatpush1.msra.mxu0 0.0
    %4505 = vmatprep.subr.mxu0 0.0
    %4506 = vmatpush1.msra.mxu0 0.0
    %4507 = vmatprep.subr.mxu0 0.0
    %4508 = vmatpush1.msra.mxu0 0.0
    %4509 = vmatprep.subr.mxu0 0.0
    %4510 = vmatpush1.msra.mxu0 0.0
    %4511 = vmatprep.subr.mxu0 0.0
    %4512 = vmatpush1.msra.mxu0 0.0
    %4513 = vmatprep.subr.mxu0 0.0
    %4514 = vmatpush1.msra.mxu0 0.0
    %4515 = vmatprep.subr.mxu0 0.0
    %4516 = vmatpush1.msra.mxu0 0.0
    %4517 = vmatprep.subr.mxu0 0.0
    %4518 = vmatpush1.msra.mxu0 0.0
    %4519 = vmatprep.subr.mxu0 0.0
    %4520 = vmatpush1.msra.mxu0 0.0
    %4521 = vmatprep.subr.mxu0 0.0
    %4522 = vmatpush1.msra.mxu0 0.0
    %4523 = vmatprep.subr.mxu0 0.0
    %4524 = vmatpush1.msra.mxu0 0.0
    %4525 = vmatprep.subr.mxu0 0.0
    %4526 = vmatpush1.msra.mxu0 0.0
    %4527 = vmatprep.subr.mxu0 0.0
    %4528 = vmatpush1.msra.mxu0 0.0
    %4529 = vmatprep.subr.mxu0 0.0
    %4530 = vmatpush1.msra.mxu0 0.0
    %4531 = vmatprep.subr.mxu0 0.0
    %4532 = vmatpush1.msra.mxu0 0.0
    %4533 = vmatprep.subr.mxu0 0.0
    %4534 = vmatpush1.msra.mxu0 0.0
    %4535 = vmatprep.subr.mxu0 0.0
    %4536 = vmatpush1.msra.mxu0 0.0
    %4537 = vmatprep.subr.mxu0 0.0
    %4538 = vmatpush1.msra.mxu0 0.0
    %4539 = vmatprep.subr.mxu0 0.0
    %4540 = vmatpush1.msra.mxu0 0.0
    %4541 = vmatprep.subr.mxu0 0.0
    %4542 = vmatpush1.msra.mxu0 0.0
    %4543 = vmatprep.subr.mxu0 0.0
    %4544 = vmatpush1.msra.mxu0 0.0
    %4545 = vmatprep.subr.mxu0 0.0
    %4546 = vmatpush1.msra.mxu0 0.0
    %4547 = vmatprep.subr.mxu0 0.0
    %4548 = vmatpush1.msra.mxu0 0.0
    %4549 = vmatprep.subr.mxu0 0.0
    %4550 = vmatpush1.msra.mxu0 0.0
    %4551 = vmatprep.subr.mxu0 0.0
    %4552 = vmatpush1.msra.mxu0 0.0
    %4553 = vmatprep.subr.mxu0 0.0
    %4554 = vmatpush1.msra.mxu0 0.0
    %4555 = vmatprep.subr.mxu0 0.0
    %4556 = vmatpush1.msra.mxu0 0.0
    %4557 = vmatprep.subr.mxu0 0.0
    %4558 = vmatpush1.msra.mxu0 0.0
    %4559 = vmatprep.mubr.f32.mxu0 0.0
    %v4560 = vand.u32 %v4165, 4294901760
    %v4561 = vsub.f32 %v4165, %v4560
    %v4562 = vand.u32 %v4561, 4294901760
    %4563 = vmatmul.mubr.f32.gmra.mrb[0].mxu0 %v4562
    %v4564 = vpop.f32.mrb[0].mxu0
    %v4565 = vadd.f32 %v4475, %v4564
    %v4566 = vpop.f32.mrb[0].mxu0
    %v4567 = vadd.f32 %v4477, %v4566
    %4568 = vmatprep.mubr.f32.mxu0 0.0
    %v4569 = vand.u32 %v4168, 4294901760
    %v4570 = vsub.f32 %v4168, %v4569
    %v4571 = vand.u32 %v4570, 4294901760
    %4572 = vmatmul.mubr.f32.gmra.mrb[0].mxu0 %v4571
    %v4573 = vpop.f32.mrb[0].mxu0
    %v4574 = vadd.f32 %v4483, %v4573
    %v4575 = vpop.f32.mrb[0].mxu0
    %v4576 = vadd.f32 %v4485, %v4575
    %4577 = vdwg.mxu0
    %v4578 = vand.u32 %v4157, 4294901760
    %v4579 = vsub.f32 %v4157, %v4578
    %v4580 = vand.u32 %v4579, 4294901760
    %4581 = vmatprep.subr.mxu0 %v4580
    %v4582 = vand.u32 %v4156, 4294901760
    %v4583 = vsub.f32 %v4156, %v4582
    %v4584 = vand.u32 %v4583, 4294901760
    %4585 = vmatpush1.msra.mxu0 %v4584
    %v4586 = vand.u32 %v4159, 4294901760
    %v4587 = vsub.f32 %v4159, %v4586
    %v4588 = vand.u32 %v4587, 4294901760
    %4589 = vmatprep.subr.mxu0 %v4588
    %v4590 = vand.u32 %v4158, 4294901760
    %v4591 = vsub.f32 %v4158, %v4590
    %v4592 = vand.u32 %v4591, 4294901760
    %4593 = vmatpush1.msra.mxu0 %v4592
    %v4594 = vand.u32 %v4161, 4294901760
    %v4595 = vsub.f32 %v4161, %v4594
    %v4596 = vand.u32 %v4595, 4294901760
    %4597 = vmatprep.subr.mxu0 %v4596
    %v4598 = vand.u32 %v4160, 4294901760
    %v4599 = vsub.f32 %v4160, %v4598
    %v4600 = vand.u32 %v4599, 4294901760
    %4601 = vmatpush1.msra.mxu0 %v4600
    %v4602 = vand.u32 %v4174, 4294901760
    %v4603 = vsub.f32 %v4174, %v4602
    %v4604 = vand.u32 %v4603, 4294901760
    %4605 = vmatprep.subr.mxu0 %v4604
    %v4606 = vand.u32 %v4171, 4294901760
    %v4607 = vsub.f32 %v4171, %v4606
    %v4608 = vand.u32 %v4607, 4294901760
    %4609 = vmatpush1.msra.mxu0 %v4608
    %4610 = vmatprep.subr.mxu0 0.0
    %4611 = vmatpush1.msra.mxu0 0.0
    %4612 = vmatprep.subr.mxu0 0.0
    %4613 = vmatpush1.msra.mxu0 0.0
    %4614 = vmatprep.subr.mxu0 0.0
    %4615 = vmatpush1.msra.mxu0 0.0
    %4616 = vmatprep.subr.mxu0 0.0
    %4617 = vmatpush1.msra.mxu0 0.0
    %4618 = vmatprep.subr.mxu0 0.0
    %4619 = vmatpush1.msra.mxu0 0.0
    %4620 = vmatprep.subr.mxu0 0.0
    %4621 = vmatpush1.msra.mxu0 0.0
    %4622 = vmatprep.subr.mxu0 0.0
    %4623 = vmatpush1.msra.mxu0 0.0
    %4624 = vmatprep.subr.mxu0 0.0
    %4625 = vmatpush1.msra.mxu0 0.0
    %4626 = vmatprep.subr.mxu0 0.0
    %4627 = vmatpush1.msra.mxu0 0.0
    %4628 = vmatprep.subr.mxu0 0.0
    %4629 = vmatpush1.msra.mxu0 0.0
    %4630 = vmatprep.subr.mxu0 0.0
    %4631 = vmatpush1.msra.mxu0 0.0
    %4632 = vmatprep.subr.mxu0 0.0
    %4633 = vmatpush1.msra.mxu0 0.0
    %4634 = vmatprep.subr.mxu0 0.0
    %4635 = vmatpush1.msra.mxu0 0.0
    %4636 = vmatprep.subr.mxu0 0.0
    %4637 = vmatpush1.msra.mxu0 0.0
    %4638 = vmatprep.subr.mxu0 0.0
    %4639 = vmatpush1.msra.mxu0 0.0
    %4640 = vmatprep.subr.mxu0 0.0
    %4641 = vmatpush1.msra.mxu0 0.0
    %4642 = vmatprep.subr.mxu0 0.0
    %4643 = vmatpush1.msra.mxu0 0.0
    %4644 = vmatprep.subr.mxu0 0.0
    %4645 = vmatpush1.msra.mxu0 0.0
    %4646 = vmatprep.subr.mxu0 0.0
    %4647 = vmatpush1.msra.mxu0 0.0
    %4648 = vmatprep.subr.mxu0 0.0
    %4649 = vmatpush1.msra.mxu0 0.0
    %4650 = vmatprep.subr.mxu0 0.0
    %4651 = vmatpush1.msra.mxu0 0.0
    %4652 = vmatprep.subr.mxu0 0.0
    %4653 = vmatpush1.msra.mxu0 0.0
    %4654 = vmatprep.subr.mxu0 0.0
    %4655 = vmatpush1.msra.mxu0 0.0
    %4656 = vmatprep.subr.mxu0 0.0
    %4657 = vmatpush1.msra.mxu0 0.0
    %4658 = vmatprep.subr.mxu0 0.0
    %4659 = vmatpush1.msra.mxu0 0.0
    %4660 = vmatprep.subr.mxu0 0.0
    %4661 = vmatpush1.msra.mxu0 0.0
    %4662 = vmatprep.subr.mxu0 0.0
    %4663 = vmatpush1.msra.mxu0 0.0
    %4664 = vmatprep.subr.mxu0 0.0
    %4665 = vmatpush1.msra.mxu0 0.0
    %4666 = vmatprep.mubr.f32.mxu0 0.0
    %v4667 = vand.u32 %v4165, 4294901760
    %4668 = vmatmul.mubr.f32.gmra.mrb[0].mxu0 %v4667
    %v4669 = vpop.f32.mrb[0].mxu0
    %v4670 = vadd.f32 %v4565, %v4669
    %v4671 = vpop.f32.mrb[0].mxu0
    %v4672 = vadd.f32 %v4567, %v4671
    %4673 = vmatprep.mubr.f32.mxu0 0.0
    %v4674 = vand.u32 %v4168, 4294901760
    %4675 = vmatmul.mubr.f32.gmra.mrb[0].mxu0 %v4674
    %v4676 = vpop.f32.mrb[0].mxu0
    %v4677 = vadd.f32 %v4574, %v4676
    %v4678 = vpop.f32.mrb[0].mxu0
    %v4679 = vadd.f32 %v4576, %v4678
    %4680 = vdwg.mxu0
    %v4681 = vand.u32 %v4157, 4294901760
    %4682 = vmatprep.subr.mxu0 %v4681
    %v4683 = vand.u32 %v4156, 4294901760
    %4684 = vmatpush1.msra.mxu0 %v4683
    %v4685 = vand.u32 %v4159, 4294901760
    %4686 = vmatprep.subr.mxu0 %v4685
    %v4687 = vand.u32 %v4158, 4294901760
    %4688 = vmatpush1.msra.mxu0 %v4687
    %v4689 = vand.u32 %v4161, 4294901760
    %4690 = vmatprep.subr.mxu0 %v4689
    %v4691 = vand.u32 %v4160, 4294901760
    %4692 = vmatpush1.msra.mxu0 %v4691
    %v4693 = vand.u32 %v4174, 4294901760
    %4694 = vmatprep.subr.mxu0 %v4693
    %v4695 = vand.u32 %v4171, 4294901760
    %4696 = vmatpush1.msra.mxu0 %v4695
    %4697 = vmatprep.subr.mxu0 0.0
    %4698 = vmatpush1.msra.mxu0 0.0
    %4699 = vmatprep.subr.mxu0 0.0
    %4700 = vmatpush1.msra.mxu0 0.0
    %4701 = vmatprep.subr.mxu0 0.0
    %4702 = vmatpush1.msra.mxu0 0.0
    %4703 = vmatprep.subr.mxu0 0.0
    %4704 = vmatpush1.msra.mxu0 0.0
    %4705 = vmatprep.subr.mxu0 0.0
    %4706 = vmatpush1.msra.mxu0 0.0
    %4707 = vmatprep.subr.mxu0 0.0
    %4708 = vmatpush1.msra.mxu0 0.0
    %4709 = vmatprep.subr.mxu0 0.0
    %4710 = vmatpush1.msra.mxu0 0.0
    %4711 = vmatprep.subr.mxu0 0.0
    %4712 = vmatpush1.msra.mxu0 0.0
    %4713 = vmatprep.subr.mxu0 0.0
    %4714 = vmatpush1.msra.mxu0 0.0
    %4715 = vmatprep.subr.mxu0 0.0
    %4716 = vmatpush1.msra.mxu0 0.0
    %4717 = vmatprep.subr.mxu0 0.0
    %4718 = vmatpush1.msra.mxu0 0.0
    %4719 = vmatprep.subr.mxu0 0.0
    %4720 = vmatpush1.msra.mxu0 0.0
    %4721 = vmatprep.subr.mxu0 0.0
    %4722 = vmatpush1.msra.mxu0 0.0
    %4723 = vmatprep.subr.mxu0 0.0
    %4724 = vmatpush1.msra.mxu0 0.0
    %4725 = vmatprep.subr.mxu0 0.0
    %4726 = vmatpush1.msra.mxu0 0.0
    %4727 = vmatprep.subr.mxu0 0.0
    %4728 = vmatpush1.msra.mxu0 0.0
    %4729 = vmatprep.subr.mxu0 0.0
    %4730 = vmatpush1.msra.mxu0 0.0
    %4731 = vmatprep.subr.mxu0 0.0
    %4732 = vmatpush1.msra.mxu0 0.0
    %4733 = vmatprep.subr.mxu0 0.0
    %4734 = vmatpush1.msra.mxu0 0.0
    %4735 = vmatprep.subr.mxu0 0.0
    %4736 = vmatpush1.msra.mxu0 0.0
    %4737 = vmatprep.subr.mxu0 0.0
    %4738 = vmatpush1.msra.mxu0 0.0
    %4739 = vmatprep.subr.mxu0 0.0
    %4740 = vmatpush1.msra.mxu0 0.0
    %4741 = vmatprep.subr.mxu0 0.0
    %4742 = vmatpush1.msra.mxu0 0.0
    %4743 = vmatprep.subr.mxu0 0.0
    %4744 = vmatpush1.msra.mxu0 0.0
    %4745 = vmatprep.subr.mxu0 0.0
    %4746 = vmatpush1.msra.mxu0 0.0
    %4747 = vmatprep.subr.mxu0 0.0
    %4748 = vmatpush1.msra.mxu0 0.0
    %4749 = vmatprep.subr.mxu0 0.0
    %4750 = vmatpush1.msra.mxu0 0.0
    %4751 = vmatprep.subr.mxu0 0.0
    %4752 = vmatpush1.msra.mxu0 0.0
    %4753 = vmatprep.mubr.f32.mxu0 0.0
    %v4754 = vand.u32 %v4165, 4294901760
    %4755 = vmatmul.mubr.f32.gmra.mrb[0].mxu0 %v4754
    %v4756 = vpop.f32.mrb[0].mxu0
    %v4757 = vadd.f32 %v4670, %v4756
    %v4758 = vpop.f32.mrb[0].mxu0
    %v4759 = vadd.f32 %v4672, %v4758
    %4760 = vmatprep.mubr.f32.mxu0 0.0
    %v4761 = vand.u32 %v4168, 4294901760
    %4762 = vmatmul.mubr.f32.gmra.mrb[0].mxu0 %v4761
    %v4763 = vpop.f32.mrb[0].mxu0
    %v4764 = vadd.f32 %v4677, %v4763
    %v4765 = vpop.f32.mrb[0].mxu0
    %v4766 = vadd.f32 %v4679, %v4765
    %4767 = vdwg.mxu0
    %v4768 = vmul.f32 %v24, %v4757
    %v4769 = vmul.f32 %v25, %v4759
    %v4770 = vmul.f32 %v26, %v4764
    %v4771 = vmul.f32 %v27, %v4766
    %4772 = vst [vmem:[#allocation2] sm:$0xff] %v4768
    %4773 = vst [vmem:[#allocation2 + $0x8] sm:$0xff] %v4769
    %4774 = vst [vmem:[#allocation2 + $0x10] sm:$0xff] %v4770
    %4775 = vst [vmem:[#allocation2 + $0x18] sm:$0xff] %v4771
    // Predicated region
    $region26: #{tpu_custom_call.1} parent=1 // pred_check
      _
    $region27: #{tpu_custom_call.1} parent=1 // pred_check_branch
      %4777 = sbr.rel (0) target = $region29
    $region28: #{tpu_custom_call.1} parent=1 // pred_region
      %s4779 = ssub.s32 512, 512
      %4780 = vsyncadd [#allocation3], %s4779
      %s4781 = sshll.u32 [#allocation2], 4
      %s4782 = int_to_ptr.vmem [resolvable:$true] %s4781
      %4787 = dma.vmem_to_hbm [thread:$0]  %s4782, 512, %s6, [#allocation3], 256, 256, 16
    $region29: #{tpu_custom_call.1} parent=1 // pred_fallthru
      _
    // Predicated region
    $region30: #{tpu_custom_call.1} parent=1 // pred_check
      _
    $region31: #{tpu_custom_call.1} parent=1 // pred_check_branch
      %4789 = sbr.rel (0) target = $region33
    $region32: #{tpu_custom_call.1} parent=1 // pred_region
      %4790 = dma.done [#allocation3], 512
    $region33: #{tpu_custom_call.1} parent=1 // pred_fallthru
      _
    %4791 = vsyncpa [#allocation3], 1

</llo_original>
